<compile_context>
chip_gen: v7x
topology: tpu7x:2x2x1
jax: 0.10.0
libtpu: 0.0.40
codegen_flags: <defaults>
</compile_context>

<pallas_src>
import jax
import jax.numpy as jnp
from jax.experimental import pallas as pl
from jax.experimental.pallas import tpu as pltpu


def _round_up(x, m):
    return (x + m - 1) // m * m


# ----------------------------- Pallas kernel --------------------------------


def _make_kernel(chunk, bsp, hidden, lstm_in, skip_last_xnext):
    """Kernel closure over static sizes (one grid step = `chunk` timesteps)."""

    def kernel(pre_ref, wg_ref, bg_ref, w1h_ref, w2_ref, b2_ref, wv_ref,
               bv_ref, out_ref, xh_ref, c_ref, x1_ref):
        # persistent carries: zero them on the first seq chunk only
        @pl.when(pl.program_id(0) == 0)
        def _():
            xh_ref[...] = jnp.zeros_like(xh_ref)
            c_ref[...] = jnp.zeros_like(c_ref)

        # hoist weight loads / bias broadcasts out of the serial recurrence
        wg = wg_ref[...]                                    # [in+hid, 4*hid]
        w1h = w1h_ref[...]                                  # [hid, SAp]
        w2 = w2_ref[...]                                    # [SAp, in]
        bg = jnp.broadcast_to(bg_ref[...], (bsp, 4 * hidden))
        b2 = jnp.broadcast_to(b2_ref[...], (bsp, lstm_in))

        xh = xh_ref[...]                                    # packed [x | h] carry
        c = c_ref[...]

        for t in range(chunk):                              # unrolled serial recurrence
            # --- LSTM cell: one fused gate matmul on the packed [x | h] carry ---
            gates = jnp.dot(xh, wg, preferred_element_type=jnp.float32) + bg
            sig = jax.nn.sigmoid(gates[:, :3 * hidden])     # gate order (i, f, o)
            g_g = jnp.tanh(gates[:, 3 * hidden:])           # gate g
            i_g = sig[:, :hidden]
            f_g = sig[:, hidden:2 * hidden]
            o_g = sig[:, 2 * hidden:]
            c = f_g * c + i_g * g_g
            h = o_g * jnp.tanh(c)

            # --- FrameAttention: only the h-dependent part stays on the chain ---
            x1 = jnp.maximum(
                pre_ref[pl.ds(t * bsp, bsp), :]
                + jnp.dot(h, w1h, preferred_element_type=jnp.float32), 0.0)
            x1_ref[pl.ds(t * bsp, bsp), :] = x1             # defer the v-logit matmul

            if not (skip_last_xnext and t == chunk - 1):    # next LSTM input
                x_next = jnp.maximum(
                    jnp.dot(x1, w2, preferred_element_type=jnp.float32) + b2, 0.0)
                xh = jnp.concatenate([x_next, h], axis=-1)

        xh_ref[...] = xh
        c_ref[...] = c

        # deferred logit matmul over the whole chunk: M = chunk*bsp rows of
        # real MXU work, one lane-dense store for the chunk's output.
        out_ref[...] = (
            jnp.dot(x1_ref[...], wv_ref[...], preferred_element_type=jnp.float32)
            + bv_ref[...])

    return kernel


# ------------------------------- wrapper -------------------------------------


@jax.jit
def rnn_forward(descriptors, params):
    """descriptors: [bs, seq, num_desc, desc_size] -> attention [bs, seq, num_desc]."""
    bs, seq, nd, ds = descriptors.shape
    wd, bd, wih, bih, whh, bhh, w1, b1, w2, b2, wv, bv = params
    lstm_in = wd.shape[1]
    hidden = whh.shape[0]
    sa = w1.shape[0]                        # = nd * lstm_in + hidden
    f32 = jnp.float32

    sap = _round_up(sa, 128)                # lane-dense x1 width
    ndp = _round_up(nd, 128)                # lane-dense logit width
    bsp = _round_up(bs, 8)                  # full (8,128) sublane tiles
    nchunks = -(-seq // 32)                 # cdiv: seq-chunk grid
    chunk = -(-seq // nchunks)              # minimal padding per chunk
    seq_pad = chunk * nchunks

    descriptors = descriptors.astype(f32)
    hi = jax.lax.Precision.HIGHEST

    # --- fold desc_to_input into the descriptor rows of w1 (time-invariant) ---
    w1_desc = w1[:nd * lstm_in, :].reshape(nd, lstm_in, sa)           # [nd, in, sa]
    w_pre = jnp.einsum("di,nio->ndo", wd, w1_desc,
                       precision=hi).reshape(nd * ds, sa)             # [nd*ds, sa]
    b_pre = b1 + jnp.dot(bd, w1_desc.sum(axis=0), precision=hi)       # [1, sa]
    w1_h = w1[nd * lstm_in:, :]                                       # [hidden, sa]

    # --- one batched matmul over all timesteps (h-independent part of x1) ---
    desc_flat = descriptors.reshape(bs, seq, nd * ds)
    pre = jnp.einsum("bsk,ko->sbo", desc_flat, w_pre,
                     precision=jax.lax.Precision.HIGH) + b_pre[0]     # [seq, bs, sa]
    pre = jnp.pad(pre, ((0, seq_pad - seq), (0, bsp - bs), (0, sap - sa)))
    pre = pre.reshape(seq_pad * bsp, sap)

    # --- fused gate weights: torch order (i,f,g,o) -> (i,f,o,g), no lane padding ---
    def reorder(w):
        w4 = w.reshape(-1, 4, hidden)
        return jnp.concatenate([w4[:, 0], w4[:, 1], w4[:, 3], w4[:, 2]], axis=-1)

    wg = jnp.concatenate([reorder(wih), reorder(whh)], axis=0)        # [in+hid, 4*hid]
    bg = reorder(bih + bhh)                                           # [1, 4*hid]

    w1h_p = jnp.pad(w1_h, ((0, 0), (0, sap - sa)))                    # [hid, SAp]
    w2_p = jnp.pad(w2, ((0, sap - sa), (0, 0)))                       # [SAp, in]
    wv_p = jnp.pad(wv, ((0, sap - sa), (0, ndp - nd)))                # [SAp, NDp]
    bv_p = jnp.pad(bv, ((0, 0), (0, ndp - nd)))                       # [1, NDp]

    kernel = _make_kernel(chunk, bsp, hidden, lstm_in,
                          skip_last_xnext=(nchunks == 1))

    const = lambda s: (0, 0)
    raw_bytes = 4 * (3 * chunk * bsp * sap + 2 * chunk * bsp * ndp
                     + 2 * (wg.size + bg.size + w1h_p.size + w2_p.size
                            + b2.size + wv_p.size + bv_p.size)
                     + bsp * (lstm_in + 2 * hidden))
    vmem_limit = int(min(100 << 20, max(32 << 20, 2 * raw_bytes)))

    out = pl.pallas_call(
        kernel,
        out_shape=jax.ShapeDtypeStruct((seq_pad * bsp, ndp), f32),
        grid=(nchunks,),
        in_specs=[
            pl.BlockSpec((chunk * bsp, sap), lambda s: (s, 0)),  # pre: streamed per chunk
            pl.BlockSpec(wg.shape, const),                       # weights: constant index
            pl.BlockSpec(bg.shape, const),                       #   -> DMA'd once, resident
            pl.BlockSpec(w1h_p.shape, const),
            pl.BlockSpec(w2_p.shape, const),
            pl.BlockSpec(b2.shape, const),
            pl.BlockSpec(wv_p.shape, const),
            pl.BlockSpec(bv_p.shape, const),
        ],
        out_specs=pl.BlockSpec((chunk * bsp, ndp), lambda s: (s, 0)),
        scratch_shapes=[
            pltpu.VMEM((bsp, lstm_in + hidden), f32),   # packed [x|h] carry
            pltpu.VMEM((bsp, hidden), f32),             # c carry
            pltpu.VMEM((chunk * bsp, sap), f32),        # x1 slab (deferred logits)
        ],
        compiler_params=pltpu.CompilerParams(
            dimension_semantics=("arbitrary",),
            vmem_limit_bytes=vmem_limit),
    )(pre, wg, bg, w1h_p, w2_p, b2, wv_p, bv_p)

    # strip seq / batch / lane padding; back to [bs, seq, nd]
    out = out.reshape(seq_pad, bsp, ndp)[:seq, :bs, :nd]
    return jnp.transpose(out, (1, 0, 2))


# --------------------------- pure-JAX reference -------------------------------


def rnn_reference(descriptors, params):
    bs, seq, nd, ds = descriptors.shape
    wd, bd, wih, bih, whh, bhh, w1, b1, w2, b2, wv, bv = params
    lstm_in = wd.shape[1]
    hidden = whh.shape[0]

    h = jnp.zeros((bs, hidden), jnp.float32)
    c = jnp.zeros((bs, hidden), jnp.float32)
    inp = jnp.zeros((bs, lstm_in), jnp.float32)
    outs = []
    for t in range(seq):
        gates = inp @ wih + bih + h @ whh + bhh
        i_g = jax.nn.sigmoid(gates[:, 0 * hidden:1 * hidden])
        f_g = jax.nn.sigmoid(gates[:, 1 * hidden:2 * hidden])
        g_g = jnp.tanh(gates[:, 2 * hidden:3 * hidden])
        o_g = jax.nn.sigmoid(gates[:, 3 * hidden:4 * hidden])
        c = f_g * c + i_g * g_g
        h = o_g * jnp.tanh(c)

        emb = jnp.einsum("bnd,de->bne", descriptors[:, t], wd) + bd[0]
        x = jnp.concatenate([emb.reshape(bs, nd * lstm_in), h], axis=-1)
        x1 = jax.nn.relu(x @ w1 + b1)
        inp = jax.nn.relu(x1 @ w2 + b2)
        a = x1 @ wv + bv
        outs.append(a)
    return jnp.stack(outs, axis=1)


# ---------------------------------- main --------------------------------------


if __name__ == "__main__":
    BS, SEQ, ND, DS = 2, 8, 10, 6
    LSTM_IN, HIDDEN = 32, 32
    SA = ND * LSTM_IN + HIDDEN  # size_attention

    key = jax.random.PRNGKey(0)
    ks = jax.random.split(key, 16)
    s = 0.1
    # weights are stored [in, out] (transposed vs torch.nn.Linear)
    params = (
        s * jax.random.normal(ks[0], (DS, LSTM_IN), jnp.float32),          # desc_to_input.weight^T
        s * jax.random.normal(ks[1], (1, LSTM_IN), jnp.float32),           # desc_to_input.bias
        s * jax.random.normal(ks[2], (LSTM_IN, 4 * HIDDEN), jnp.float32),  # lstm weight_ih^T (i,f,g,o)
        s * jax.random.normal(ks[3], (1, 4 * HIDDEN), jnp.float32),        # lstm bias_ih
        s * jax.random.normal(ks[4], (HIDDEN, 4 * HIDDEN), jnp.float32),   # lstm weight_hh^T
        s * jax.random.normal(ks[5], (1, 4 * HIDDEN), jnp.float32),        # lstm bias_hh
        s * jax.random.normal(ks[6], (SA, SA), jnp.float32),               # w1.weight^T
        s * jax.random.normal(ks[7], (1, SA), jnp.float32),                # w1.bias
        s * jax.random.normal(ks[8], (SA, LSTM_IN), jnp.float32),          # w2.weight^T
        s * jax.random.normal(ks[9], (1, LSTM_IN), jnp.float32),           # w2.bias
        s * jax.random.normal(ks[10], (SA, ND), jnp.float32),              # v.weight^T
        s * jax.random.normal(ks[11], (1, ND), jnp.float32),               # v.bias
    )

    # primary test (single-chunk path)
    descriptors = jax.random.normal(ks[12], (BS, SEQ, ND, DS), jnp.float32)
    out = jax.block_until_ready(rnn_forward(descriptors, params))
    ref = rnn_reference(descriptors, params)
    assert out.shape == (BS, SEQ, ND), out.shape
    max_err = float(jnp.max(jnp.abs(out - ref)))
    assert jnp.allclose(out, ref, atol=2e-4, rtol=2e-4), max_err

    # secondary test: exercise the multi-chunk (seq-streamed grid) path
    SEQ2 = 40
    desc2 = jax.random.normal(ks[13], (BS, SEQ2, ND, DS), jnp.float32)
    out2 = jax.block_until_ready(rnn_forward(desc2, params))
    ref2 = rnn_reference(desc2, params)
    assert out2.shape == (BS, SEQ2, ND), out2.shape
    max_err2 = float(jnp.max(jnp.abs(out2 - ref2)))
    assert jnp.allclose(out2, ref2, atol=1e-3, rtol=1e-3), max_err2

    print("KERNEL_OK")
</pallas_src>

<mosaic_0001>
module attributes {stable_mosaic.version = 11 : i64} {
  func.func @kernel(%arg0: i32, %arg1: memref<64x384xf32, #tpu.memory_space<vmem>>, %arg2: memref<64x128xf32, #tpu.memory_space<vmem>>, %arg3: memref<1x128xf32, #tpu.memory_space<vmem>>, %arg4: memref<32x384xf32, #tpu.memory_space<vmem>>, %arg5: memref<384x32xf32, #tpu.memory_space<vmem>>, %arg6: memref<1x32xf32, #tpu.memory_space<vmem>>, %arg7: memref<384x128xf32, #tpu.memory_space<vmem>>, %arg8: memref<1x128xf32, #tpu.memory_space<vmem>>, %arg9: memref<64x128xf32, #tpu.memory_space<vmem>>, %arg10: memref<8x64xf32, #tpu.memory_space<vmem>>, %arg11: memref<8x32xf32, #tpu.memory_space<vmem>>, %arg12: memref<64x384xf32, #tpu.memory_space<vmem>>) attributes {dimension_semantics = [#tpu.dimension_semantics<arbitrary>], iteration_bounds = array<i64: 1>, scalar_prefetch = 0 : i64, scratch_operands = 3 : i64, tpu.core_type = #tpu.core_type<tc>, window_params = [{transform_indices = @transform_0, window_bounds = array<i64: 64, 384>}, {pipeline_mode = #tpu.pipeline_mode<synchronous>, transform_indices = @transform_1, window_bounds = array<i64: 64, 128>}, {pipeline_mode = #tpu.pipeline_mode<synchronous>, transform_indices = @transform_2, window_bounds = array<i64: 1, 128>}, {pipeline_mode = #tpu.pipeline_mode<synchronous>, transform_indices = @transform_3, window_bounds = array<i64: 32, 384>}, {pipeline_mode = #tpu.pipeline_mode<synchronous>, transform_indices = @transform_4, window_bounds = array<i64: 384, 32>}, {pipeline_mode = #tpu.pipeline_mode<synchronous>, transform_indices = @transform_5, window_bounds = array<i64: 1, 32>}, {pipeline_mode = #tpu.pipeline_mode<synchronous>, transform_indices = @transform_6, window_bounds = array<i64: 384, 128>}, {pipeline_mode = #tpu.pipeline_mode<synchronous>, transform_indices = @transform_7, window_bounds = array<i64: 1, 128>}, {transform_indices = @transform_8, window_bounds = array<i64: 64, 128>}]} {
    %c0_i32 = arith.constant 0 : i32
    %0 = arith.cmpi eq, %arg0, %c0_i32 : i32
    %1 = arith.extui %0 : i1 to i32
    %c0_i32_0 = arith.constant 0 : i32
    %2 = arith.cmpi ne, %1, %c0_i32_0 : i32
    scf.if %2 {
      %cst_97 = arith.constant 0.000000e+00 : f32
      %250 = vector.broadcast %cst_97 : f32 to vector<8x64xf32>
      %c0_98 = arith.constant 0 : index
      %c0_99 = arith.constant 0 : index
      %251 = vector.load %arg10[%c0_98, %c0_99] : memref<8x64xf32, #tpu.memory_space<vmem>>, vector<8x64xf32>
      tpu.vector_store %arg10[%c0_98, %c0_99], %250 {strides = array<i32>} : memref<8x64xf32, #tpu.memory_space<vmem>>, vector<8x64xf32>,
      %cst_100 = arith.constant 0.000000e+00 : f32
      %252 = vector.broadcast %cst_100 : f32 to vector<8x32xf32>
      %c0_101 = arith.constant 0 : index
      %c0_102 = arith.constant 0 : index
      %253 = vector.load %arg11[%c0_101, %c0_102] : memref<8x32xf32, #tpu.memory_space<vmem>>, vector<8x32xf32>
      tpu.vector_store %arg11[%c0_101, %c0_102], %252 {strides = array<i32>} : memref<8x32xf32, #tpu.memory_space<vmem>>, vector<8x32xf32>,
    } else {
    }
    %c0 = arith.constant 0 : index
    %c0_1 = arith.constant 0 : index
    %3 = vector.load %arg2[%c0, %c0_1] : memref<64x128xf32, #tpu.memory_space<vmem>>, vector<64x128xf32>
    %c0_2 = arith.constant 0 : index
    %c0_3 = arith.constant 0 : index
    %4 = vector.load %arg4[%c0_2, %c0_3] : memref<32x384xf32, #tpu.memory_space<vmem>>, vector<32x384xf32>
    %c0_4 = arith.constant 0 : index
    %c0_5 = arith.constant 0 : index
    %5 = vector.load %arg5[%c0_4, %c0_5] : memref<384x32xf32, #tpu.memory_space<vmem>>, vector<384x32xf32>
    %c0_6 = arith.constant 0 : index
    %c0_7 = arith.constant 0 : index
    %6 = vector.load %arg3[%c0_6, %c0_7] : memref<1x128xf32, #tpu.memory_space<vmem>>, vector<1x128xf32>
    %7 = vector.shape_cast %6 : vector<1x128xf32> to vector<1x128xf32>
    %8 = vector.broadcast %7 : vector<1x128xf32> to vector<8x128xf32>
    %c0_8 = arith.constant 0 : index
    %c0_9 = arith.constant 0 : index
    %9 = vector.load %arg6[%c0_8, %c0_9] : memref<1x32xf32, #tpu.memory_space<vmem>>, vector<1x32xf32>
    %10 = vector.shape_cast %9 : vector<1x32xf32> to vector<1x32xf32>
    %11 = vector.broadcast %10 : vector<1x32xf32> to vector<8x32xf32>
    %c0_10 = arith.constant 0 : index
    %c0_11 = arith.constant 0 : index
    %12 = vector.load %arg10[%c0_10, %c0_11] : memref<8x64xf32, #tpu.memory_space<vmem>>, vector<8x64xf32>
    %c0_12 = arith.constant 0 : index
    %c0_13 = arith.constant 0 : index
    %13 = vector.load %arg11[%c0_12, %c0_13] : memref<8x32xf32, #tpu.memory_space<vmem>>, vector<8x32xf32>
    %cst = arith.constant dense<0.000000e+00> : vector<8x128xf32>
    %14 = tpu.matmul %12, %3, %cst {dimension_numbers = #tpu.dot_dimension_numbers<[1], [0], [0], [1], [0, 0, 1, 1], [], []>} : vector<8x64xf32>, vector<64x128xf32>, vector<8x128xf32> -> vector<8x128xf32>
    %15 = arith.addf %14, %8 : vector<8x128xf32>
    %16 = vector.extract_strided_slice %15 {offsets = [0, 0], sizes = [8, 96], strides = [1, 1]} : vector<8x128xf32> to vector<8x96xf32>
    %17 = arith.negf %16 : vector<8x96xf32>
    %18 = math.exp %17 : vector<8x96xf32>
    %cst_14 = arith.constant 1.000000e+00 : f32
    %19 = vector.broadcast %cst_14 : f32 to vector<8x96xf32>
    %20 = arith.addf %19, %18 : vector<8x96xf32>
    %21 = arith.divf %19, %20 : vector<8x96xf32>
    %22 = vector.extract_strided_slice %15 {offsets = [0, 96], sizes = [8, 32], strides = [1, 1]} : vector<8x128xf32> to vector<8x32xf32>
    %23 = math.tanh %22 : vector<8x32xf32>
    %24 = vector.extract_strided_slice %21 {offsets = [0, 0], sizes = [8, 32], strides = [1, 1]} : vector<8x96xf32> to vector<8x32xf32>
    %25 = vector.extract_strided_slice %21 {offsets = [0, 32], sizes = [8, 32], strides = [1, 1]} : vector<8x96xf32> to vector<8x32xf32>
    %26 = vector.extract_strided_slice %21 {offsets = [0, 64], sizes = [8, 32], strides = [1, 1]} : vector<8x96xf32> to vector<8x32xf32>
    %27 = arith.mulf %25, %13 : vector<8x32xf32>
    %28 = arith.mulf %24, %23 : vector<8x32xf32>
    %29 = arith.addf %27, %28 : vector<8x32xf32>
    %30 = math.tanh %29 : vector<8x32xf32>
    %31 = arith.mulf %26, %30 : vector<8x32xf32>
    %c0_15 = arith.constant 0 : index
    %c0_16 = arith.constant 0 : index
    %32 = vector.load %arg1[%c0_15, %c0_16] : memref<64x384xf32, #tpu.memory_space<vmem>>, vector<8x384xf32>
    %cst_17 = arith.constant dense<0.000000e+00> : vector<8x384xf32>
    %33 = tpu.matmul %31, %4, %cst_17 {dimension_numbers = #tpu.dot_dimension_numbers<[1], [0], [0], [1], [0, 0, 1, 1], [], []>} : vector<8x32xf32>, vector<32x384xf32>, vector<8x384xf32> -> vector<8x384xf32>
    %34 = arith.addf %32, %33 : vector<8x384xf32>
    %cst_18 = arith.constant 0.000000e+00 : f32
    %35 = vector.broadcast %cst_18 : f32 to vector<8x384xf32>
    %36 = arith.maximumf %34, %35 : vector<8x384xf32>
    %c0_19 = arith.constant 0 : index
    %c0_20 = arith.constant 0 : index
    %37 = vector.load %arg12[%c0_19, %c0_20] : memref<64x384xf32, #tpu.memory_space<vmem>>, vector<8x384xf32>
    tpu.vector_store %arg12[%c0_19, %c0_20], %36 {strides = array<i32>} : memref<64x384xf32, #tpu.memory_space<vmem>>, vector<8x384xf32>,
    %cst_21 = arith.constant dense<0.000000e+00> : vector<8x32xf32>
    %38 = tpu.matmul %36, %5, %cst_21 {dimension_numbers = #tpu.dot_dimension_numbers<[1], [0], [0], [1], [0, 0, 1, 1], [], []>} : vector<8x384xf32>, vector<384x32xf32>, vector<8x32xf32> -> vector<8x32xf32>
    %39 = arith.addf %38, %11 : vector<8x32xf32>
    %cst_22 = arith.constant 0.000000e+00 : f32
    %40 = vector.broadcast %cst_22 : f32 to vector<8x32xf32>
    %41 = arith.maximumf %39, %40 : vector<8x32xf32>
    %42 = tpu.concatenate %41, %31 in 1 : vector<8x32xf32>, vector<8x32xf32> -> vector<8x64xf32>
    %cst_23 = arith.constant dense<0.000000e+00> : vector<8x128xf32>
    %43 = tpu.matmul %42, %3, %cst_23 {dimension_numbers = #tpu.dot_dimension_numbers<[1], [0], [0], [1], [0, 0, 1, 1], [], []>} : vector<8x64xf32>, vector<64x128xf32>, vector<8x128xf32> -> vector<8x128xf32>
    %44 = arith.addf %43, %8 : vector<8x128xf32>
    %45 = vector.extract_strided_slice %44 {offsets = [0, 0], sizes = [8, 96], strides = [1, 1]} : vector<8x128xf32> to vector<8x96xf32>
    %46 = arith.negf %45 : vector<8x96xf32>
    %47 = math.exp %46 : vector<8x96xf32>
    %cst_24 = arith.constant 1.000000e+00 : f32
    %48 = vector.broadcast %cst_24 : f32 to vector<8x96xf32>
    %49 = arith.addf %48, %47 : vector<8x96xf32>
    %50 = arith.divf %48, %49 : vector<8x96xf32>
    %51 = vector.extract_strided_slice %44 {offsets = [0, 96], sizes = [8, 32], strides = [1, 1]} : vector<8x128xf32> to vector<8x32xf32>
    %52 = math.tanh %51 : vector<8x32xf32>
    %53 = vector.extract_strided_slice %50 {offsets = [0, 0], sizes = [8, 32], strides = [1, 1]} : vector<8x96xf32> to vector<8x32xf32>
    %54 = vector.extract_strided_slice %50 {offsets = [0, 32], sizes = [8, 32], strides = [1, 1]} : vector<8x96xf32> to vector<8x32xf32>
    %55 = vector.extract_strided_slice %50 {offsets = [0, 64], sizes = [8, 32], strides = [1, 1]} : vector<8x96xf32> to vector<8x32xf32>
    %56 = arith.mulf %54, %29 : vector<8x32xf32>
    %57 = arith.mulf %53, %52 : vector<8x32xf32>
    %58 = arith.addf %56, %57 : vector<8x32xf32>
    %59 = math.tanh %58 : vector<8x32xf32>
    %60 = arith.mulf %55, %59 : vector<8x32xf32>
    %c8 = arith.constant 8 : index
    %c0_25 = arith.constant 0 : index
    %61 = vector.load %arg1[%c8, %c0_25] : memref<64x384xf32, #tpu.memory_space<vmem>>, vector<8x384xf32>
    %cst_26 = arith.constant dense<0.000000e+00> : vector<8x384xf32>
    %62 = tpu.matmul %60, %4, %cst_26 {dimension_numbers = #tpu.dot_dimension_numbers<[1], [0], [0], [1], [0, 0, 1, 1], [], []>} : vector<8x32xf32>, vector<32x384xf32>, vector<8x384xf32> -> vector<8x384xf32>
    %63 = arith.addf %61, %62 : vector<8x384xf32>
    %cst_27 = arith.constant 0.000000e+00 : f32
    %64 = vector.broadcast %cst_27 : f32 to vector<8x384xf32>
    %65 = arith.maximumf %63, %64 : vector<8x384xf32>
    %c8_28 = arith.constant 8 : index
    %c0_29 = arith.constant 0 : index
    %66 = vector.load %arg12[%c8_28, %c0_29] : memref<64x384xf32, #tpu.memory_space<vmem>>, vector<8x384xf32>
    tpu.vector_store %arg12[%c8_28, %c0_29], %65 {strides = array<i32>} : memref<64x384xf32, #tpu.memory_space<vmem>>, vector<8x384xf32>,
    %cst_30 = arith.constant dense<0.000000e+00> : vector<8x32xf32>
    %67 = tpu.matmul %65, %5, %cst_30 {dimension_numbers = #tpu.dot_dimension_numbers<[1], [0], [0], [1], [0, 0, 1, 1], [], []>} : vector<8x384xf32>, vector<384x32xf32>, vector<8x32xf32> -> vector<8x32xf32>
    %68 = arith.addf %67, %11 : vector<8x32xf32>
    %cst_31 = arith.constant 0.000000e+00 : f32
    %69 = vector.broadcast %cst_31 : f32 to vector<8x32xf32>
    %70 = arith.maximumf %68, %69 : vector<8x32xf32>
    %71 = tpu.concatenate %70, %60 in 1 : vector<8x32xf32>, vector<8x32xf32> -> vector<8x64xf32>
    %cst_32 = arith.constant dense<0.000000e+00> : vector<8x128xf32>
    %72 = tpu.matmul %71, %3, %cst_32 {dimension_numbers = #tpu.dot_dimension_numbers<[1], [0], [0], [1], [0, 0, 1, 1], [], []>} : vector<8x64xf32>, vector<64x128xf32>, vector<8x128xf32> -> vector<8x128xf32>
    %73 = arith.addf %72, %8 : vector<8x128xf32>
    %74 = vector.extract_strided_slice %73 {offsets = [0, 0], sizes = [8, 96], strides = [1, 1]} : vector<8x128xf32> to vector<8x96xf32>
    %75 = arith.negf %74 : vector<8x96xf32>
    %76 = math.exp %75 : vector<8x96xf32>
    %cst_33 = arith.constant 1.000000e+00 : f32
    %77 = vector.broadcast %cst_33 : f32 to vector<8x96xf32>
    %78 = arith.addf %77, %76 : vector<8x96xf32>
    %79 = arith.divf %77, %78 : vector<8x96xf32>
    %80 = vector.extract_strided_slice %73 {offsets = [0, 96], sizes = [8, 32], strides = [1, 1]} : vector<8x128xf32> to vector<8x32xf32>
    %81 = math.tanh %80 : vector<8x32xf32>
    %82 = vector.extract_strided_slice %79 {offsets = [0, 0], sizes = [8, 32], strides = [1, 1]} : vector<8x96xf32> to vector<8x32xf32>
    %83 = vector.extract_strided_slice %79 {offsets = [0, 32], sizes = [8, 32], strides = [1, 1]} : vector<8x96xf32> to vector<8x32xf32>
    %84 = vector.extract_strided_slice %79 {offsets = [0, 64], sizes = [8, 32], strides = [1, 1]} : vector<8x96xf32> to vector<8x32xf32>
    %85 = arith.mulf %83, %58 : vector<8x32xf32>
    %86 = arith.mulf %82, %81 : vector<8x32xf32>
    %87 = arith.addf %85, %86 : vector<8x32xf32>
    %88 = math.tanh %87 : vector<8x32xf32>
    %89 = arith.mulf %84, %88 : vector<8x32xf32>
    %c16 = arith.constant 16 : index
    %c0_34 = arith.constant 0 : index
    %90 = vector.load %arg1[%c16, %c0_34] : memref<64x384xf32, #tpu.memory_space<vmem>>, vector<8x384xf32>
    %cst_35 = arith.constant dense<0.000000e+00> : vector<8x384xf32>
    %91 = tpu.matmul %89, %4, %cst_35 {dimension_numbers = #tpu.dot_dimension_numbers<[1], [0], [0], [1], [0, 0, 1, 1], [], []>} : vector<8x32xf32>, vector<32x384xf32>, vector<8x384xf32> -> vector<8x384xf32>
    %92 = arith.addf %90, %91 : vector<8x384xf32>
    %cst_36 = arith.constant 0.000000e+00 : f32
    %93 = vector.broadcast %cst_36 : f32 to vector<8x384xf32>
    %94 = arith.maximumf %92, %93 : vector<8x384xf32>
    %c16_37 = arith.constant 16 : index
    %c0_38 = arith.constant 0 : index
    %95 = vector.load %arg12[%c16_37, %c0_38] : memref<64x384xf32, #tpu.memory_space<vmem>>, vector<8x384xf32>
    tpu.vector_store %arg12[%c16_37, %c0_38], %94 {strides = array<i32>} : memref<64x384xf32, #tpu.memory_space<vmem>>, vector<8x384xf32>,
    %cst_39 = arith.constant dense<0.000000e+00> : vector<8x32xf32>
    %96 = tpu.matmul %94, %5, %cst_39 {dimension_numbers = #tpu.dot_dimension_numbers<[1], [0], [0], [1], [0, 0, 1, 1], [], []>} : vector<8x384xf32>, vector<384x32xf32>, vector<8x32xf32> -> vector<8x32xf32>
    %97 = arith.addf %96, %11 : vector<8x32xf32>
    %cst_40 = arith.constant 0.000000e+00 : f32
    %98 = vector.broadcast %cst_40 : f32 to vector<8x32xf32>
    %99 = arith.maximumf %97, %98 : vector<8x32xf32>
    %100 = tpu.concatenate %99, %89 in 1 : vector<8x32xf32>, vector<8x32xf32> -> vector<8x64xf32>
    %cst_41 = arith.constant dense<0.000000e+00> : vector<8x128xf32>
    %101 = tpu.matmul %100, %3, %cst_41 {dimension_numbers = #tpu.dot_dimension_numbers<[1], [0], [0], [1], [0, 0, 1, 1], [], []>} : vector<8x64xf32>, vector<64x128xf32>, vector<8x128xf32> -> vector<8x128xf32>
    %102 = arith.addf %101, %8 : vector<8x128xf32>
    %103 = vector.extract_strided_slice %102 {offsets = [0, 0], sizes = [8, 96], strides = [1, 1]} : vector<8x128xf32> to vector<8x96xf32>
    %104 = arith.negf %103 : vector<8x96xf32>
    %105 = math.exp %104 : vector<8x96xf32>
    %cst_42 = arith.constant 1.000000e+00 : f32
    %106 = vector.broadcast %cst_42 : f32 to vector<8x96xf32>
    %107 = arith.addf %106, %105 : vector<8x96xf32>
    %108 = arith.divf %106, %107 : vector<8x96xf32>
    %109 = vector.extract_strided_slice %102 {offsets = [0, 96], sizes = [8, 32], strides = [1, 1]} : vector<8x128xf32> to vector<8x32xf32>
    %110 = math.tanh %109 : vector<8x32xf32>
    %111 = vector.extract_strided_slice %108 {offsets = [0, 0], sizes = [8, 32], strides = [1, 1]} : vector<8x96xf32> to vector<8x32xf32>
    %112 = vector.extract_strided_slice %108 {offsets = [0, 32], sizes = [8, 32], strides = [1, 1]} : vector<8x96xf32> to vector<8x32xf32>
    %113 = vector.extract_strided_slice %108 {offsets = [0, 64], sizes = [8, 32], strides = [1, 1]} : vector<8x96xf32> to vector<8x32xf32>
    %114 = arith.mulf %112, %87 : vector<8x32xf32>
    %115 = arith.mulf %111, %110 : vector<8x32xf32>
    %116 = arith.addf %114, %115 : vector<8x32xf32>
    %117 = math.tanh %116 : vector<8x32xf32>
    %118 = arith.mulf %113, %117 : vector<8x32xf32>
    %c24 = arith.constant 24 : index
    %c0_43 = arith.constant 0 : index
    %119 = vector.load %arg1[%c24, %c0_43] : memref<64x384xf32, #tpu.memory_space<vmem>>, vector<8x384xf32>
    %cst_44 = arith.constant dense<0.000000e+00> : vector<8x384xf32>
    %120 = tpu.matmul %118, %4, %cst_44 {dimension_numbers = #tpu.dot_dimension_numbers<[1], [0], [0], [1], [0, 0, 1, 1], [], []>} : vector<8x32xf32>, vector<32x384xf32>, vector<8x384xf32> -> vector<8x384xf32>
    %121 = arith.addf %119, %120 : vector<8x384xf32>
    %cst_45 = arith.constant 0.000000e+00 : f32
    %122 = vector.broadcast %cst_45 : f32 to vector<8x384xf32>
    %123 = arith.maximumf %121, %122 : vector<8x384xf32>
    %c24_46 = arith.constant 24 : index
    %c0_47 = arith.constant 0 : index
    %124 = vector.load %arg12[%c24_46, %c0_47] : memref<64x384xf32, #tpu.memory_space<vmem>>, vector<8x384xf32>
    tpu.vector_store %arg12[%c24_46, %c0_47], %123 {strides = array<i32>} : memref<64x384xf32, #tpu.memory_space<vmem>>, vector<8x384xf32>,
    %cst_48 = arith.constant dense<0.000000e+00> : vector<8x32xf32>
    %125 = tpu.matmul %123, %5, %cst_48 {dimension_numbers = #tpu.dot_dimension_numbers<[1], [0], [0], [1], [0, 0, 1, 1], [], []>} : vector<8x384xf32>, vector<384x32xf32>, vector<8x32xf32> -> vector<8x32xf32>
    %126 = arith.addf %125, %11 : vector<8x32xf32>
    %cst_49 = arith.constant 0.000000e+00 : f32
    %127 = vector.broadcast %cst_49 : f32 to vector<8x32xf32>
    %128 = arith.maximumf %126, %127 : vector<8x32xf32>
    %129 = tpu.concatenate %128, %118 in 1 : vector<8x32xf32>, vector<8x32xf32> -> vector<8x64xf32>
    %cst_50 = arith.constant dense<0.000000e+00> : vector<8x128xf32>
    %130 = tpu.matmul %129, %3, %cst_50 {dimension_numbers = #tpu.dot_dimension_numbers<[1], [0], [0], [1], [0, 0, 1, 1], [], []>} : vector<8x64xf32>, vector<64x128xf32>, vector<8x128xf32> -> vector<8x128xf32>
    %131 = arith.addf %130, %8 : vector<8x128xf32>
    %132 = vector.extract_strided_slice %131 {offsets = [0, 0], sizes = [8, 96], strides = [1, 1]} : vector<8x128xf32> to vector<8x96xf32>
    %133 = arith.negf %132 : vector<8x96xf32>
    %134 = math.exp %133 : vector<8x96xf32>
    %cst_51 = arith.constant 1.000000e+00 : f32
    %135 = vector.broadcast %cst_51 : f32 to vector<8x96xf32>
    %136 = arith.addf %135, %134 : vector<8x96xf32>
    %137 = arith.divf %135, %136 : vector<8x96xf32>
    %138 = vector.extract_strided_slice %131 {offsets = [0, 96], sizes = [8, 32], strides = [1, 1]} : vector<8x128xf32> to vector<8x32xf32>
    %139 = math.tanh %138 : vector<8x32xf32>
    %140 = vector.extract_strided_slice %137 {offsets = [0, 0], sizes = [8, 32], strides = [1, 1]} : vector<8x96xf32> to vector<8x32xf32>
    %141 = vector.extract_strided_slice %137 {offsets = [0, 32], sizes = [8, 32], strides = [1, 1]} : vector<8x96xf32> to vector<8x32xf32>
    %142 = vector.extract_strided_slice %137 {offsets = [0, 64], sizes = [8, 32], strides = [1, 1]} : vector<8x96xf32> to vector<8x32xf32>
    %143 = arith.mulf %141, %116 : vector<8x32xf32>
    %144 = arith.mulf %140, %139 : vector<8x32xf32>
    %145 = arith.addf %143, %144 : vector<8x32xf32>
    %146 = math.tanh %145 : vector<8x32xf32>
    %147 = arith.mulf %142, %146 : vector<8x32xf32>
    %c32 = arith.constant 32 : index
    %c0_52 = arith.constant 0 : index
    %148 = vector.load %arg1[%c32, %c0_52] : memref<64x384xf32, #tpu.memory_space<vmem>>, vector<8x384xf32>
    %cst_53 = arith.constant dense<0.000000e+00> : vector<8x384xf32>
    %149 = tpu.matmul %147, %4, %cst_53 {dimension_numbers = #tpu.dot_dimension_numbers<[1], [0], [0], [1], [0, 0, 1, 1], [], []>} : vector<8x32xf32>, vector<32x384xf32>, vector<8x384xf32> -> vector<8x384xf32>
    %150 = arith.addf %148, %149 : vector<8x384xf32>
    %cst_54 = arith.constant 0.000000e+00 : f32
    %151 = vector.broadcast %cst_54 : f32 to vector<8x384xf32>
    %152 = arith.maximumf %150, %151 : vector<8x384xf32>
    %c32_55 = arith.constant 32 : index
    %c0_56 = arith.constant 0 : index
    %153 = vector.load %arg12[%c32_55, %c0_56] : memref<64x384xf32, #tpu.memory_space<vmem>>, vector<8x384xf32>
    tpu.vector_store %arg12[%c32_55, %c0_56], %152 {strides = array<i32>} : memref<64x384xf32, #tpu.memory_space<vmem>>, vector<8x384xf32>,
    %cst_57 = arith.constant dense<0.000000e+00> : vector<8x32xf32>
    %154 = tpu.matmul %152, %5, %cst_57 {dimension_numbers = #tpu.dot_dimension_numbers<[1], [0], [0], [1], [0, 0, 1, 1], [], []>} : vector<8x384xf32>, vector<384x32xf32>, vector<8x32xf32> -> vector<8x32xf32>
    %155 = arith.addf %154, %11 : vector<8x32xf32>
    %cst_58 = arith.constant 0.000000e+00 : f32
    %156 = vector.broadcast %cst_58 : f32 to vector<8x32xf32>
    %157 = arith.maximumf %155, %156 : vector<8x32xf32>
    %158 = tpu.concatenate %157, %147 in 1 : vector<8x32xf32>, vector<8x32xf32> -> vector<8x64xf32>
    %cst_59 = arith.constant dense<0.000000e+00> : vector<8x128xf32>
    %159 = tpu.matmul %158, %3, %cst_59 {dimension_numbers = #tpu.dot_dimension_numbers<[1], [0], [0], [1], [0, 0, 1, 1], [], []>} : vector<8x64xf32>, vector<64x128xf32>, vector<8x128xf32> -> vector<8x128xf32>
    %160 = arith.addf %159, %8 : vector<8x128xf32>
    %161 = vector.extract_strided_slice %160 {offsets = [0, 0], sizes = [8, 96], strides = [1, 1]} : vector<8x128xf32> to vector<8x96xf32>
    %162 = arith.negf %161 : vector<8x96xf32>
    %163 = math.exp %162 : vector<8x96xf32>
    %cst_60 = arith.constant 1.000000e+00 : f32
    %164 = vector.broadcast %cst_60 : f32 to vector<8x96xf32>
    %165 = arith.addf %164, %163 : vector<8x96xf32>
    %166 = arith.divf %164, %165 : vector<8x96xf32>
    %167 = vector.extract_strided_slice %160 {offsets = [0, 96], sizes = [8, 32], strides = [1, 1]} : vector<8x128xf32> to vector<8x32xf32>
    %168 = math.tanh %167 : vector<8x32xf32>
    %169 = vector.extract_strided_slice %166 {offsets = [0, 0], sizes = [8, 32], strides = [1, 1]} : vector<8x96xf32> to vector<8x32xf32>
    %170 = vector.extract_strided_slice %166 {offsets = [0, 32], sizes = [8, 32], strides = [1, 1]} : vector<8x96xf32> to vector<8x32xf32>
    %171 = vector.extract_strided_slice %166 {offsets = [0, 64], sizes = [8, 32], strides = [1, 1]} : vector<8x96xf32> to vector<8x32xf32>
    %172 = arith.mulf %170, %145 : vector<8x32xf32>
    %173 = arith.mulf %169, %168 : vector<8x32xf32>
    %174 = arith.addf %172, %173 : vector<8x32xf32>
    %175 = math.tanh %174 : vector<8x32xf32>
    %176 = arith.mulf %171, %175 : vector<8x32xf32>
    %c40 = arith.constant 40 : index
    %c0_61 = arith.constant 0 : index
    %177 = vector.load %arg1[%c40, %c0_61] : memref<64x384xf32, #tpu.memory_space<vmem>>, vector<8x384xf32>
    %cst_62 = arith.constant dense<0.000000e+00> : vector<8x384xf32>
    %178 = tpu.matmul %176, %4, %cst_62 {dimension_numbers = #tpu.dot_dimension_numbers<[1], [0], [0], [1], [0, 0, 1, 1], [], []>} : vector<8x32xf32>, vector<32x384xf32>, vector<8x384xf32> -> vector<8x384xf32>
    %179 = arith.addf %177, %178 : vector<8x384xf32>
    %cst_63 = arith.constant 0.000000e+00 : f32
    %180 = vector.broadcast %cst_63 : f32 to vector<8x384xf32>
    %181 = arith.maximumf %179, %180 : vector<8x384xf32>
    %c40_64 = arith.constant 40 : index
    %c0_65 = arith.constant 0 : index
    %182 = vector.load %arg12[%c40_64, %c0_65] : memref<64x384xf32, #tpu.memory_space<vmem>>, vector<8x384xf32>
    tpu.vector_store %arg12[%c40_64, %c0_65], %181 {strides = array<i32>} : memref<64x384xf32, #tpu.memory_space<vmem>>, vector<8x384xf32>,
    %cst_66 = arith.constant dense<0.000000e+00> : vector<8x32xf32>
    %183 = tpu.matmul %181, %5, %cst_66 {dimension_numbers = #tpu.dot_dimension_numbers<[1], [0], [0], [1], [0, 0, 1, 1], [], []>} : vector<8x384xf32>, vector<384x32xf32>, vector<8x32xf32> -> vector<8x32xf32>
    %184 = arith.addf %183, %11 : vector<8x32xf32>
    %cst_67 = arith.constant 0.000000e+00 : f32
    %185 = vector.broadcast %cst_67 : f32 to vector<8x32xf32>
    %186 = arith.maximumf %184, %185 : vector<8x32xf32>
    %187 = tpu.concatenate %186, %176 in 1 : vector<8x32xf32>, vector<8x32xf32> -> vector<8x64xf32>
    %cst_68 = arith.constant dense<0.000000e+00> : vector<8x128xf32>
    %188 = tpu.matmul %187, %3, %cst_68 {dimension_numbers = #tpu.dot_dimension_numbers<[1], [0], [0], [1], [0, 0, 1, 1], [], []>} : vector<8x64xf32>, vector<64x128xf32>, vector<8x128xf32> -> vector<8x128xf32>
    %189 = arith.addf %188, %8 : vector<8x128xf32>
    %190 = vector.extract_strided_slice %189 {offsets = [0, 0], sizes = [8, 96], strides = [1, 1]} : vector<8x128xf32> to vector<8x96xf32>
    %191 = arith.negf %190 : vector<8x96xf32>
    %192 = math.exp %191 : vector<8x96xf32>
    %cst_69 = arith.constant 1.000000e+00 : f32
    %193 = vector.broadcast %cst_69 : f32 to vector<8x96xf32>
    %194 = arith.addf %193, %192 : vector<8x96xf32>
    %195 = arith.divf %193, %194 : vector<8x96xf32>
    %196 = vector.extract_strided_slice %189 {offsets = [0, 96], sizes = [8, 32], strides = [1, 1]} : vector<8x128xf32> to vector<8x32xf32>
    %197 = math.tanh %196 : vector<8x32xf32>
    %198 = vector.extract_strided_slice %195 {offsets = [0, 0], sizes = [8, 32], strides = [1, 1]} : vector<8x96xf32> to vector<8x32xf32>
    %199 = vector.extract_strided_slice %195 {offsets = [0, 32], sizes = [8, 32], strides = [1, 1]} : vector<8x96xf32> to vector<8x32xf32>
    %200 = vector.extract_strided_slice %195 {offsets = [0, 64], sizes = [8, 32], strides = [1, 1]} : vector<8x96xf32> to vector<8x32xf32>
    %201 = arith.mulf %199, %174 : vector<8x32xf32>
    %202 = arith.mulf %198, %197 : vector<8x32xf32>
    %203 = arith.addf %201, %202 : vector<8x32xf32>
    %204 = math.tanh %203 : vector<8x32xf32>
    %205 = arith.mulf %200, %204 : vector<8x32xf32>
    %c48 = arith.constant 48 : index
    %c0_70 = arith.constant 0 : index
    %206 = vector.load %arg1[%c48, %c0_70] : memref<64x384xf32, #tpu.memory_space<vmem>>, vector<8x384xf32>
    %cst_71 = arith.constant dense<0.000000e+00> : vector<8x384xf32>
    %207 = tpu.matmul %205, %4, %cst_71 {dimension_numbers = #tpu.dot_dimension_numbers<[1], [0], [0], [1], [0, 0, 1, 1], [], []>} : vector<8x32xf32>, vector<32x384xf32>, vector<8x384xf32> -> vector<8x384xf32>
    %208 = arith.addf %206, %207 : vector<8x384xf32>
    %cst_72 = arith.constant 0.000000e+00 : f32
    %209 = vector.broadcast %cst_72 : f32 to vector<8x384xf32>
    %210 = arith.maximumf %208, %209 : vector<8x384xf32>
    %c48_73 = arith.constant 48 : index
    %c0_74 = arith.constant 0 : index
    %211 = vector.load %arg12[%c48_73, %c0_74] : memref<64x384xf32, #tpu.memory_space<vmem>>, vector<8x384xf32>
    tpu.vector_store %arg12[%c48_73, %c0_74], %210 {strides = array<i32>} : memref<64x384xf32, #tpu.memory_space<vmem>>, vector<8x384xf32>,
    %cst_75 = arith.constant dense<0.000000e+00> : vector<8x32xf32>
    %212 = tpu.matmul %210, %5, %cst_75 {dimension_numbers = #tpu.dot_dimension_numbers<[1], [0], [0], [1], [0, 0, 1, 1], [], []>} : vector<8x384xf32>, vector<384x32xf32>, vector<8x32xf32> -> vector<8x32xf32>
    %213 = arith.addf %212, %11 : vector<8x32xf32>
    %cst_76 = arith.constant 0.000000e+00 : f32
    %214 = vector.broadcast %cst_76 : f32 to vector<8x32xf32>
    %215 = arith.maximumf %213, %214 : vector<8x32xf32>
    %216 = tpu.concatenate %215, %205 in 1 : vector<8x32xf32>, vector<8x32xf32> -> vector<8x64xf32>
    %cst_77 = arith.constant dense<0.000000e+00> : vector<8x128xf32>
    %217 = tpu.matmul %216, %3, %cst_77 {dimension_numbers = #tpu.dot_dimension_numbers<[1], [0], [0], [1], [0, 0, 1, 1], [], []>} : vector<8x64xf32>, vector<64x128xf32>, vector<8x128xf32> -> vector<8x128xf32>
    %218 = arith.addf %217, %8 : vector<8x128xf32>
    %219 = vector.extract_strided_slice %218 {offsets = [0, 0], sizes = [8, 96], strides = [1, 1]} : vector<8x128xf32> to vector<8x96xf32>
    %220 = arith.negf %219 : vector<8x96xf32>
    %221 = math.exp %220 : vector<8x96xf32>
    %cst_78 = arith.constant 1.000000e+00 : f32
    %222 = vector.broadcast %cst_78 : f32 to vector<8x96xf32>
    %223 = arith.addf %222, %221 : vector<8x96xf32>
    %224 = arith.divf %222, %223 : vector<8x96xf32>
    %225 = vector.extract_strided_slice %218 {offsets = [0, 96], sizes = [8, 32], strides = [1, 1]} : vector<8x128xf32> to vector<8x32xf32>
    %226 = math.tanh %225 : vector<8x32xf32>
    %227 = vector.extract_strided_slice %224 {offsets = [0, 0], sizes = [8, 32], strides = [1, 1]} : vector<8x96xf32> to vector<8x32xf32>
    %228 = vector.extract_strided_slice %224 {offsets = [0, 32], sizes = [8, 32], strides = [1, 1]} : vector<8x96xf32> to vector<8x32xf32>
    %229 = vector.extract_strided_slice %224 {offsets = [0, 64], sizes = [8, 32], strides = [1, 1]} : vector<8x96xf32> to vector<8x32xf32>
    %230 = arith.mulf %228, %203 : vector<8x32xf32>
    %231 = arith.mulf %227, %226 : vector<8x32xf32>
    %232 = arith.addf %230, %231 : vector<8x32xf32>
    %233 = math.tanh %232 : vector<8x32xf32>
    %234 = arith.mulf %229, %233 : vector<8x32xf32>
    %c56 = arith.constant 56 : index
    %c0_79 = arith.constant 0 : index
    %235 = vector.load %arg1[%c56, %c0_79] : memref<64x384xf32, #tpu.memory_space<vmem>>, vector<8x384xf32>
    %cst_80 = arith.constant dense<0.000000e+00> : vector<8x384xf32>
    %236 = tpu.matmul %234, %4, %cst_80 {dimension_numbers = #tpu.dot_dimension_numbers<[1], [0], [0], [1], [0, 0, 1, 1], [], []>} : vector<8x32xf32>, vector<32x384xf32>, vector<8x384xf32> -> vector<8x384xf32>
    %237 = arith.addf %235, %236 : vector<8x384xf32>
    %cst_81 = arith.constant 0.000000e+00 : f32
    %238 = vector.broadcast %cst_81 : f32 to vector<8x384xf32>
    %239 = arith.maximumf %237, %238 : vector<8x384xf32>
    %c56_82 = arith.constant 56 : index
    %c0_83 = arith.constant 0 : index
    %240 = vector.load %arg12[%c56_82, %c0_83] : memref<64x384xf32, #tpu.memory_space<vmem>>, vector<8x384xf32>
    tpu.vector_store %arg12[%c56_82, %c0_83], %239 {strides = array<i32>} : memref<64x384xf32, #tpu.memory_space<vmem>>, vector<8x384xf32>,
    %c0_84 = arith.constant 0 : index
    %c0_85 = arith.constant 0 : index
    %241 = vector.load %arg10[%c0_84, %c0_85] : memref<8x64xf32, #tpu.memory_space<vmem>>, vector<8x64xf32>
    tpu.vector_store %arg10[%c0_84, %c0_85], %216 {strides = array<i32>} : memref<8x64xf32, #tpu.memory_space<vmem>>, vector<8x64xf32>,
    %c0_86 = arith.constant 0 : index
    %c0_87 = arith.constant 0 : index
    %242 = vector.load %arg11[%c0_86, %c0_87] : memref<8x32xf32, #tpu.memory_space<vmem>>, vector<8x32xf32>
    tpu.vector_store %arg11[%c0_86, %c0_87], %232 {strides = array<i32>} : memref<8x32xf32, #tpu.memory_space<vmem>>, vector<8x32xf32>,
    %c0_88 = arith.constant 0 : index
    %c0_89 = arith.constant 0 : index
    %243 = vector.load %arg12[%c0_88, %c0_89] : memref<64x384xf32, #tpu.memory_space<vmem>>, vector<64x384xf32>
    %c0_90 = arith.constant 0 : index
    %c0_91 = arith.constant 0 : index
    %244 = vector.load %arg7[%c0_90, %c0_91] : memref<384x128xf32, #tpu.memory_space<vmem>>, vector<384x128xf32>
    %cst_92 = arith.constant dense<0.000000e+00> : vector<64x128xf32>
    %245 = tpu.matmul %243, %244, %cst_92 {dimension_numbers = #tpu.dot_dimension_numbers<[1], [0], [0], [1], [0, 0, 1, 1], [], []>} : vector<64x384xf32>, vector<384x128xf32>, vector<64x128xf32> -> vector<64x128xf32>
    %c0_93 = arith.constant 0 : index
    %c0_94 = arith.constant 0 : index
    %246 = vector.load %arg8[%c0_93, %c0_94] : memref<1x128xf32, #tpu.memory_space<vmem>>, vector<1x128xf32>
    %247 = vector.broadcast %246 : vector<1x128xf32> to vector<64x128xf32>
    %248 = arith.addf %245, %247 : vector<64x128xf32>
    %c0_95 = arith.constant 0 : index
    %c0_96 = arith.constant 0 : index
    %249 = vector.load %arg9[%c0_95, %c0_96] : memref<64x128xf32, #tpu.memory_space<vmem>>, vector<64x128xf32>
    tpu.vector_store %arg9[%c0_95, %c0_96], %248 {strides = array<i32>} : memref<64x128xf32, #tpu.memory_space<vmem>>, vector<64x128xf32>,
    return
  }
  func.func @transform_0(%arg0: i32) -> (i32, i32) {
    %c0_i32 = arith.constant 0 : i32
    %c0_i32_0 = arith.constant 0 : i32
    return %arg0, %c0_i32 : i32, i32
  }
  func.func @transform_1(%arg0: i32) -> (i32, i32) {
    %c0_i32 = arith.constant 0 : i32
    %c0_i32_0 = arith.constant 0 : i32
    %c0_i32_1 = arith.constant 0 : i32
    return %c0_i32, %c0_i32_0 : i32, i32
  }
  func.func @transform_2(%arg0: i32) -> (i32, i32) {
    %c0_i32 = arith.constant 0 : i32
    %c0_i32_0 = arith.constant 0 : i32
    %c0_i32_1 = arith.constant 0 : i32
    return %c0_i32, %c0_i32_0 : i32, i32
  }
  func.func @transform_3(%arg0: i32) -> (i32, i32) {
    %c0_i32 = arith.constant 0 : i32
    %c0_i32_0 = arith.constant 0 : i32
    %c0_i32_1 = arith.constant 0 : i32
    return %c0_i32, %c0_i32_0 : i32, i32
  }
  func.func @transform_4(%arg0: i32) -> (i32, i32) {
    %c0_i32 = arith.constant 0 : i32
    %c0_i32_0 = arith.constant 0 : i32
    %c0_i32_1 = arith.constant 0 : i32
    return %c0_i32, %c0_i32_0 : i32, i32
  }
  func.func @transform_5(%arg0: i32) -> (i32, i32) {
    %c0_i32 = arith.constant 0 : i32
    %c0_i32_0 = arith.constant 0 : i32
    %c0_i32_1 = arith.constant 0 : i32
    return %c0_i32, %c0_i32_0 : i32, i32
  }
  func.func @transform_6(%arg0: i32) -> (i32, i32) {
    %c0_i32 = arith.constant 0 : i32
    %c0_i32_0 = arith.constant 0 : i32
    %c0_i32_1 = arith.constant 0 : i32
    return %c0_i32, %c0_i32_0 : i32, i32
  }
  func.func @transform_7(%arg0: i32) -> (i32, i32) {
    %c0_i32 = arith.constant 0 : i32
    %c0_i32_0 = arith.constant 0 : i32
    %c0_i32_1 = arith.constant 0 : i32
    return %c0_i32, %c0_i32_0 : i32, i32
  }
  func.func @transform_8(%arg0: i32) -> (i32, i32) {
    %c0_i32 = arith.constant 0 : i32
    %c0_i32_0 = arith.constant 0 : i32
    return %arg0, %c0_i32 : i32, i32
  }
}

</mosaic_0001>

<llo_original>
// kernel: rnn_forward.1
$region0: #{rnn_forward.1}
  #allocation0 [shape = 'u32[]', space=smem, size = 0x4, offset = 0x4, fixed_abs, tag = 'smem constant byte address 0x4 - core index']
  #allocation1 [shape = 'u32[144,128]{1,0:T(1,128)}', space=vmem, size = 0x12000, scoped, tag = 'internal scratch']
  #allocation2 [shape = 'f32[8,64]{1,0:T(8,128)}', space=vmem, size = 0x1000, scoped, tag = 'scratch operand']
  #allocation3 [shape = 'f32[8,32]{1,0:T(8,128)}', space=vmem, size = 0x1000, scoped, tag = 'scratch operand']
  #allocation4 [shape = 'f32[64,384]{1,0:T(8,128)}', space=vmem, size = 0x18000, scoped, tag = 'scratch operand']
  %s0 = inlined_call_operand.vmem [shape: f32[64,384], index: 0, kind: input, shape index: {}]
  %s1 = inlined_call_operand.vmem [shape: f32[64,128], index: 1, kind: input, shape index: {}]
  %s2 = inlined_call_operand.vmem [shape: f32[1,128], index: 2, kind: input, shape index: {}]
  %s3 = inlined_call_operand.vmem [shape: f32[32,384], index: 3, kind: input, shape index: {}]
  %s4 = inlined_call_operand.vmem [shape: f32[384,32], index: 4, kind: input, shape index: {}]
  %s5 = inlined_call_operand.vmem [shape: f32[1,32], index: 5, kind: input, shape index: {}]
  %s6 = inlined_call_operand.vmem [shape: f32[384,128], index: 6, kind: input, shape index: {}]
  %s7 = inlined_call_operand.vmem [shape: f32[1,128], index: 7, kind: input, shape index: {}]
  %s8 = inlined_call_operand.vmem [shape: f32[64,128], index: 8, kind: output, shape index: {}]
  %s9 = sld [smem:[#allocation0]]
  $region46: #{rnn_forward.1} parent=0
    _
  %s11 = ssub.s32 1, %s9
  %s12 = scalar_select 0, %s11, %s9
  // Predicated region
  $region2: #{rnn_forward.1} parent=0 // pred_check
    _
  $region3: #{rnn_forward.1} parent=0 // pred_check_branch
    %14 = sbr.rel (0) target = $region5
  $region4: #{rnn_forward.1} parent=0 // pred_region
    _
  $region5: #{rnn_forward.1} parent=0 // pred_fallthru
    _
  // Predicated region
  $region6: #{rnn_forward.1} parent=0 // pred_check
    _
  $region7: #{rnn_forward.1} parent=0 // pred_check_branch
    %16 = sbr.rel (0) target = $region9
  $region8: #{rnn_forward.1} parent=0 // pred_region
    _
  $region9: #{rnn_forward.1} parent=0 // pred_fallthru
    _
  // Predicated region
  $region10: #{rnn_forward.1} parent=0 // pred_check
    _
  $region11: #{rnn_forward.1} parent=0 // pred_check_branch
    %18 = sbr.rel (0) target = $region13
  $region12: #{rnn_forward.1} parent=0 // pred_region
    _
  $region13: #{rnn_forward.1} parent=0 // pred_fallthru
    _
  // Predicated region
  $region14: #{rnn_forward.1} parent=0 // pred_check
    _
  $region15: #{rnn_forward.1} parent=0 // pred_check_branch
    %20 = sbr.rel (0) target = $region17
  $region16: #{rnn_forward.1} parent=0 // pred_region
    _
  $region17: #{rnn_forward.1} parent=0 // pred_fallthru
    _
  // Predicated region
  $region18: #{rnn_forward.1} parent=0 // pred_check
    _
  $region19: #{rnn_forward.1} parent=0 // pred_check_branch
    %22 = sbr.rel (0) target = $region21
  $region20: #{rnn_forward.1} parent=0 // pred_region
    _
  $region21: #{rnn_forward.1} parent=0 // pred_fallthru
    _
  // Predicated region
  $region22: #{rnn_forward.1} parent=0 // pred_check
    _
  $region23: #{rnn_forward.1} parent=0 // pred_check_branch
    %24 = sbr.rel (0) target = $region25
  $region24: #{rnn_forward.1} parent=0 // pred_region
    _
  $region25: #{rnn_forward.1} parent=0 // pred_fallthru
    _
  // Predicated region
  $region26: #{rnn_forward.1} parent=0 // pred_check
    _
  $region27: #{rnn_forward.1} parent=0 // pred_check_branch
    %26 = sbr.rel (0) target = $region29
  $region28: #{rnn_forward.1} parent=0 // pred_region
    _
  $region29: #{rnn_forward.1} parent=0 // pred_fallthru
    _
  // Predicated region
  $region30: #{rnn_forward.1} parent=0 // pred_check
    _
  $region31: #{rnn_forward.1} parent=0 // pred_check_branch
    %28 = sbr.rel (0) target = $region33
  $region32: #{rnn_forward.1} parent=0 // pred_region
    _
  $region33: #{rnn_forward.1} parent=0 // pred_fallthru
    _
  %p29 = scmp.eq.s32.totalorder 0, 0
  // Predicated region
  $region34: #{rnn_forward.1} parent=0 // pred_check
    %p30 = pneg %p29
  $region35: #{rnn_forward.1} parent=0 // pred_check_branch
    %32 = sbr.rel (%p30) target = $region37
  $region36: #{rnn_forward.1} parent=0 // pred_region
    %vm33 = vcmask 523264
    %34 = vst.msk [vmem:[#allocation2] sm:$0xff] %vm33, 0.0
    %vm35 = vcmask 261120
    %36 = vst.msk [vmem:[#allocation3] sm:$0xff] %vm35, 0.0
  $region37: #{rnn_forward.1} parent=0 // pred_fallthru
    _
  %v37 = vld [vmem:[%s1] sm:$0xff]
  %v38 = vld [vmem:[%s1 + $0x8] sm:$0xff]
  %v39 = vld [vmem:[%s1 + $0x10] sm:$0xff]
  %v40 = vld [vmem:[%s1 + $0x18] sm:$0xff]
  %v41 = vld [vmem:[%s1 + $0x20] sm:$0xff]
  %v42 = vld [vmem:[%s1 + $0x28] sm:$0xff]
  %v43 = vld [vmem:[%s1 + $0x30] sm:$0xff]
  %v44 = vld [vmem:[%s1 + $0x38] sm:$0xff]
  %v45 = vld [vmem:[%s3] sm:$0xff]
  %v46 = vld [vmem:[%s3 + $0x8] sm:$0xff]
  %v47 = vld [vmem:[%s3 + $0x10] sm:$0xff]
  %v48 = vld [vmem:[%s3 + $0x18] sm:$0xff]
  %v49 = vld [vmem:[%s3 + $0x20] sm:$0xff]
  %v50 = vld [vmem:[%s3 + $0x28] sm:$0xff]
  %v51 = vld [vmem:[%s3 + $0x30] sm:$0xff]
  %v52 = vld [vmem:[%s3 + $0x38] sm:$0xff]
  %v53 = vld [vmem:[%s3 + $0x40] sm:$0xff]
  %v54 = vld [vmem:[%s3 + $0x48] sm:$0xff]
  %v55 = vld [vmem:[%s3 + $0x50] sm:$0xff]
  %v56 = vld [vmem:[%s3 + $0x58] sm:$0xff]
  %v57 = vld [vmem:[%s4] sm:$0xff]
  %v58 = vld [vmem:[%s4 + $0x8] sm:$0xff]
  %v59 = vld [vmem:[%s4 + $0x10] sm:$0xff]
  %v60 = vld [vmem:[%s4 + $0x18] sm:$0xff]
  %v61 = vld [vmem:[%s4 + $0x20] sm:$0xff]
  %v62 = vld [vmem:[%s4 + $0x28] sm:$0xff]
  %v63 = vld [vmem:[%s4 + $0x30] sm:$0xff]
  %v64 = vld [vmem:[%s4 + $0x38] sm:$0xff]
  %v65 = vld [vmem:[%s4 + $0x40] sm:$0xff]
  %v66 = vld [vmem:[%s4 + $0x48] sm:$0xff]
  %v67 = vld [vmem:[%s4 + $0x50] sm:$0xff]
  %v68 = vld [vmem:[%s4 + $0x58] sm:$0xff]
  %v69 = vld [vmem:[%s4 + $0x60] sm:$0xff]
  %v70 = vld [vmem:[%s4 + $0x68] sm:$0xff]
  %v71 = vld [vmem:[%s4 + $0x70] sm:$0xff]
  %v72 = vld [vmem:[%s4 + $0x78] sm:$0xff]
  %v73 = vld [vmem:[%s4 + $0x80] sm:$0xff]
  %v74 = vld [vmem:[%s4 + $0x88] sm:$0xff]
  %v75 = vld [vmem:[%s4 + $0x90] sm:$0xff]
  %v76 = vld [vmem:[%s4 + $0x98] sm:$0xff]
  %v77 = vld [vmem:[%s4 + $0xa0] sm:$0xff]
  %v78 = vld [vmem:[%s4 + $0xa8] sm:$0xff]
  %v79 = vld [vmem:[%s4 + $0xb0] sm:$0xff]
  %v80 = vld [vmem:[%s4 + $0xb8] sm:$0xff]
  %v81 = vld [vmem:[%s4 + $0xc0] sm:$0xff]
  %v82 = vld [vmem:[%s4 + $0xc8] sm:$0xff]
  %v83 = vld [vmem:[%s4 + $0xd0] sm:$0xff]
  %v84 = vld [vmem:[%s4 + $0xd8] sm:$0xff]
  %v85 = vld [vmem:[%s4 + $0xe0] sm:$0xff]
  %v86 = vld [vmem:[%s4 + $0xe8] sm:$0xff]
  %v87 = vld [vmem:[%s4 + $0xf0] sm:$0xff]
  %v88 = vld [vmem:[%s4 + $0xf8] sm:$0xff]
  %v89 = vld [vmem:[%s4 + $0x100] sm:$0xff]
  %v90 = vld [vmem:[%s4 + $0x108] sm:$0xff]
  %v91 = vld [vmem:[%s4 + $0x110] sm:$0xff]
  %v92 = vld [vmem:[%s4 + $0x118] sm:$0xff]
  %v93 = vld [vmem:[%s4 + $0x120] sm:$0xff]
  %v94 = vld [vmem:[%s4 + $0x128] sm:$0xff]
  %v95 = vld [vmem:[%s4 + $0x130] sm:$0xff]
  %v96 = vld [vmem:[%s4 + $0x138] sm:$0xff]
  %v97 = vld [vmem:[%s4 + $0x140] sm:$0xff]
  %v98 = vld [vmem:[%s4 + $0x148] sm:$0xff]
  %v99 = vld [vmem:[%s4 + $0x150] sm:$0xff]
  %v100 = vld [vmem:[%s4 + $0x158] sm:$0xff]
  %v101 = vld [vmem:[%s4 + $0x160] sm:$0xff]
  %v102 = vld [vmem:[%s4 + $0x168] sm:$0xff]
  %v103 = vld [vmem:[%s4 + $0x170] sm:$0xff]
  %v104 = vld [vmem:[%s4 + $0x178] sm:$0xff]
  %v105 = vld [vmem:[%s2] sm:$0x1]
  %v107 = vlaneseq
  %v108 = vshrl.u32 %v107, 7
  %v109 = vsub.s32 0, %v108
  %v110 = vrot.slane %v105, %v109
  %v112 = vld [vmem:[%s5] sm:$0x1]
  %v114 = vlaneseq
  %v115 = vshrl.u32 %v114, 7
  %v116 = vsub.s32 0, %v115
  %v117 = vrot.slane %v112, %v116
  %v119 = vld [vmem:[#allocation2] sm:$0xff]
  %v120 = vld [vmem:[#allocation3] sm:$0xff]
  %vm121 = vcmask 523264
  %v123 = vsel %vm121, %v119, 0
  %125 = vmatprep.subr.mxu0 0.0
  %126 = vmatpush1.msra.mxu0 %v37
  %127 = vmatprep.subr.mxu0 0.0
  %128 = vmatpush1.msra.mxu0 %v38
  %129 = vmatprep.subr.mxu0 0.0
  %130 = vmatpush1.msra.mxu0 %v39
  %131 = vmatprep.subr.mxu0 0.0
  %132 = vmatpush1.msra.mxu0 %v40
  %133 = vmatprep.subr.mxu0 0.0
  %134 = vmatpush1.msra.mxu0 %v41
  %135 = vmatprep.subr.mxu0 0.0
  %136 = vmatpush1.msra.mxu0 %v42
  %137 = vmatprep.subr.mxu0 0.0
  %138 = vmatpush1.msra.mxu0 %v43
  %139 = vmatprep.subr.mxu0 0.0
  %140 = vmatpush1.msra.mxu0 %v44
  %141 = vmatprep.subr.mxu0 0.0
  %142 = vmatpush1.msra.mxu0 0.0
  %143 = vmatprep.subr.mxu0 0.0
  %144 = vmatpush1.msra.mxu0 0.0
  %145 = vmatprep.subr.mxu0 0.0
  %146 = vmatpush1.msra.mxu0 0.0
  %147 = vmatprep.subr.mxu0 0.0
  %148 = vmatpush1.msra.mxu0 0.0
  %149 = vmatprep.subr.mxu0 0.0
  %150 = vmatpush1.msra.mxu0 0.0
  %151 = vmatprep.subr.mxu0 0.0
  %152 = vmatpush1.msra.mxu0 0.0
  %153 = vmatprep.subr.mxu0 0.0
  %154 = vmatpush1.msra.mxu0 0.0
  %155 = vmatprep.subr.mxu0 0.0
  %156 = vmatpush1.msra.mxu0 0.0
  %157 = vmatprep.subr.mxu0 0.0
  %158 = vmatpush1.msra.mxu0 0.0
  %159 = vmatprep.subr.mxu0 0.0
  %160 = vmatpush1.msra.mxu0 0.0
  %161 = vmatprep.subr.mxu0 0.0
  %162 = vmatpush1.msra.mxu0 0.0
  %163 = vmatprep.subr.mxu0 0.0
  %164 = vmatpush1.msra.mxu0 0.0
  %165 = vmatprep.subr.mxu0 0.0
  %166 = vmatpush1.msra.mxu0 0.0
  %167 = vmatprep.subr.mxu0 0.0
  %168 = vmatpush1.msra.mxu0 0.0
  %169 = vmatprep.subr.mxu0 0.0
  %170 = vmatpush1.msra.mxu0 0.0
  %171 = vmatprep.subr.mxu0 0.0
  %172 = vmatpush1.msra.mxu0 0.0
  %173 = vmatprep.subr.mxu0 0.0
  %174 = vmatpush1.msra.mxu0 0.0
  %175 = vmatprep.subr.mxu0 0.0
  %176 = vmatpush1.msra.mxu0 0.0
  %177 = vmatprep.subr.mxu0 0.0
  %178 = vmatpush1.msra.mxu0 0.0
  %179 = vmatprep.subr.mxu0 0.0
  %180 = vmatpush1.msra.mxu0 0.0
  %181 = vmatprep.subr.mxu0 0.0
  %182 = vmatpush1.msra.mxu0 0.0
  %183 = vmatprep.subr.mxu0 0.0
  %184 = vmatpush1.msra.mxu0 0.0
  %185 = vmatprep.subr.mxu0 0.0
  %186 = vmatpush1.msra.mxu0 0.0
  %187 = vmatprep.subr.mxu0 0.0
  %188 = vmatpush1.msra.mxu0 0.0
  %189 = vmatprep.mubr.f32.mxu0 0.0
  %190 = vmatmul.mubr.f32.gmra.mrb[0].mxu0 %v123
  %v191 = vpop.f32.mrb[0].mxu0
  %v192 = vadd.f32 %v110, %v191
  %v193 = vpop.f32.mrb[0].mxu0
  %194 = vdwg.mxu0
  %v195 = vxor.u32 %v192, 2147483648
  %v196 = vmul.f32 %v195, 1.442695
  %v197 = vpow.pop %v196
  %v198 = vadd.f32 %v197, 1.0
  %v199 = vrcp.pop %v198
  %v200 = vmul.f32 1.0, %v199
  %v201 = vtanh.pop %v192
  %203 = vrot.lane.b32.xlu0 %v120, 32
  %v204 = vpop.permute.xlu0 %203
  %v206 = vmul.f32 %v200, %v204
  %208 = vrot.lane.b32.xlu0 %v201, 32
  %v209 = vpop.permute.xlu0 %208
  %v211 = vmul.f32 %v200, %v209
  %213 = vrot.lane.b32.xlu0 %v211, 32
  %v214 = vpop.permute.xlu0 %213
  %v216 = vadd.f32 %v206, %v214
  %v217 = vtanh.pop %v216
  %219 = vrot.lane.b32.xlu0 %v217, 32
  %v220 = vpop.permute.xlu0 %219
  %v222 = vmul.f32 %v200, %v220
  %v223 = vld [vmem:[%s0] sm:$0xff]
  %v224 = vld [vmem:[%s0 + $0x8] sm:$0xff]
  %v225 = vld [vmem:[%s0 + $0x10] sm:$0xff]
  %227 = vrot.lane.b32.xlu0 %v222, 64
  %v228 = vpop.permute.xlu0 %227
  %vm229 = vcmask 261120
  %v230 = vsel %vm229, %v228, 0
  %232 = vmatprep.subr.mxu0 %v46
  %233 = vmatpush1.msra.mxu0 %v45
  %234 = vmatprep.subr.mxu0 %v49
  %235 = vmatpush1.msra.mxu0 %v48
  %236 = vmatprep.subr.mxu0 %v52
  %237 = vmatpush1.msra.mxu0 %v51
  %238 = vmatprep.subr.mxu0 %v55
  %239 = vmatpush1.msra.mxu0 %v54
  %240 = vmatprep.subr.mxu0 0.0
  %241 = vmatpush1.msra.mxu0 0.0
  %242 = vmatprep.subr.mxu0 0.0
  %243 = vmatpush1.msra.mxu0 0.0
  %244 = vmatprep.subr.mxu0 0.0
  %245 = vmatpush1.msra.mxu0 0.0
  %246 = vmatprep.subr.mxu0 0.0
  %247 = vmatpush1.msra.mxu0 0.0
  %248 = vmatprep.subr.mxu0 0.0
  %249 = vmatpush1.msra.mxu0 0.0
  %250 = vmatprep.subr.mxu0 0.0
  %251 = vmatpush1.msra.mxu0 0.0
  %252 = vmatprep.subr.mxu0 0.0
  %253 = vmatpush1.msra.mxu0 0.0
  %254 = vmatprep.subr.mxu0 0.0
  %255 = vmatpush1.msra.mxu0 0.0
  %256 = vmatprep.subr.mxu0 0.0
  %257 = vmatpush1.msra.mxu0 0.0
  %258 = vmatprep.subr.mxu0 0.0
  %259 = vmatpush1.msra.mxu0 0.0
  %260 = vmatprep.subr.mxu0 0.0
  %261 = vmatpush1.msra.mxu0 0.0
  %262 = vmatprep.subr.mxu0 0.0
  %263 = vmatpush1.msra.mxu0 0.0
  %264 = vmatprep.subr.mxu0 0.0
  %265 = vmatpush1.msra.mxu0 0.0
  %266 = vmatprep.subr.mxu0 0.0
  %267 = vmatpush1.msra.mxu0 0.0
  %268 = vmatprep.subr.mxu0 0.0
  %269 = vmatpush1.msra.mxu0 0.0
  %270 = vmatprep.subr.mxu0 0.0
  %271 = vmatpush1.msra.mxu0 0.0
  %272 = vmatprep.subr.mxu0 0.0
  %273 = vmatpush1.msra.mxu0 0.0
  %274 = vmatprep.subr.mxu0 0.0
  %275 = vmatpush1.msra.mxu0 0.0
  %276 = vmatprep.subr.mxu0 0.0
  %277 = vmatpush1.msra.mxu0 0.0
  %278 = vmatprep.subr.mxu0 0.0
  %279 = vmatpush1.msra.mxu0 0.0
  %280 = vmatprep.subr.mxu0 0.0
  %281 = vmatpush1.msra.mxu0 0.0
  %282 = vmatprep.subr.mxu0 0.0
  %283 = vmatpush1.msra.mxu0 0.0
  %284 = vmatprep.subr.mxu0 0.0
  %285 = vmatpush1.msra.mxu0 0.0
  %286 = vmatprep.subr.mxu0 0.0
  %287 = vmatpush1.msra.mxu0 0.0
  %288 = vmatprep.subr.mxu0 0.0
  %289 = vmatpush1.msra.mxu0 0.0
  %290 = vmatprep.subr.mxu0 0.0
  %291 = vmatpush1.msra.mxu0 0.0
  %292 = vmatprep.subr.mxu0 0.0
  %293 = vmatpush1.msra.mxu0 0.0
  %294 = vmatprep.subr.mxu0 0.0
  %295 = vmatpush1.msra.mxu0 0.0
  %296 = vmatprep.mubr.f32.mxu0 0.0
  %297 = vmatmul.mubr.f32.gmra.mrb[0].mxu0 %v230
  %v298 = vpop.f32.mrb[0].mxu0
  %v299 = vadd.f32 0.0, %v298
  %v300 = vpop.f32.mrb[0].mxu0
  %v301 = vadd.f32 0.0, %v300
  %302 = vdwg.mxu0
  %303 = vmatprep.subr.mxu0 0.0
  %304 = vmatpush1.msra.mxu0 %v47
  %305 = vmatprep.subr.mxu0 0.0
  %306 = vmatpush1.msra.mxu0 %v50
  %307 = vmatprep.subr.mxu0 0.0
  %308 = vmatpush1.msra.mxu0 %v53
  %309 = vmatprep.subr.mxu0 0.0
  %310 = vmatpush1.msra.mxu0 %v56
  %311 = vmatprep.subr.mxu0 0.0
  %312 = vmatpush1.msra.mxu0 0.0
  %313 = vmatprep.subr.mxu0 0.0
  %314 = vmatpush1.msra.mxu0 0.0
  %315 = vmatprep.subr.mxu0 0.0
  %316 = vmatpush1.msra.mxu0 0.0
  %317 = vmatprep.subr.mxu0 0.0
  %318 = vmatpush1.msra.mxu0 0.0
  %319 = vmatprep.subr.mxu0 0.0
  %320 = vmatpush1.msra.mxu0 0.0
  %321 = vmatprep.subr.mxu0 0.0
  %322 = vmatpush1.msra.mxu0 0.0
  %323 = vmatprep.subr.mxu0 0.0
  %324 = vmatpush1.msra.mxu0 0.0
  %325 = vmatprep.subr.mxu0 0.0
  %326 = vmatpush1.msra.mxu0 0.0
  %327 = vmatprep.subr.mxu0 0.0
  %328 = vmatpush1.msra.mxu0 0.0
  %329 = vmatprep.subr.mxu0 0.0
  %330 = vmatpush1.msra.mxu0 0.0
  %331 = vmatprep.subr.mxu0 0.0
  %332 = vmatpush1.msra.mxu0 0.0
  %333 = vmatprep.subr.mxu0 0.0
  %334 = vmatpush1.msra.mxu0 0.0
  %335 = vmatprep.subr.mxu0 0.0
  %336 = vmatpush1.msra.mxu0 0.0
  %337 = vmatprep.subr.mxu0 0.0
  %338 = vmatpush1.msra.mxu0 0.0
  %339 = vmatprep.subr.mxu0 0.0
  %340 = vmatpush1.msra.mxu0 0.0
  %341 = vmatprep.subr.mxu0 0.0
  %342 = vmatpush1.msra.mxu0 0.0
  %343 = vmatprep.subr.mxu0 0.0
  %344 = vmatpush1.msra.mxu0 0.0
  %345 = vmatprep.subr.mxu0 0.0
  %346 = vmatpush1.msra.mxu0 0.0
  %347 = vmatprep.subr.mxu0 0.0
  %348 = vmatpush1.msra.mxu0 0.0
  %349 = vmatprep.subr.mxu0 0.0
  %350 = vmatpush1.msra.mxu0 0.0
  %351 = vmatprep.subr.mxu0 0.0
  %352 = vmatpush1.msra.mxu0 0.0
  %353 = vmatprep.subr.mxu0 0.0
  %354 = vmatpush1.msra.mxu0 0.0
  %355 = vmatprep.subr.mxu0 0.0
  %356 = vmatpush1.msra.mxu0 0.0
  %357 = vmatprep.subr.mxu0 0.0
  %358 = vmatpush1.msra.mxu0 0.0
  %359 = vmatprep.subr.mxu0 0.0
  %360 = vmatpush1.msra.mxu0 0.0
  %361 = vmatprep.subr.mxu0 0.0
  %362 = vmatpush1.msra.mxu0 0.0
  %363 = vmatprep.subr.mxu0 0.0
  %364 = vmatpush1.msra.mxu0 0.0
  %365 = vmatprep.subr.mxu0 0.0
  %366 = vmatpush1.msra.mxu0 0.0
  %367 = vmatprep.mubr.f32.mxu0 0.0
  %368 = vmatmul.mubr.f32.gmra.mrb[0].mxu0 %v230
  %v369 = vpop.f32.mrb[0].mxu0
  %v370 = vadd.f32 0.0, %v369
  %v371 = vpop.f32.mrb[0].mxu0
  %372 = vdwg.mxu0
  %v373 = vadd.f32 %v223, %v299
  %v374 = vadd.f32 %v224, %v301
  %v375 = vadd.f32 %v225, %v370
  %v376 = vmax.f32 %v373, 0.0
  %v377 = vmax.f32 %v374, 0.0
  %v378 = vmax.f32 %v375, 0.0
  %379 = vst [vmem:[#allocation4] sm:$0xff] %v376
  %380 = vst [vmem:[#allocation4 + $0x8] sm:$0xff] %v377
  %381 = vst [vmem:[#allocation4 + $0x10] sm:$0xff] %v378
  %382 = vmatprep.subr.mxu0 0.0
  %383 = vmatpush1.msra.mxu0 %v57
  %384 = vmatprep.subr.mxu0 0.0
  %385 = vmatpush1.msra.mxu0 %v58
  %386 = vmatprep.subr.mxu0 0.0
  %387 = vmatpush1.msra.mxu0 %v59
  %388 = vmatprep.subr.mxu0 0.0
  %389 = vmatpush1.msra.mxu0 %v60
  %390 = vmatprep.subr.mxu0 0.0
  %391 = vmatpush1.msra.mxu0 %v61
  %392 = vmatprep.subr.mxu0 0.0
  %393 = vmatpush1.msra.mxu0 %v62
  %394 = vmatprep.subr.mxu0 0.0
  %395 = vmatpush1.msra.mxu0 %v63
  %396 = vmatprep.subr.mxu0 0.0
  %397 = vmatpush1.msra.mxu0 %v64
  %398 = vmatprep.subr.mxu0 0.0
  %399 = vmatpush1.msra.mxu0 %v65
  %400 = vmatprep.subr.mxu0 0.0
  %401 = vmatpush1.msra.mxu0 %v66
  %402 = vmatprep.subr.mxu0 0.0
  %403 = vmatpush1.msra.mxu0 %v67
  %404 = vmatprep.subr.mxu0 0.0
  %405 = vmatpush1.msra.mxu0 %v68
  %406 = vmatprep.subr.mxu0 0.0
  %407 = vmatpush1.msra.mxu0 %v69
  %408 = vmatprep.subr.mxu0 0.0
  %409 = vmatpush1.msra.mxu0 %v70
  %410 = vmatprep.subr.mxu0 0.0
  %411 = vmatpush1.msra.mxu0 %v71
  %412 = vmatprep.subr.mxu0 0.0
  %413 = vmatpush1.msra.mxu0 %v72
  %414 = vmatprep.subr.mxu0 0.0
  %415 = vmatpush1.msra.mxu0 %v73
  %416 = vmatprep.subr.mxu0 0.0
  %417 = vmatpush1.msra.mxu0 %v74
  %418 = vmatprep.subr.mxu0 0.0
  %419 = vmatpush1.msra.mxu0 %v75
  %420 = vmatprep.subr.mxu0 0.0
  %421 = vmatpush1.msra.mxu0 %v76
  %422 = vmatprep.subr.mxu0 0.0
  %423 = vmatpush1.msra.mxu0 %v77
  %424 = vmatprep.subr.mxu0 0.0
  %425 = vmatpush1.msra.mxu0 %v78
  %426 = vmatprep.subr.mxu0 0.0
  %427 = vmatpush1.msra.mxu0 %v79
  %428 = vmatprep.subr.mxu0 0.0
  %429 = vmatpush1.msra.mxu0 %v80
  %430 = vmatprep.subr.mxu0 0.0
  %431 = vmatpush1.msra.mxu0 %v81
  %432 = vmatprep.subr.mxu0 0.0
  %433 = vmatpush1.msra.mxu0 %v82
  %434 = vmatprep.subr.mxu0 0.0
  %435 = vmatpush1.msra.mxu0 %v83
  %436 = vmatprep.subr.mxu0 0.0
  %437 = vmatpush1.msra.mxu0 %v84
  %438 = vmatprep.subr.mxu0 0.0
  %439 = vmatpush1.msra.mxu0 %v85
  %440 = vmatprep.subr.mxu0 0.0
  %441 = vmatpush1.msra.mxu0 %v86
  %442 = vmatprep.subr.mxu0 0.0
  %443 = vmatpush1.msra.mxu0 %v87
  %444 = vmatprep.subr.mxu0 0.0
  %445 = vmatpush1.msra.mxu0 %v88
  %446 = vmatprep.mubr.f32.mxu0 %v377
  %447 = vmatmul.mubr.f32.gmra.mrb[0].mxu0 %v376
  %v448 = vpop.f32.mrb[0].mxu0
  %v449 = vadd.f32 %v117, %v448
  %v450 = vpop.f32.mrb[0].mxu0
  %451 = vdwg.mxu0
  %452 = vmatprep.subr.mxu0 0.0
  %453 = vmatpush1.msra.mxu0 %v89
  %454 = vmatprep.subr.mxu0 0.0
  %455 = vmatpush1.msra.mxu0 %v90
  %456 = vmatprep.subr.mxu0 0.0
  %457 = vmatpush1.msra.mxu0 %v91
  %458 = vmatprep.subr.mxu0 0.0
  %459 = vmatpush1.msra.mxu0 %v92
  %460 = vmatprep.subr.mxu0 0.0
  %461 = vmatpush1.msra.mxu0 %v93
  %462 = vmatprep.subr.mxu0 0.0
  %463 = vmatpush1.msra.mxu0 %v94
  %464 = vmatprep.subr.mxu0 0.0
  %465 = vmatpush1.msra.mxu0 %v95
  %466 = vmatprep.subr.mxu0 0.0
  %467 = vmatpush1.msra.mxu0 %v96
  %468 = vmatprep.subr.mxu0 0.0
  %469 = vmatpush1.msra.mxu0 %v97
  %470 = vmatprep.subr.mxu0 0.0
  %471 = vmatpush1.msra.mxu0 %v98
  %472 = vmatprep.subr.mxu0 0.0
  %473 = vmatpush1.msra.mxu0 %v99
  %474 = vmatprep.subr.mxu0 0.0
  %475 = vmatpush1.msra.mxu0 %v100
  %476 = vmatprep.subr.mxu0 0.0
  %477 = vmatpush1.msra.mxu0 %v101
  %478 = vmatprep.subr.mxu0 0.0
  %479 = vmatpush1.msra.mxu0 %v102
  %480 = vmatprep.subr.mxu0 0.0
  %481 = vmatpush1.msra.mxu0 %v103
  %482 = vmatprep.subr.mxu0 0.0
  %483 = vmatpush1.msra.mxu0 %v104
  %484 = vmatprep.subr.mxu0 0.0
  %485 = vmatpush1.msra.mxu0 0.0
  %486 = vmatprep.subr.mxu0 0.0
  %487 = vmatpush1.msra.mxu0 0.0
  %488 = vmatprep.subr.mxu0 0.0
  %489 = vmatpush1.msra.mxu0 0.0
  %490 = vmatprep.subr.mxu0 0.0
  %491 = vmatpush1.msra.mxu0 0.0
  %492 = vmatprep.subr.mxu0 0.0
  %493 = vmatpush1.msra.mxu0 0.0
  %494 = vmatprep.subr.mxu0 0.0
  %495 = vmatpush1.msra.mxu0 0.0
  %496 = vmatprep.subr.mxu0 0.0
  %497 = vmatpush1.msra.mxu0 0.0
  %498 = vmatprep.subr.mxu0 0.0
  %499 = vmatpush1.msra.mxu0 0.0
  %500 = vmatprep.subr.mxu0 0.0
  %501 = vmatpush1.msra.mxu0 0.0
  %502 = vmatprep.subr.mxu0 0.0
  %503 = vmatpush1.msra.mxu0 0.0
  %504 = vmatprep.subr.mxu0 0.0
  %505 = vmatpush1.msra.mxu0 0.0
  %506 = vmatprep.subr.mxu0 0.0
  %507 = vmatpush1.msra.mxu0 0.0
  %508 = vmatprep.subr.mxu0 0.0
  %509 = vmatpush1.msra.mxu0 0.0
  %510 = vmatprep.subr.mxu0 0.0
  %511 = vmatpush1.msra.mxu0 0.0
  %512 = vmatprep.subr.mxu0 0.0
  %513 = vmatpush1.msra.mxu0 0.0
  %514 = vmatprep.subr.mxu0 0.0
  %515 = vmatpush1.msra.mxu0 0.0
  %516 = vmatprep.mubr.f32.mxu0 0.0
  %517 = vmatmul.mubr.f32.gmra.mrb[0].mxu0 %v378
  %v518 = vpop.f32.mrb[0].mxu0
  %v519 = vadd.f32 %v449, %v518
  %v520 = vpop.f32.mrb[0].mxu0
  %521 = vdwg.mxu0
  %v522 = vmax.f32 %v519, 0.0
  %523 = vrot.lane.b32.xlu0 %v222, 96
  %v524 = vpop.permute.xlu0 %523
  %v526 = vsel %vm229, %v522, %v524
  %v528 = vsel %vm121, %v526, 0
  %530 = vmatprep.subr.mxu0 0.0
  %531 = vmatpush1.msra.mxu0 %v37
  %532 = vmatprep.subr.mxu0 0.0
  %533 = vmatpush1.msra.mxu0 %v38
  %534 = vmatprep.subr.mxu0 0.0
  %535 = vmatpush1.msra.mxu0 %v39
  %536 = vmatprep.subr.mxu0 0.0
  %537 = vmatpush1.msra.mxu0 %v40
  %538 = vmatprep.subr.mxu0 0.0
  %539 = vmatpush1.msra.mxu0 %v41
  %540 = vmatprep.subr.mxu0 0.0
  %541 = vmatpush1.msra.mxu0 %v42
  %542 = vmatprep.subr.mxu0 0.0
  %543 = vmatpush1.msra.mxu0 %v43
  %544 = vmatprep.subr.mxu0 0.0
  %545 = vmatpush1.msra.mxu0 %v44
  %546 = vmatprep.subr.mxu0 0.0
  %547 = vmatpush1.msra.mxu0 0.0
  %548 = vmatprep.subr.mxu0 0.0
  %549 = vmatpush1.msra.mxu0 0.0
  %550 = vmatprep.subr.mxu0 0.0
  %551 = vmatpush1.msra.mxu0 0.0
  %552 = vmatprep.subr.mxu0 0.0
  %553 = vmatpush1.msra.mxu0 0.0
  %554 = vmatprep.subr.mxu0 0.0
  %555 = vmatpush1.msra.mxu0 0.0
  %556 = vmatprep.subr.mxu0 0.0
  %557 = vmatpush1.msra.mxu0 0.0
  %558 = vmatprep.subr.mxu0 0.0
  %559 = vmatpush1.msra.mxu0 0.0
  %560 = vmatprep.subr.mxu0 0.0
  %561 = vmatpush1.msra.mxu0 0.0
  %562 = vmatprep.subr.mxu0 0.0
  %563 = vmatpush1.msra.mxu0 0.0
  %564 = vmatprep.subr.mxu0 0.0
  %565 = vmatpush1.msra.mxu0 0.0
  %566 = vmatprep.subr.mxu0 0.0
  %567 = vmatpush1.msra.mxu0 0.0
  %568 = vmatprep.subr.mxu0 0.0
  %569 = vmatpush1.msra.mxu0 0.0
  %570 = vmatprep.subr.mxu0 0.0
  %571 = vmatpush1.msra.mxu0 0.0
  %572 = vmatprep.subr.mxu0 0.0
  %573 = vmatpush1.msra.mxu0 0.0
  %574 = vmatprep.subr.mxu0 0.0
  %575 = vmatpush1.msra.mxu0 0.0
  %576 = vmatprep.subr.mxu0 0.0
  %577 = vmatpush1.msra.mxu0 0.0
  %578 = vmatprep.subr.mxu0 0.0
  %579 = vmatpush1.msra.mxu0 0.0
  %580 = vmatprep.subr.mxu0 0.0
  %581 = vmatpush1.msra.mxu0 0.0
  %582 = vmatprep.subr.mxu0 0.0
  %583 = vmatpush1.msra.mxu0 0.0
  %584 = vmatprep.subr.mxu0 0.0
  %585 = vmatpush1.msra.mxu0 0.0
  %586 = vmatprep.subr.mxu0 0.0
  %587 = vmatpush1.msra.mxu0 0.0
  %588 = vmatprep.subr.mxu0 0.0
  %589 = vmatpush1.msra.mxu0 0.0
  %590 = vmatprep.subr.mxu0 0.0
  %591 = vmatpush1.msra.mxu0 0.0
  %592 = vmatprep.subr.mxu0 0.0
  %593 = vmatpush1.msra.mxu0 0.0
  %594 = vmatprep.mubr.f32.mxu0 0.0
  %595 = vmatmul.mubr.f32.gmra.mrb[0].mxu0 %v528
  %v596 = vpop.f32.mrb[0].mxu0
  %v597 = vadd.f32 %v110, %v596
  %v598 = vpop.f32.mrb[0].mxu0
  %599 = vdwg.mxu0
  %v600 = vxor.u32 %v597, 2147483648
  %v601 = vmul.f32 %v600, 1.442695
  %v602 = vpow.pop %v601
  %v603 = vadd.f32 %v602, 1.0
  %v604 = vrcp.pop %v603
  %v605 = vmul.f32 1.0, %v604
  %v606 = vtanh.pop %v597
  %v607 = vmul.f32 %v605, %v216
  %609 = vrot.lane.b32.xlu0 %v606, 32
  %v610 = vpop.permute.xlu0 %609
  %v612 = vmul.f32 %v605, %v610
  %614 = vrot.lane.b32.xlu0 %v612, 32
  %v615 = vpop.permute.xlu0 %614
  %v617 = vadd.f32 %v607, %v615
  %v618 = vtanh.pop %v617
  %620 = vrot.lane.b32.xlu0 %v618, 32
  %v621 = vpop.permute.xlu0 %620
  %v623 = vmul.f32 %v605, %v621
  %v624 = vld [vmem:[%s0 + $0x18] sm:$0xff]
  %v625 = vld [vmem:[%s0 + $0x20] sm:$0xff]
  %v626 = vld [vmem:[%s0 + $0x28] sm:$0xff]
  %628 = vrot.lane.b32.xlu0 %v623, 64
  %v629 = vpop.permute.xlu0 %628
  %v630 = vsel %vm229, %v629, 0
  %632 = vmatprep.subr.mxu0 %v46
  %633 = vmatpush1.msra.mxu0 %v45
  %634 = vmatprep.subr.mxu0 %v49
  %635 = vmatpush1.msra.mxu0 %v48
  %636 = vmatprep.subr.mxu0 %v52
  %637 = vmatpush1.msra.mxu0 %v51
  %638 = vmatprep.subr.mxu0 %v55
  %639 = vmatpush1.msra.mxu0 %v54
  %640 = vmatprep.subr.mxu0 0.0
  %641 = vmatpush1.msra.mxu0 0.0
  %642 = vmatprep.subr.mxu0 0.0
  %643 = vmatpush1.msra.mxu0 0.0
  %644 = vmatprep.subr.mxu0 0.0
  %645 = vmatpush1.msra.mxu0 0.0
  %646 = vmatprep.subr.mxu0 0.0
  %647 = vmatpush1.msra.mxu0 0.0
  %648 = vmatprep.subr.mxu0 0.0
  %649 = vmatpush1.msra.mxu0 0.0
  %650 = vmatprep.subr.mxu0 0.0
  %651 = vmatpush1.msra.mxu0 0.0
  %652 = vmatprep.subr.mxu0 0.0
  %653 = vmatpush1.msra.mxu0 0.0
  %654 = vmatprep.subr.mxu0 0.0
  %655 = vmatpush1.msra.mxu0 0.0
  %656 = vmatprep.subr.mxu0 0.0
  %657 = vmatpush1.msra.mxu0 0.0
  %658 = vmatprep.subr.mxu0 0.0
  %659 = vmatpush1.msra.mxu0 0.0
  %660 = vmatprep.subr.mxu0 0.0
  %661 = vmatpush1.msra.mxu0 0.0
  %662 = vmatprep.subr.mxu0 0.0
  %663 = vmatpush1.msra.mxu0 0.0
  %664 = vmatprep.subr.mxu0 0.0
  %665 = vmatpush1.msra.mxu0 0.0
  %666 = vmatprep.subr.mxu0 0.0
  %667 = vmatpush1.msra.mxu0 0.0
  %668 = vmatprep.subr.mxu0 0.0
  %669 = vmatpush1.msra.mxu0 0.0
  %670 = vmatprep.subr.mxu0 0.0
  %671 = vmatpush1.msra.mxu0 0.0
  %672 = vmatprep.subr.mxu0 0.0
  %673 = vmatpush1.msra.mxu0 0.0
  %674 = vmatprep.subr.mxu0 0.0
  %675 = vmatpush1.msra.mxu0 0.0
  %676 = vmatprep.subr.mxu0 0.0
  %677 = vmatpush1.msra.mxu0 0.0
  %678 = vmatprep.subr.mxu0 0.0
  %679 = vmatpush1.msra.mxu0 0.0
  %680 = vmatprep.subr.mxu0 0.0
  %681 = vmatpush1.msra.mxu0 0.0
  %682 = vmatprep.subr.mxu0 0.0
  %683 = vmatpush1.msra.mxu0 0.0
  %684 = vmatprep.subr.mxu0 0.0
  %685 = vmatpush1.msra.mxu0 0.0
  %686 = vmatprep.subr.mxu0 0.0
  %687 = vmatpush1.msra.mxu0 0.0
  %688 = vmatprep.subr.mxu0 0.0
  %689 = vmatpush1.msra.mxu0 0.0
  %690 = vmatprep.subr.mxu0 0.0
  %691 = vmatpush1.msra.mxu0 0.0
  %692 = vmatprep.subr.mxu0 0.0
  %693 = vmatpush1.msra.mxu0 0.0
  %694 = vmatprep.subr.mxu0 0.0
  %695 = vmatpush1.msra.mxu0 0.0
  %696 = vmatprep.mubr.f32.mxu0 0.0
  %697 = vmatmul.mubr.f32.gmra.mrb[0].mxu0 %v630
  %v698 = vpop.f32.mrb[0].mxu0
  %v699 = vadd.f32 0.0, %v698
  %v700 = vpop.f32.mrb[0].mxu0
  %v701 = vadd.f32 0.0, %v700
  %702 = vdwg.mxu0
  %703 = vmatprep.subr.mxu0 0.0
  %704 = vmatpush1.msra.mxu0 %v47
  %705 = vmatprep.subr.mxu0 0.0
  %706 = vmatpush1.msra.mxu0 %v50
  %707 = vmatprep.subr.mxu0 0.0
  %708 = vmatpush1.msra.mxu0 %v53
  %709 = vmatprep.subr.mxu0 0.0
  %710 = vmatpush1.msra.mxu0 %v56
  %711 = vmatprep.subr.mxu0 0.0
  %712 = vmatpush1.msra.mxu0 0.0
  %713 = vmatprep.subr.mxu0 0.0
  %714 = vmatpush1.msra.mxu0 0.0
  %715 = vmatprep.subr.mxu0 0.0
  %716 = vmatpush1.msra.mxu0 0.0
  %717 = vmatprep.subr.mxu0 0.0
  %718 = vmatpush1.msra.mxu0 0.0
  %719 = vmatprep.subr.mxu0 0.0
  %720 = vmatpush1.msra.mxu0 0.0
  %721 = vmatprep.subr.mxu0 0.0
  %722 = vmatpush1.msra.mxu0 0.0
  %723 = vmatprep.subr.mxu0 0.0
  %724 = vmatpush1.msra.mxu0 0.0
  %725 = vmatprep.subr.mxu0 0.0
  %726 = vmatpush1.msra.mxu0 0.0
  %727 = vmatprep.subr.mxu0 0.0
  %728 = vmatpush1.msra.mxu0 0.0
  %729 = vmatprep.subr.mxu0 0.0
  %730 = vmatpush1.msra.mxu0 0.0
  %731 = vmatprep.subr.mxu0 0.0
  %732 = vmatpush1.msra.mxu0 0.0
  %733 = vmatprep.subr.mxu0 0.0
  %734 = vmatpush1.msra.mxu0 0.0
  %735 = vmatprep.subr.mxu0 0.0
  %736 = vmatpush1.msra.mxu0 0.0
  %737 = vmatprep.subr.mxu0 0.0
  %738 = vmatpush1.msra.mxu0 0.0
  %739 = vmatprep.subr.mxu0 0.0
  %740 = vmatpush1.msra.mxu0 0.0
  %741 = vmatprep.subr.mxu0 0.0
  %742 = vmatpush1.msra.mxu0 0.0
  %743 = vmatprep.subr.mxu0 0.0
  %744 = vmatpush1.msra.mxu0 0.0
  %745 = vmatprep.subr.mxu0 0.0
  %746 = vmatpush1.msra.mxu0 0.0
  %747 = vmatprep.subr.mxu0 0.0
  %748 = vmatpush1.msra.mxu0 0.0
  %749 = vmatprep.subr.mxu0 0.0
  %750 = vmatpush1.msra.mxu0 0.0
  %751 = vmatprep.subr.mxu0 0.0
  %752 = vmatpush1.msra.mxu0 0.0
  %753 = vmatprep.subr.mxu0 0.0
  %754 = vmatpush1.msra.mxu0 0.0
  %755 = vmatprep.subr.mxu0 0.0
  %756 = vmatpush1.msra.mxu0 0.0
  %757 = vmatprep.subr.mxu0 0.0
  %758 = vmatpush1.msra.mxu0 0.0
  %759 = vmatprep.subr.mxu0 0.0
  %760 = vmatpush1.msra.mxu0 0.0
  %761 = vmatprep.subr.mxu0 0.0
  %762 = vmatpush1.msra.mxu0 0.0
  %763 = vmatprep.subr.mxu0 0.0
  %764 = vmatpush1.msra.mxu0 0.0
  %765 = vmatprep.subr.mxu0 0.0
  %766 = vmatpush1.msra.mxu0 0.0
  %767 = vmatprep.mubr.f32.mxu0 0.0
  %768 = vmatmul.mubr.f32.gmra.mrb[0].mxu0 %v630
  %v769 = vpop.f32.mrb[0].mxu0
  %v770 = vadd.f32 0.0, %v769
  %v771 = vpop.f32.mrb[0].mxu0
  %772 = vdwg.mxu0
  %v773 = vadd.f32 %v624, %v699
  %v774 = vadd.f32 %v625, %v701
  %v775 = vadd.f32 %v626, %v770
  %v776 = vmax.f32 %v773, 0.0
  %v777 = vmax.f32 %v774, 0.0
  %v778 = vmax.f32 %v775, 0.0
  %779 = vst [vmem:[#allocation4 + $0x18] sm:$0xff] %v776
  %780 = vst [vmem:[#allocation4 + $0x20] sm:$0xff] %v777
  %781 = vst [vmem:[#allocation4 + $0x28] sm:$0xff] %v778
  %782 = vmatprep.subr.mxu0 0.0
  %783 = vmatpush1.msra.mxu0 %v57
  %784 = vmatprep.subr.mxu0 0.0
  %785 = vmatpush1.msra.mxu0 %v58
  %786 = vmatprep.subr.mxu0 0.0
  %787 = vmatpush1.msra.mxu0 %v59
  %788 = vmatprep.subr.mxu0 0.0
  %789 = vmatpush1.msra.mxu0 %v60
  %790 = vmatprep.subr.mxu0 0.0
  %791 = vmatpush1.msra.mxu0 %v61
  %792 = vmatprep.subr.mxu0 0.0
  %793 = vmatpush1.msra.mxu0 %v62
  %794 = vmatprep.subr.mxu0 0.0
  %795 = vmatpush1.msra.mxu0 %v63
  %796 = vmatprep.subr.mxu0 0.0
  %797 = vmatpush1.msra.mxu0 %v64
  %798 = vmatprep.subr.mxu0 0.0
  %799 = vmatpush1.msra.mxu0 %v65
  %800 = vmatprep.subr.mxu0 0.0
  %801 = vmatpush1.msra.mxu0 %v66
  %802 = vmatprep.subr.mxu0 0.0
  %803 = vmatpush1.msra.mxu0 %v67
  %804 = vmatprep.subr.mxu0 0.0
  %805 = vmatpush1.msra.mxu0 %v68
  %806 = vmatprep.subr.mxu0 0.0
  %807 = vmatpush1.msra.mxu0 %v69
  %808 = vmatprep.subr.mxu0 0.0
  %809 = vmatpush1.msra.mxu0 %v70
  %810 = vmatprep.subr.mxu0 0.0
  %811 = vmatpush1.msra.mxu0 %v71
  %812 = vmatprep.subr.mxu0 0.0
  %813 = vmatpush1.msra.mxu0 %v72
  %814 = vmatprep.subr.mxu0 0.0
  %815 = vmatpush1.msra.mxu0 %v73
  %816 = vmatprep.subr.mxu0 0.0
  %817 = vmatpush1.msra.mxu0 %v74
  %818 = vmatprep.subr.mxu0 0.0
  %819 = vmatpush1.msra.mxu0 %v75
  %820 = vmatprep.subr.mxu0 0.0
  %821 = vmatpush1.msra.mxu0 %v76
  %822 = vmatprep.subr.mxu0 0.0
  %823 = vmatpush1.msra.mxu0 %v77
  %824 = vmatprep.subr.mxu0 0.0
  %825 = vmatpush1.msra.mxu0 %v78
  %826 = vmatprep.subr.mxu0 0.0
  %827 = vmatpush1.msra.mxu0 %v79
  %828 = vmatprep.subr.mxu0 0.0
  %829 = vmatpush1.msra.mxu0 %v80
  %830 = vmatprep.subr.mxu0 0.0
  %831 = vmatpush1.msra.mxu0 %v81
  %832 = vmatprep.subr.mxu0 0.0
  %833 = vmatpush1.msra.mxu0 %v82
  %834 = vmatprep.subr.mxu0 0.0
  %835 = vmatpush1.msra.mxu0 %v83
  %836 = vmatprep.subr.mxu0 0.0
  %837 = vmatpush1.msra.mxu0 %v84
  %838 = vmatprep.subr.mxu0 0.0
  %839 = vmatpush1.msra.mxu0 %v85
  %840 = vmatprep.subr.mxu0 0.0
  %841 = vmatpush1.msra.mxu0 %v86
  %842 = vmatprep.subr.mxu0 0.0
  %843 = vmatpush1.msra.mxu0 %v87
  %844 = vmatprep.subr.mxu0 0.0
  %845 = vmatpush1.msra.mxu0 %v88
  %846 = vmatprep.mubr.f32.mxu0 %v777
  %847 = vmatmul.mubr.f32.gmra.mrb[0].mxu0 %v776
  %v848 = vpop.f32.mrb[0].mxu0
  %v849 = vadd.f32 %v117, %v848
  %v850 = vpop.f32.mrb[0].mxu0
  %851 = vdwg.mxu0
  %852 = vmatprep.subr.mxu0 0.0
  %853 = vmatpush1.msra.mxu0 %v89
  %854 = vmatprep.subr.mxu0 0.0
  %855 = vmatpush1.msra.mxu0 %v90
  %856 = vmatprep.subr.mxu0 0.0
  %857 = vmatpush1.msra.mxu0 %v91
  %858 = vmatprep.subr.mxu0 0.0
  %859 = vmatpush1.msra.mxu0 %v92
  %860 = vmatprep.subr.mxu0 0.0
  %861 = vmatpush1.msra.mxu0 %v93
  %862 = vmatprep.subr.mxu0 0.0
  %863 = vmatpush1.msra.mxu0 %v94
  %864 = vmatprep.subr.mxu0 0.0
  %865 = vmatpush1.msra.mxu0 %v95
  %866 = vmatprep.subr.mxu0 0.0
  %867 = vmatpush1.msra.mxu0 %v96
  %868 = vmatprep.subr.mxu0 0.0
  %869 = vmatpush1.msra.mxu0 %v97
  %870 = vmatprep.subr.mxu0 0.0
  %871 = vmatpush1.msra.mxu0 %v98
  %872 = vmatprep.subr.mxu0 0.0
  %873 = vmatpush1.msra.mxu0 %v99
  %874 = vmatprep.subr.mxu0 0.0
  %875 = vmatpush1.msra.mxu0 %v100
  %876 = vmatprep.subr.mxu0 0.0
  %877 = vmatpush1.msra.mxu0 %v101
  %878 = vmatprep.subr.mxu0 0.0
  %879 = vmatpush1.msra.mxu0 %v102
  %880 = vmatprep.subr.mxu0 0.0
  %881 = vmatpush1.msra.mxu0 %v103
  %882 = vmatprep.subr.mxu0 0.0
  %883 = vmatpush1.msra.mxu0 %v104
  %884 = vmatprep.subr.mxu0 0.0
  %885 = vmatpush1.msra.mxu0 0.0
  %886 = vmatprep.subr.mxu0 0.0
  %887 = vmatpush1.msra.mxu0 0.0
  %888 = vmatprep.subr.mxu0 0.0
  %889 = vmatpush1.msra.mxu0 0.0
  %890 = vmatprep.subr.mxu0 0.0
  %891 = vmatpush1.msra.mxu0 0.0
  %892 = vmatprep.subr.mxu0 0.0
  %893 = vmatpush1.msra.mxu0 0.0
  %894 = vmatprep.subr.mxu0 0.0
  %895 = vmatpush1.msra.mxu0 0.0
  %896 = vmatprep.subr.mxu0 0.0
  %897 = vmatpush1.msra.mxu0 0.0
  %898 = vmatprep.subr.mxu0 0.0
  %899 = vmatpush1.msra.mxu0 0.0
  %900 = vmatprep.subr.mxu0 0.0
  %901 = vmatpush1.msra.mxu0 0.0
  %902 = vmatprep.subr.mxu0 0.0
  %903 = vmatpush1.msra.mxu0 0.0
  %904 = vmatprep.subr.mxu0 0.0
  %905 = vmatpush1.msra.mxu0 0.0
  %906 = vmatprep.subr.mxu0 0.0
  %907 = vmatpush1.msra.mxu0 0.0
  %908 = vmatprep.subr.mxu0 0.0
  %909 = vmatpush1.msra.mxu0 0.0
  %910 = vmatprep.subr.mxu0 0.0
  %911 = vmatpush1.msra.mxu0 0.0
  %912 = vmatprep.subr.mxu0 0.0
  %913 = vmatpush1.msra.mxu0 0.0
  %914 = vmatprep.subr.mxu0 0.0
  %915 = vmatpush1.msra.mxu0 0.0
  %916 = vmatprep.mubr.f32.mxu0 0.0
  %917 = vmatmul.mubr.f32.gmra.mrb[0].mxu0 %v778
  %v918 = vpop.f32.mrb[0].mxu0
  %v919 = vadd.f32 %v849, %v918
  %v920 = vpop.f32.mrb[0].mxu0
  %921 = vdwg.mxu0
  %v922 = vmax.f32 %v919, 0.0
  %923 = vrot.lane.b32.xlu0 %v623, 96
  %v924 = vpop.permute.xlu0 %923
  %v926 = vsel %vm229, %v922, %v924
  %v928 = vsel %vm121, %v926, 0
  %930 = vmatprep.subr.mxu0 0.0
  %931 = vmatpush1.msra.mxu0 %v37
  %932 = vmatprep.subr.mxu0 0.0
  %933 = vmatpush1.msra.mxu0 %v38
  %934 = vmatprep.subr.mxu0 0.0
  %935 = vmatpush1.msra.mxu0 %v39
  %936 = vmatprep.subr.mxu0 0.0
  %937 = vmatpush1.msra.mxu0 %v40
  %938 = vmatprep.subr.mxu0 0.0
  %939 = vmatpush1.msra.mxu0 %v41
  %940 = vmatprep.subr.mxu0 0.0
  %941 = vmatpush1.msra.mxu0 %v42
  %942 = vmatprep.subr.mxu0 0.0
  %943 = vmatpush1.msra.mxu0 %v43
  %944 = vmatprep.subr.mxu0 0.0
  %945 = vmatpush1.msra.mxu0 %v44
  %946 = vmatprep.subr.mxu0 0.0
  %947 = vmatpush1.msra.mxu0 0.0
  %948 = vmatprep.subr.mxu0 0.0
  %949 = vmatpush1.msra.mxu0 0.0
  %950 = vmatprep.subr.mxu0 0.0
  %951 = vmatpush1.msra.mxu0 0.0
  %952 = vmatprep.subr.mxu0 0.0
  %953 = vmatpush1.msra.mxu0 0.0
  %954 = vmatprep.subr.mxu0 0.0
  %955 = vmatpush1.msra.mxu0 0.0
  %956 = vmatprep.subr.mxu0 0.0
  %957 = vmatpush1.msra.mxu0 0.0
  %958 = vmatprep.subr.mxu0 0.0
  %959 = vmatpush1.msra.mxu0 0.0
  %960 = vmatprep.subr.mxu0 0.0
  %961 = vmatpush1.msra.mxu0 0.0
  %962 = vmatprep.subr.mxu0 0.0
  %963 = vmatpush1.msra.mxu0 0.0
  %964 = vmatprep.subr.mxu0 0.0
  %965 = vmatpush1.msra.mxu0 0.0
  %966 = vmatprep.subr.mxu0 0.0
  %967 = vmatpush1.msra.mxu0 0.0
  %968 = vmatprep.subr.mxu0 0.0
  %969 = vmatpush1.msra.mxu0 0.0
  %970 = vmatprep.subr.mxu0 0.0
  %971 = vmatpush1.msra.mxu0 0.0
  %972 = vmatprep.subr.mxu0 0.0
  %973 = vmatpush1.msra.mxu0 0.0
  %974 = vmatprep.subr.mxu0 0.0
  %975 = vmatpush1.msra.mxu0 0.0
  %976 = vmatprep.subr.mxu0 0.0
  %977 = vmatpush1.msra.mxu0 0.0
  %978 = vmatprep.subr.mxu0 0.0
  %979 = vmatpush1.msra.mxu0 0.0
  %980 = vmatprep.subr.mxu0 0.0
  %981 = vmatpush1.msra.mxu0 0.0
  %982 = vmatprep.subr.mxu0 0.0
  %983 = vmatpush1.msra.mxu0 0.0
  %984 = vmatprep.subr.mxu0 0.0
  %985 = vmatpush1.msra.mxu0 0.0
  %986 = vmatprep.subr.mxu0 0.0
  %987 = vmatpush1.msra.mxu0 0.0
  %988 = vmatprep.subr.mxu0 0.0
  %989 = vmatpush1.msra.mxu0 0.0
  %990 = vmatprep.subr.mxu0 0.0
  %991 = vmatpush1.msra.mxu0 0.0
  %992 = vmatprep.subr.mxu0 0.0
  %993 = vmatpush1.msra.mxu0 0.0
  %994 = vmatprep.mubr.f32.mxu0 0.0
  %995 = vmatmul.mubr.f32.gmra.mrb[0].mxu0 %v928
  %v996 = vpop.f32.mrb[0].mxu0
  %v997 = vadd.f32 %v110, %v996
  %v998 = vpop.f32.mrb[0].mxu0
  %999 = vdwg.mxu0
  %v1000 = vxor.u32 %v997, 2147483648
  %v1001 = vmul.f32 %v1000, 1.442695
  %v1002 = vpow.pop %v1001
  %v1003 = vadd.f32 %v1002, 1.0
  %v1004 = vrcp.pop %v1003
  %v1005 = vmul.f32 1.0, %v1004
  %v1006 = vtanh.pop %v997
  %v1007 = vmul.f32 %v1005, %v617
  %1009 = vrot.lane.b32.xlu0 %v1006, 32
  %v1010 = vpop.permute.xlu0 %1009
  %v1012 = vmul.f32 %v1005, %v1010
  %1014 = vrot.lane.b32.xlu0 %v1012, 32
  %v1015 = vpop.permute.xlu0 %1014
  %v1017 = vadd.f32 %v1007, %v1015
  %v1018 = vtanh.pop %v1017
  %1020 = vrot.lane.b32.xlu0 %v1018, 32
  %v1021 = vpop.permute.xlu0 %1020
  %v1023 = vmul.f32 %v1005, %v1021
  %v1024 = vld [vmem:[%s0 + $0x30] sm:$0xff]
  %v1025 = vld [vmem:[%s0 + $0x38] sm:$0xff]
  %v1026 = vld [vmem:[%s0 + $0x40] sm:$0xff]
  %1028 = vrot.lane.b32.xlu0 %v1023, 64
  %v1029 = vpop.permute.xlu0 %1028
  %v1030 = vsel %vm229, %v1029, 0
  %1032 = vmatprep.subr.mxu0 %v46
  %1033 = vmatpush1.msra.mxu0 %v45
  %1034 = vmatprep.subr.mxu0 %v49
  %1035 = vmatpush1.msra.mxu0 %v48
  %1036 = vmatprep.subr.mxu0 %v52
  %1037 = vmatpush1.msra.mxu0 %v51
  %1038 = vmatprep.subr.mxu0 %v55
  %1039 = vmatpush1.msra.mxu0 %v54
  %1040 = vmatprep.subr.mxu0 0.0
  %1041 = vmatpush1.msra.mxu0 0.0
  %1042 = vmatprep.subr.mxu0 0.0
  %1043 = vmatpush1.msra.mxu0 0.0
  %1044 = vmatprep.subr.mxu0 0.0
  %1045 = vmatpush1.msra.mxu0 0.0
  %1046 = vmatprep.subr.mxu0 0.0
  %1047 = vmatpush1.msra.mxu0 0.0
  %1048 = vmatprep.subr.mxu0 0.0
  %1049 = vmatpush1.msra.mxu0 0.0
  %1050 = vmatprep.subr.mxu0 0.0
  %1051 = vmatpush1.msra.mxu0 0.0
  %1052 = vmatprep.subr.mxu0 0.0
  %1053 = vmatpush1.msra.mxu0 0.0
  %1054 = vmatprep.subr.mxu0 0.0
  %1055 = vmatpush1.msra.mxu0 0.0
  %1056 = vmatprep.subr.mxu0 0.0
  %1057 = vmatpush1.msra.mxu0 0.0
  %1058 = vmatprep.subr.mxu0 0.0
  %1059 = vmatpush1.msra.mxu0 0.0
  %1060 = vmatprep.subr.mxu0 0.0
  %1061 = vmatpush1.msra.mxu0 0.0
  %1062 = vmatprep.subr.mxu0 0.0
  %1063 = vmatpush1.msra.mxu0 0.0
  %1064 = vmatprep.subr.mxu0 0.0
  %1065 = vmatpush1.msra.mxu0 0.0
  %1066 = vmatprep.subr.mxu0 0.0
  %1067 = vmatpush1.msra.mxu0 0.0
  %1068 = vmatprep.subr.mxu0 0.0
  %1069 = vmatpush1.msra.mxu0 0.0
  %1070 = vmatprep.subr.mxu0 0.0
  %1071 = vmatpush1.msra.mxu0 0.0
  %1072 = vmatprep.subr.mxu0 0.0
  %1073 = vmatpush1.msra.mxu0 0.0
  %1074 = vmatprep.subr.mxu0 0.0
  %1075 = vmatpush1.msra.mxu0 0.0
  %1076 = vmatprep.subr.mxu0 0.0
  %1077 = vmatpush1.msra.mxu0 0.0
  %1078 = vmatprep.subr.mxu0 0.0
  %1079 = vmatpush1.msra.mxu0 0.0
  %1080 = vmatprep.subr.mxu0 0.0
  %1081 = vmatpush1.msra.mxu0 0.0
  %1082 = vmatprep.subr.mxu0 0.0
  %1083 = vmatpush1.msra.mxu0 0.0
  %1084 = vmatprep.subr.mxu0 0.0
  %1085 = vmatpush1.msra.mxu0 0.0
  %1086 = vmatprep.subr.mxu0 0.0
  %1087 = vmatpush1.msra.mxu0 0.0
  %1088 = vmatprep.subr.mxu0 0.0
  %1089 = vmatpush1.msra.mxu0 0.0
  %1090 = vmatprep.subr.mxu0 0.0
  %1091 = vmatpush1.msra.mxu0 0.0
  %1092 = vmatprep.subr.mxu0 0.0
  %1093 = vmatpush1.msra.mxu0 0.0
  %1094 = vmatprep.subr.mxu0 0.0
  %1095 = vmatpush1.msra.mxu0 0.0
  %1096 = vmatprep.mubr.f32.mxu0 0.0
  %1097 = vmatmul.mubr.f32.gmra.mrb[0].mxu0 %v1030
  %v1098 = vpop.f32.mrb[0].mxu0
  %v1099 = vadd.f32 0.0, %v1098
  %v1100 = vpop.f32.mrb[0].mxu0
  %v1101 = vadd.f32 0.0, %v1100
  %1102 = vdwg.mxu0
  %1103 = vmatprep.subr.mxu0 0.0
  %1104 = vmatpush1.msra.mxu0 %v47
  %1105 = vmatprep.subr.mxu0 0.0
  %1106 = vmatpush1.msra.mxu0 %v50
  %1107 = vmatprep.subr.mxu0 0.0
  %1108 = vmatpush1.msra.mxu0 %v53
  %1109 = vmatprep.subr.mxu0 0.0
  %1110 = vmatpush1.msra.mxu0 %v56
  %1111 = vmatprep.subr.mxu0 0.0
  %1112 = vmatpush1.msra.mxu0 0.0
  %1113 = vmatprep.subr.mxu0 0.0
  %1114 = vmatpush1.msra.mxu0 0.0
  %1115 = vmatprep.subr.mxu0 0.0
  %1116 = vmatpush1.msra.mxu0 0.0
  %1117 = vmatprep.subr.mxu0 0.0
  %1118 = vmatpush1.msra.mxu0 0.0
  %1119 = vmatprep.subr.mxu0 0.0
  %1120 = vmatpush1.msra.mxu0 0.0
  %1121 = vmatprep.subr.mxu0 0.0
  %1122 = vmatpush1.msra.mxu0 0.0
  %1123 = vmatprep.subr.mxu0 0.0
  %1124 = vmatpush1.msra.mxu0 0.0
  %1125 = vmatprep.subr.mxu0 0.0
  %1126 = vmatpush1.msra.mxu0 0.0
  %1127 = vmatprep.subr.mxu0 0.0
  %1128 = vmatpush1.msra.mxu0 0.0
  %1129 = vmatprep.subr.mxu0 0.0
  %1130 = vmatpush1.msra.mxu0 0.0
  %1131 = vmatprep.subr.mxu0 0.0
  %1132 = vmatpush1.msra.mxu0 0.0
  %1133 = vmatprep.subr.mxu0 0.0
  %1134 = vmatpush1.msra.mxu0 0.0
  %1135 = vmatprep.subr.mxu0 0.0
  %1136 = vmatpush1.msra.mxu0 0.0
  %1137 = vmatprep.subr.mxu0 0.0
  %1138 = vmatpush1.msra.mxu0 0.0
  %1139 = vmatprep.subr.mxu0 0.0
  %1140 = vmatpush1.msra.mxu0 0.0
  %1141 = vmatprep.subr.mxu0 0.0
  %1142 = vmatpush1.msra.mxu0 0.0
  %1143 = vmatprep.subr.mxu0 0.0
  %1144 = vmatpush1.msra.mxu0 0.0
  %1145 = vmatprep.subr.mxu0 0.0
  %1146 = vmatpush1.msra.mxu0 0.0
  %1147 = vmatprep.subr.mxu0 0.0
  %1148 = vmatpush1.msra.mxu0 0.0
  %1149 = vmatprep.subr.mxu0 0.0
  %1150 = vmatpush1.msra.mxu0 0.0
  %1151 = vmatprep.subr.mxu0 0.0
  %1152 = vmatpush1.msra.mxu0 0.0
  %1153 = vmatprep.subr.mxu0 0.0
  %1154 = vmatpush1.msra.mxu0 0.0
  %1155 = vmatprep.subr.mxu0 0.0
  %1156 = vmatpush1.msra.mxu0 0.0
  %1157 = vmatprep.subr.mxu0 0.0
  %1158 = vmatpush1.msra.mxu0 0.0
  %1159 = vmatprep.subr.mxu0 0.0
  %1160 = vmatpush1.msra.mxu0 0.0
  %1161 = vmatprep.subr.mxu0 0.0
  %1162 = vmatpush1.msra.mxu0 0.0
  %1163 = vmatprep.subr.mxu0 0.0
  %1164 = vmatpush1.msra.mxu0 0.0
  %1165 = vmatprep.subr.mxu0 0.0
  %1166 = vmatpush1.msra.mxu0 0.0
  %1167 = vmatprep.mubr.f32.mxu0 0.0
  %1168 = vmatmul.mubr.f32.gmra.mrb[0].mxu0 %v1030
  %v1169 = vpop.f32.mrb[0].mxu0
  %v1170 = vadd.f32 0.0, %v1169
  %v1171 = vpop.f32.mrb[0].mxu0
  %1172 = vdwg.mxu0
  %v1173 = vadd.f32 %v1024, %v1099
  %v1174 = vadd.f32 %v1025, %v1101
  %v1175 = vadd.f32 %v1026, %v1170
  %v1176 = vmax.f32 %v1173, 0.0
  %v1177 = vmax.f32 %v1174, 0.0
  %v1178 = vmax.f32 %v1175, 0.0
  %1179 = vst [vmem:[#allocation4 + $0x30] sm:$0xff] %v1176
  %1180 = vst [vmem:[#allocation4 + $0x38] sm:$0xff] %v1177
  %1181 = vst [vmem:[#allocation4 + $0x40] sm:$0xff] %v1178
  %1182 = vmatprep.subr.mxu0 0.0
  %1183 = vmatpush1.msra.mxu0 %v57
  %1184 = vmatprep.subr.mxu0 0.0
  %1185 = vmatpush1.msra.mxu0 %v58
  %1186 = vmatprep.subr.mxu0 0.0
  %1187 = vmatpush1.msra.mxu0 %v59
  %1188 = vmatprep.subr.mxu0 0.0
  %1189 = vmatpush1.msra.mxu0 %v60
  %1190 = vmatprep.subr.mxu0 0.0
  %1191 = vmatpush1.msra.mxu0 %v61
  %1192 = vmatprep.subr.mxu0 0.0
  %1193 = vmatpush1.msra.mxu0 %v62
  %1194 = vmatprep.subr.mxu0 0.0
  %1195 = vmatpush1.msra.mxu0 %v63
  %1196 = vmatprep.subr.mxu0 0.0
  %1197 = vmatpush1.msra.mxu0 %v64
  %1198 = vmatprep.subr.mxu0 0.0
  %1199 = vmatpush1.msra.mxu0 %v65
  %1200 = vmatprep.subr.mxu0 0.0
  %1201 = vmatpush1.msra.mxu0 %v66
  %1202 = vmatprep.subr.mxu0 0.0
  %1203 = vmatpush1.msra.mxu0 %v67
  %1204 = vmatprep.subr.mxu0 0.0
  %1205 = vmatpush1.msra.mxu0 %v68
  %1206 = vmatprep.subr.mxu0 0.0
  %1207 = vmatpush1.msra.mxu0 %v69
  %1208 = vmatprep.subr.mxu0 0.0
  %1209 = vmatpush1.msra.mxu0 %v70
  %1210 = vmatprep.subr.mxu0 0.0
  %1211 = vmatpush1.msra.mxu0 %v71
  %1212 = vmatprep.subr.mxu0 0.0
  %1213 = vmatpush1.msra.mxu0 %v72
  %1214 = vmatprep.subr.mxu0 0.0
  %1215 = vmatpush1.msra.mxu0 %v73
  %1216 = vmatprep.subr.mxu0 0.0
  %1217 = vmatpush1.msra.mxu0 %v74
  %1218 = vmatprep.subr.mxu0 0.0
  %1219 = vmatpush1.msra.mxu0 %v75
  %1220 = vmatprep.subr.mxu0 0.0
  %1221 = vmatpush1.msra.mxu0 %v76
  %1222 = vmatprep.subr.mxu0 0.0
  %1223 = vmatpush1.msra.mxu0 %v77
  %1224 = vmatprep.subr.mxu0 0.0
  %1225 = vmatpush1.msra.mxu0 %v78
  %1226 = vmatprep.subr.mxu0 0.0
  %1227 = vmatpush1.msra.mxu0 %v79
  %1228 = vmatprep.subr.mxu0 0.0
  %1229 = vmatpush1.msra.mxu0 %v80
  %1230 = vmatprep.subr.mxu0 0.0
  %1231 = vmatpush1.msra.mxu0 %v81
  %1232 = vmatprep.subr.mxu0 0.0
  %1233 = vmatpush1.msra.mxu0 %v82
  %1234 = vmatprep.subr.mxu0 0.0
  %1235 = vmatpush1.msra.mxu0 %v83
  %1236 = vmatprep.subr.mxu0 0.0
  %1237 = vmatpush1.msra.mxu0 %v84
  %1238 = vmatprep.subr.mxu0 0.0
  %1239 = vmatpush1.msra.mxu0 %v85
  %1240 = vmatprep.subr.mxu0 0.0
  %1241 = vmatpush1.msra.mxu0 %v86
  %1242 = vmatprep.subr.mxu0 0.0
  %1243 = vmatpush1.msra.mxu0 %v87
  %1244 = vmatprep.subr.mxu0 0.0
  %1245 = vmatpush1.msra.mxu0 %v88
  %1246 = vmatprep.mubr.f32.mxu0 %v1177
  %1247 = vmatmul.mubr.f32.gmra.mrb[0].mxu0 %v1176
  %v1248 = vpop.f32.mrb[0].mxu0
  %v1249 = vadd.f32 %v117, %v1248
  %v1250 = vpop.f32.mrb[0].mxu0
  %1251 = vdwg.mxu0
  %1252 = vmatprep.subr.mxu0 0.0
  %1253 = vmatpush1.msra.mxu0 %v89
  %1254 = vmatprep.subr.mxu0 0.0
  %1255 = vmatpush1.msra.mxu0 %v90
  %1256 = vmatprep.subr.mxu0 0.0
  %1257 = vmatpush1.msra.mxu0 %v91
  %1258 = vmatprep.subr.mxu0 0.0
  %1259 = vmatpush1.msra.mxu0 %v92
  %1260 = vmatprep.subr.mxu0 0.0
  %1261 = vmatpush1.msra.mxu0 %v93
  %1262 = vmatprep.subr.mxu0 0.0
  %1263 = vmatpush1.msra.mxu0 %v94
  %1264 = vmatprep.subr.mxu0 0.0
  %1265 = vmatpush1.msra.mxu0 %v95
  %1266 = vmatprep.subr.mxu0 0.0
  %1267 = vmatpush1.msra.mxu0 %v96
  %1268 = vmatprep.subr.mxu0 0.0
  %1269 = vmatpush1.msra.mxu0 %v97
  %1270 = vmatprep.subr.mxu0 0.0
  %1271 = vmatpush1.msra.mxu0 %v98
  %1272 = vmatprep.subr.mxu0 0.0
  %1273 = vmatpush1.msra.mxu0 %v99
  %1274 = vmatprep.subr.mxu0 0.0
  %1275 = vmatpush1.msra.mxu0 %v100
  %1276 = vmatprep.subr.mxu0 0.0
  %1277 = vmatpush1.msra.mxu0 %v101
  %1278 = vmatprep.subr.mxu0 0.0
  %1279 = vmatpush1.msra.mxu0 %v102
  %1280 = vmatprep.subr.mxu0 0.0
  %1281 = vmatpush1.msra.mxu0 %v103
  %1282 = vmatprep.subr.mxu0 0.0
  %1283 = vmatpush1.msra.mxu0 %v104
  %1284 = vmatprep.subr.mxu0 0.0
  %1285 = vmatpush1.msra.mxu0 0.0
  %1286 = vmatprep.subr.mxu0 0.0
  %1287 = vmatpush1.msra.mxu0 0.0
  %1288 = vmatprep.subr.mxu0 0.0
  %1289 = vmatpush1.msra.mxu0 0.0
  %1290 = vmatprep.subr.mxu0 0.0
  %1291 = vmatpush1.msra.mxu0 0.0
  %1292 = vmatprep.subr.mxu0 0.0
  %1293 = vmatpush1.msra.mxu0 0.0
  %1294 = vmatprep.subr.mxu0 0.0
  %1295 = vmatpush1.msra.mxu0 0.0
  %1296 = vmatprep.subr.mxu0 0.0
  %1297 = vmatpush1.msra.mxu0 0.0
  %1298 = vmatprep.subr.mxu0 0.0
  %1299 = vmatpush1.msra.mxu0 0.0
  %1300 = vmatprep.subr.mxu0 0.0
  %1301 = vmatpush1.msra.mxu0 0.0
  %1302 = vmatprep.subr.mxu0 0.0
  %1303 = vmatpush1.msra.mxu0 0.0
  %1304 = vmatprep.subr.mxu0 0.0
  %1305 = vmatpush1.msra.mxu0 0.0
  %1306 = vmatprep.subr.mxu0 0.0
  %1307 = vmatpush1.msra.mxu0 0.0
  %1308 = vmatprep.subr.mxu0 0.0
  %1309 = vmatpush1.msra.mxu0 0.0
  %1310 = vmatprep.subr.mxu0 0.0
  %1311 = vmatpush1.msra.mxu0 0.0
  %1312 = vmatprep.subr.mxu0 0.0
  %1313 = vmatpush1.msra.mxu0 0.0
  %1314 = vmatprep.subr.mxu0 0.0
  %1315 = vmatpush1.msra.mxu0 0.0
  %1316 = vmatprep.mubr.f32.mxu0 0.0
  %1317 = vmatmul.mubr.f32.gmra.mrb[0].mxu0 %v1178
  %v1318 = vpop.f32.mrb[0].mxu0
  %v1319 = vadd.f32 %v1249, %v1318
  %v1320 = vpop.f32.mrb[0].mxu0
  %1321 = vdwg.mxu0
  %v1322 = vmax.f32 %v1319, 0.0
  %1323 = vrot.lane.b32.xlu0 %v1023, 96
  %v1324 = vpop.permute.xlu0 %1323
  %v1326 = vsel %vm229, %v1322, %v1324
  %v1328 = vsel %vm121, %v1326, 0
  %1330 = vmatprep.subr.mxu0 0.0
  %1331 = vmatpush1.msra.mxu0 %v37
  %1332 = vmatprep.subr.mxu0 0.0
  %1333 = vmatpush1.msra.mxu0 %v38
  %1334 = vmatprep.subr.mxu0 0.0
  %1335 = vmatpush1.msra.mxu0 %v39
  %1336 = vmatprep.subr.mxu0 0.0
  %1337 = vmatpush1.msra.mxu0 %v40
  %1338 = vmatprep.subr.mxu0 0.0
  %1339 = vmatpush1.msra.mxu0 %v41
  %1340 = vmatprep.subr.mxu0 0.0
  %1341 = vmatpush1.msra.mxu0 %v42
  %1342 = vmatprep.subr.mxu0 0.0
  %1343 = vmatpush1.msra.mxu0 %v43
  %1344 = vmatprep.subr.mxu0 0.0
  %1345 = vmatpush1.msra.mxu0 %v44
  %1346 = vmatprep.subr.mxu0 0.0
  %1347 = vmatpush1.msra.mxu0 0.0
  %1348 = vmatprep.subr.mxu0 0.0
  %1349 = vmatpush1.msra.mxu0 0.0
  %1350 = vmatprep.subr.mxu0 0.0
  %1351 = vmatpush1.msra.mxu0 0.0
  %1352 = vmatprep.subr.mxu0 0.0
  %1353 = vmatpush1.msra.mxu0 0.0
  %1354 = vmatprep.subr.mxu0 0.0
  %1355 = vmatpush1.msra.mxu0 0.0
  %1356 = vmatprep.subr.mxu0 0.0
  %1357 = vmatpush1.msra.mxu0 0.0
  %1358 = vmatprep.subr.mxu0 0.0
  %1359 = vmatpush1.msra.mxu0 0.0
  %1360 = vmatprep.subr.mxu0 0.0
  %1361 = vmatpush1.msra.mxu0 0.0
  %1362 = vmatprep.subr.mxu0 0.0
  %1363 = vmatpush1.msra.mxu0 0.0
  %1364 = vmatprep.subr.mxu0 0.0
  %1365 = vmatpush1.msra.mxu0 0.0
  %1366 = vmatprep.subr.mxu0 0.0
  %1367 = vmatpush1.msra.mxu0 0.0
  %1368 = vmatprep.subr.mxu0 0.0
  %1369 = vmatpush1.msra.mxu0 0.0
  %1370 = vmatprep.subr.mxu0 0.0
  %1371 = vmatpush1.msra.mxu0 0.0
  %1372 = vmatprep.subr.mxu0 0.0
  %1373 = vmatpush1.msra.mxu0 0.0
  %1374 = vmatprep.subr.mxu0 0.0
  %1375 = vmatpush1.msra.mxu0 0.0
  %1376 = vmatprep.subr.mxu0 0.0
  %1377 = vmatpush1.msra.mxu0 0.0
  %1378 = vmatprep.subr.mxu0 0.0
  %1379 = vmatpush1.msra.mxu0 0.0
  %1380 = vmatprep.subr.mxu0 0.0
  %1381 = vmatpush1.msra.mxu0 0.0
  %1382 = vmatprep.subr.mxu0 0.0
  %1383 = vmatpush1.msra.mxu0 0.0
  %1384 = vmatprep.subr.mxu0 0.0
  %1385 = vmatpush1.msra.mxu0 0.0
  %1386 = vmatprep.subr.mxu0 0.0
  %1387 = vmatpush1.msra.mxu0 0.0
  %1388 = vmatprep.subr.mxu0 0.0
  %1389 = vmatpush1.msra.mxu0 0.0
  %1390 = vmatprep.subr.mxu0 0.0
  %1391 = vmatpush1.msra.mxu0 0.0
  %1392 = vmatprep.subr.mxu0 0.0
  %1393 = vmatpush1.msra.mxu0 0.0
  %1394 = vmatprep.mubr.f32.mxu0 0.0
  %1395 = vmatmul.mubr.f32.gmra.mrb[0].mxu0 %v1328
  %v1396 = vpop.f32.mrb[0].mxu0
  %v1397 = vadd.f32 %v110, %v1396
  %v1398 = vpop.f32.mrb[0].mxu0
  %1399 = vdwg.mxu0
  %v1400 = vxor.u32 %v1397, 2147483648
  %v1401 = vmul.f32 %v1400, 1.442695
  %v1402 = vpow.pop %v1401
  %v1403 = vadd.f32 %v1402, 1.0
  %v1404 = vrcp.pop %v1403
  %v1405 = vmul.f32 1.0, %v1404
  %v1406 = vtanh.pop %v1397
  %v1407 = vmul.f32 %v1405, %v1017
  %1409 = vrot.lane.b32.xlu0 %v1406, 32
  %v1410 = vpop.permute.xlu0 %1409
  %v1412 = vmul.f32 %v1405, %v1410
  %1414 = vrot.lane.b32.xlu0 %v1412, 32
  %v1415 = vpop.permute.xlu0 %1414
  %v1417 = vadd.f32 %v1407, %v1415
  %v1418 = vtanh.pop %v1417
  %1420 = vrot.lane.b32.xlu0 %v1418, 32
  %v1421 = vpop.permute.xlu0 %1420
  %v1423 = vmul.f32 %v1405, %v1421
  %v1424 = vld [vmem:[%s0 + $0x48] sm:$0xff]
  %v1425 = vld [vmem:[%s0 + $0x50] sm:$0xff]
  %v1426 = vld [vmem:[%s0 + $0x58] sm:$0xff]
  %1428 = vrot.lane.b32.xlu0 %v1423, 64
  %v1429 = vpop.permute.xlu0 %1428
  %v1430 = vsel %vm229, %v1429, 0
  %1432 = vmatprep.subr.mxu0 %v46
  %1433 = vmatpush1.msra.mxu0 %v45
  %1434 = vmatprep.subr.mxu0 %v49
  %1435 = vmatpush1.msra.mxu0 %v48
  %1436 = vmatprep.subr.mxu0 %v52
  %1437 = vmatpush1.msra.mxu0 %v51
  %1438 = vmatprep.subr.mxu0 %v55
  %1439 = vmatpush1.msra.mxu0 %v54
  %1440 = vmatprep.subr.mxu0 0.0
  %1441 = vmatpush1.msra.mxu0 0.0
  %1442 = vmatprep.subr.mxu0 0.0
  %1443 = vmatpush1.msra.mxu0 0.0
  %1444 = vmatprep.subr.mxu0 0.0
  %1445 = vmatpush1.msra.mxu0 0.0
  %1446 = vmatprep.subr.mxu0 0.0
  %1447 = vmatpush1.msra.mxu0 0.0
  %1448 = vmatprep.subr.mxu0 0.0
  %1449 = vmatpush1.msra.mxu0 0.0
  %1450 = vmatprep.subr.mxu0 0.0
  %1451 = vmatpush1.msra.mxu0 0.0
  %1452 = vmatprep.subr.mxu0 0.0
  %1453 = vmatpush1.msra.mxu0 0.0
  %1454 = vmatprep.subr.mxu0 0.0
  %1455 = vmatpush1.msra.mxu0 0.0
  %1456 = vmatprep.subr.mxu0 0.0
  %1457 = vmatpush1.msra.mxu0 0.0
  %1458 = vmatprep.subr.mxu0 0.0
  %1459 = vmatpush1.msra.mxu0 0.0
  %1460 = vmatprep.subr.mxu0 0.0
  %1461 = vmatpush1.msra.mxu0 0.0
  %1462 = vmatprep.subr.mxu0 0.0
  %1463 = vmatpush1.msra.mxu0 0.0
  %1464 = vmatprep.subr.mxu0 0.0
  %1465 = vmatpush1.msra.mxu0 0.0
  %1466 = vmatprep.subr.mxu0 0.0
  %1467 = vmatpush1.msra.mxu0 0.0
  %1468 = vmatprep.subr.mxu0 0.0
  %1469 = vmatpush1.msra.mxu0 0.0
  %1470 = vmatprep.subr.mxu0 0.0
  %1471 = vmatpush1.msra.mxu0 0.0
  %1472 = vmatprep.subr.mxu0 0.0
  %1473 = vmatpush1.msra.mxu0 0.0
  %1474 = vmatprep.subr.mxu0 0.0
  %1475 = vmatpush1.msra.mxu0 0.0
  %1476 = vmatprep.subr.mxu0 0.0
  %1477 = vmatpush1.msra.mxu0 0.0
  %1478 = vmatprep.subr.mxu0 0.0
  %1479 = vmatpush1.msra.mxu0 0.0
  %1480 = vmatprep.subr.mxu0 0.0
  %1481 = vmatpush1.msra.mxu0 0.0
  %1482 = vmatprep.subr.mxu0 0.0
  %1483 = vmatpush1.msra.mxu0 0.0
  %1484 = vmatprep.subr.mxu0 0.0
  %1485 = vmatpush1.msra.mxu0 0.0
  %1486 = vmatprep.subr.mxu0 0.0
  %1487 = vmatpush1.msra.mxu0 0.0
  %1488 = vmatprep.subr.mxu0 0.0
  %1489 = vmatpush1.msra.mxu0 0.0
  %1490 = vmatprep.subr.mxu0 0.0
  %1491 = vmatpush1.msra.mxu0 0.0
  %1492 = vmatprep.subr.mxu0 0.0
  %1493 = vmatpush1.msra.mxu0 0.0
  %1494 = vmatprep.subr.mxu0 0.0
  %1495 = vmatpush1.msra.mxu0 0.0
  %1496 = vmatprep.mubr.f32.mxu0 0.0
  %1497 = vmatmul.mubr.f32.gmra.mrb[0].mxu0 %v1430
  %v1498 = vpop.f32.mrb[0].mxu0
  %v1499 = vadd.f32 0.0, %v1498
  %v1500 = vpop.f32.mrb[0].mxu0
  %v1501 = vadd.f32 0.0, %v1500
  %1502 = vdwg.mxu0
  %1503 = vmatprep.subr.mxu0 0.0
  %1504 = vmatpush1.msra.mxu0 %v47
  %1505 = vmatprep.subr.mxu0 0.0
  %1506 = vmatpush1.msra.mxu0 %v50
  %1507 = vmatprep.subr.mxu0 0.0
  %1508 = vmatpush1.msra.mxu0 %v53
  %1509 = vmatprep.subr.mxu0 0.0
  %1510 = vmatpush1.msra.mxu0 %v56
  %1511 = vmatprep.subr.mxu0 0.0
  %1512 = vmatpush1.msra.mxu0 0.0
  %1513 = vmatprep.subr.mxu0 0.0
  %1514 = vmatpush1.msra.mxu0 0.0
  %1515 = vmatprep.subr.mxu0 0.0
  %1516 = vmatpush1.msra.mxu0 0.0
  %1517 = vmatprep.subr.mxu0 0.0
  %1518 = vmatpush1.msra.mxu0 0.0
  %1519 = vmatprep.subr.mxu0 0.0
  %1520 = vmatpush1.msra.mxu0 0.0
  %1521 = vmatprep.subr.mxu0 0.0
  %1522 = vmatpush1.msra.mxu0 0.0
  %1523 = vmatprep.subr.mxu0 0.0
  %1524 = vmatpush1.msra.mxu0 0.0
  %1525 = vmatprep.subr.mxu0 0.0
  %1526 = vmatpush1.msra.mxu0 0.0
  %1527 = vmatprep.subr.mxu0 0.0
  %1528 = vmatpush1.msra.mxu0 0.0
  %1529 = vmatprep.subr.mxu0 0.0
  %1530 = vmatpush1.msra.mxu0 0.0
  %1531 = vmatprep.subr.mxu0 0.0
  %1532 = vmatpush1.msra.mxu0 0.0
  %1533 = vmatprep.subr.mxu0 0.0
  %1534 = vmatpush1.msra.mxu0 0.0
  %1535 = vmatprep.subr.mxu0 0.0
  %1536 = vmatpush1.msra.mxu0 0.0
  %1537 = vmatprep.subr.mxu0 0.0
  %1538 = vmatpush1.msra.mxu0 0.0
  %1539 = vmatprep.subr.mxu0 0.0
  %1540 = vmatpush1.msra.mxu0 0.0
  %1541 = vmatprep.subr.mxu0 0.0
  %1542 = vmatpush1.msra.mxu0 0.0
  %1543 = vmatprep.subr.mxu0 0.0
  %1544 = vmatpush1.msra.mxu0 0.0
  %1545 = vmatprep.subr.mxu0 0.0
  %1546 = vmatpush1.msra.mxu0 0.0
  %1547 = vmatprep.subr.mxu0 0.0
  %1548 = vmatpush1.msra.mxu0 0.0
  %1549 = vmatprep.subr.mxu0 0.0
  %1550 = vmatpush1.msra.mxu0 0.0
  %1551 = vmatprep.subr.mxu0 0.0
  %1552 = vmatpush1.msra.mxu0 0.0
  %1553 = vmatprep.subr.mxu0 0.0
  %1554 = vmatpush1.msra.mxu0 0.0
  %1555 = vmatprep.subr.mxu0 0.0
  %1556 = vmatpush1.msra.mxu0 0.0
  %1557 = vmatprep.subr.mxu0 0.0
  %1558 = vmatpush1.msra.mxu0 0.0
  %1559 = vmatprep.subr.mxu0 0.0
  %1560 = vmatpush1.msra.mxu0 0.0
  %1561 = vmatprep.subr.mxu0 0.0
  %1562 = vmatpush1.msra.mxu0 0.0
  %1563 = vmatprep.subr.mxu0 0.0
  %1564 = vmatpush1.msra.mxu0 0.0
  %1565 = vmatprep.subr.mxu0 0.0
  %1566 = vmatpush1.msra.mxu0 0.0
  %1567 = vmatprep.mubr.f32.mxu0 0.0
  %1568 = vmatmul.mubr.f32.gmra.mrb[0].mxu0 %v1430
  %v1569 = vpop.f32.mrb[0].mxu0
  %v1570 = vadd.f32 0.0, %v1569
  %v1571 = vpop.f32.mrb[0].mxu0
  %1572 = vdwg.mxu0
  %v1573 = vadd.f32 %v1424, %v1499
  %v1574 = vadd.f32 %v1425, %v1501
  %v1575 = vadd.f32 %v1426, %v1570
  %v1576 = vmax.f32 %v1573, 0.0
  %v1577 = vmax.f32 %v1574, 0.0
  %v1578 = vmax.f32 %v1575, 0.0
  %1579 = vst [vmem:[#allocation4 + $0x48] sm:$0xff] %v1576
  %1580 = vst [vmem:[#allocation4 + $0x50] sm:$0xff] %v1577
  %1581 = vst [vmem:[#allocation4 + $0x58] sm:$0xff] %v1578
  %1582 = vmatprep.subr.mxu0 0.0
  %1583 = vmatpush1.msra.mxu0 %v57
  %1584 = vmatprep.subr.mxu0 0.0
  %1585 = vmatpush1.msra.mxu0 %v58
  %1586 = vmatprep.subr.mxu0 0.0
  %1587 = vmatpush1.msra.mxu0 %v59
  %1588 = vmatprep.subr.mxu0 0.0
  %1589 = vmatpush1.msra.mxu0 %v60
  %1590 = vmatprep.subr.mxu0 0.0
  %1591 = vmatpush1.msra.mxu0 %v61
  %1592 = vmatprep.subr.mxu0 0.0
  %1593 = vmatpush1.msra.mxu0 %v62
  %1594 = vmatprep.subr.mxu0 0.0
  %1595 = vmatpush1.msra.mxu0 %v63
  %1596 = vmatprep.subr.mxu0 0.0
  %1597 = vmatpush1.msra.mxu0 %v64
  %1598 = vmatprep.subr.mxu0 0.0
  %1599 = vmatpush1.msra.mxu0 %v65
  %1600 = vmatprep.subr.mxu0 0.0
  %1601 = vmatpush1.msra.mxu0 %v66
  %1602 = vmatprep.subr.mxu0 0.0
  %1603 = vmatpush1.msra.mxu0 %v67
  %1604 = vmatprep.subr.mxu0 0.0
  %1605 = vmatpush1.msra.mxu0 %v68
  %1606 = vmatprep.subr.mxu0 0.0
  %1607 = vmatpush1.msra.mxu0 %v69
  %1608 = vmatprep.subr.mxu0 0.0
  %1609 = vmatpush1.msra.mxu0 %v70
  %1610 = vmatprep.subr.mxu0 0.0
  %1611 = vmatpush1.msra.mxu0 %v71
  %1612 = vmatprep.subr.mxu0 0.0
  %1613 = vmatpush1.msra.mxu0 %v72
  %1614 = vmatprep.subr.mxu0 0.0
  %1615 = vmatpush1.msra.mxu0 %v73
  %1616 = vmatprep.subr.mxu0 0.0
  %1617 = vmatpush1.msra.mxu0 %v74
  %1618 = vmatprep.subr.mxu0 0.0
  %1619 = vmatpush1.msra.mxu0 %v75
  %1620 = vmatprep.subr.mxu0 0.0
  %1621 = vmatpush1.msra.mxu0 %v76
  %1622 = vmatprep.subr.mxu0 0.0
  %1623 = vmatpush1.msra.mxu0 %v77
  %1624 = vmatprep.subr.mxu0 0.0
  %1625 = vmatpush1.msra.mxu0 %v78
  %1626 = vmatprep.subr.mxu0 0.0
  %1627 = vmatpush1.msra.mxu0 %v79
  %1628 = vmatprep.subr.mxu0 0.0
  %1629 = vmatpush1.msra.mxu0 %v80
  %1630 = vmatprep.subr.mxu0 0.0
  %1631 = vmatpush1.msra.mxu0 %v81
  %1632 = vmatprep.subr.mxu0 0.0
  %1633 = vmatpush1.msra.mxu0 %v82
  %1634 = vmatprep.subr.mxu0 0.0
  %1635 = vmatpush1.msra.mxu0 %v83
  %1636 = vmatprep.subr.mxu0 0.0
  %1637 = vmatpush1.msra.mxu0 %v84
  %1638 = vmatprep.subr.mxu0 0.0
  %1639 = vmatpush1.msra.mxu0 %v85
  %1640 = vmatprep.subr.mxu0 0.0
  %1641 = vmatpush1.msra.mxu0 %v86
  %1642 = vmatprep.subr.mxu0 0.0
  %1643 = vmatpush1.msra.mxu0 %v87
  %1644 = vmatprep.subr.mxu0 0.0
  %1645 = vmatpush1.msra.mxu0 %v88
  %1646 = vmatprep.mubr.f32.mxu0 %v1577
  %1647 = vmatmul.mubr.f32.gmra.mrb[0].mxu0 %v1576
  %v1648 = vpop.f32.mrb[0].mxu0
  %v1649 = vadd.f32 %v117, %v1648
  %v1650 = vpop.f32.mrb[0].mxu0
  %1651 = vdwg.mxu0
  %1652 = vmatprep.subr.mxu0 0.0
  %1653 = vmatpush1.msra.mxu0 %v89
  %1654 = vmatprep.subr.mxu0 0.0
  %1655 = vmatpush1.msra.mxu0 %v90
  %1656 = vmatprep.subr.mxu0 0.0
  %1657 = vmatpush1.msra.mxu0 %v91
  %1658 = vmatprep.subr.mxu0 0.0
  %1659 = vmatpush1.msra.mxu0 %v92
  %1660 = vmatprep.subr.mxu0 0.0
  %1661 = vmatpush1.msra.mxu0 %v93
  %1662 = vmatprep.subr.mxu0 0.0
  %1663 = vmatpush1.msra.mxu0 %v94
  %1664 = vmatprep.subr.mxu0 0.0
  %1665 = vmatpush1.msra.mxu0 %v95
  %1666 = vmatprep.subr.mxu0 0.0
  %1667 = vmatpush1.msra.mxu0 %v96
  %1668 = vmatprep.subr.mxu0 0.0
  %1669 = vmatpush1.msra.mxu0 %v97
  %1670 = vmatprep.subr.mxu0 0.0
  %1671 = vmatpush1.msra.mxu0 %v98
  %1672 = vmatprep.subr.mxu0 0.0
  %1673 = vmatpush1.msra.mxu0 %v99
  %1674 = vmatprep.subr.mxu0 0.0
  %1675 = vmatpush1.msra.mxu0 %v100
  %1676 = vmatprep.subr.mxu0 0.0
  %1677 = vmatpush1.msra.mxu0 %v101
  %1678 = vmatprep.subr.mxu0 0.0
  %1679 = vmatpush1.msra.mxu0 %v102
  %1680 = vmatprep.subr.mxu0 0.0
  %1681 = vmatpush1.msra.mxu0 %v103
  %1682 = vmatprep.subr.mxu0 0.0
  %1683 = vmatpush1.msra.mxu0 %v104
  %1684 = vmatprep.subr.mxu0 0.0
  %1685 = vmatpush1.msra.mxu0 0.0
  %1686 = vmatprep.subr.mxu0 0.0
  %1687 = vmatpush1.msra.mxu0 0.0
  %1688 = vmatprep.subr.mxu0 0.0
  %1689 = vmatpush1.msra.mxu0 0.0
  %1690 = vmatprep.subr.mxu0 0.0
  %1691 = vmatpush1.msra.mxu0 0.0
  %1692 = vmatprep.subr.mxu0 0.0
  %1693 = vmatpush1.msra.mxu0 0.0
  %1694 = vmatprep.subr.mxu0 0.0
  %1695 = vmatpush1.msra.mxu0 0.0
  %1696 = vmatprep.subr.mxu0 0.0
  %1697 = vmatpush1.msra.mxu0 0.0
  %1698 = vmatprep.subr.mxu0 0.0
  %1699 = vmatpush1.msra.mxu0 0.0
  %1700 = vmatprep.subr.mxu0 0.0
  %1701 = vmatpush1.msra.mxu0 0.0
  %1702 = vmatprep.subr.mxu0 0.0
  %1703 = vmatpush1.msra.mxu0 0.0
  %1704 = vmatprep.subr.mxu0 0.0
  %1705 = vmatpush1.msra.mxu0 0.0
  %1706 = vmatprep.subr.mxu0 0.0
  %1707 = vmatpush1.msra.mxu0 0.0
  %1708 = vmatprep.subr.mxu0 0.0
  %1709 = vmatpush1.msra.mxu0 0.0
  %1710 = vmatprep.subr.mxu0 0.0
  %1711 = vmatpush1.msra.mxu0 0.0
  %1712 = vmatprep.subr.mxu0 0.0
  %1713 = vmatpush1.msra.mxu0 0.0
  %1714 = vmatprep.subr.mxu0 0.0
  %1715 = vmatpush1.msra.mxu0 0.0
  %1716 = vmatprep.mubr.f32.mxu0 0.0
  %1717 = vmatmul.mubr.f32.gmra.mrb[0].mxu0 %v1578
  %v1718 = vpop.f32.mrb[0].mxu0
  %v1719 = vadd.f32 %v1649, %v1718
  %v1720 = vpop.f32.mrb[0].mxu0
  %1721 = vdwg.mxu0
  %v1722 = vmax.f32 %v1719, 0.0
  %1723 = vrot.lane.b32.xlu0 %v1423, 96
  %v1724 = vpop.permute.xlu0 %1723
  %v1726 = vsel %vm229, %v1722, %v1724
  %v1728 = vsel %vm121, %v1726, 0
  %1730 = vmatprep.subr.mxu0 0.0
  %1731 = vmatpush1.msra.mxu0 %v37
  %1732 = vmatprep.subr.mxu0 0.0
  %1733 = vmatpush1.msra.mxu0 %v38
  %1734 = vmatprep.subr.mxu0 0.0
  %1735 = vmatpush1.msra.mxu0 %v39
  %1736 = vmatprep.subr.mxu0 0.0
  %1737 = vmatpush1.msra.mxu0 %v40
  %1738 = vmatprep.subr.mxu0 0.0
  %1739 = vmatpush1.msra.mxu0 %v41
  %1740 = vmatprep.subr.mxu0 0.0
  %1741 = vmatpush1.msra.mxu0 %v42
  %1742 = vmatprep.subr.mxu0 0.0
  %1743 = vmatpush1.msra.mxu0 %v43
  %1744 = vmatprep.subr.mxu0 0.0
  %1745 = vmatpush1.msra.mxu0 %v44
  %1746 = vmatprep.subr.mxu0 0.0
  %1747 = vmatpush1.msra.mxu0 0.0
  %1748 = vmatprep.subr.mxu0 0.0
  %1749 = vmatpush1.msra.mxu0 0.0
  %1750 = vmatprep.subr.mxu0 0.0
  %1751 = vmatpush1.msra.mxu0 0.0
  %1752 = vmatprep.subr.mxu0 0.0
  %1753 = vmatpush1.msra.mxu0 0.0
  %1754 = vmatprep.subr.mxu0 0.0
  %1755 = vmatpush1.msra.mxu0 0.0
  %1756 = vmatprep.subr.mxu0 0.0
  %1757 = vmatpush1.msra.mxu0 0.0
  %1758 = vmatprep.subr.mxu0 0.0
  %1759 = vmatpush1.msra.mxu0 0.0
  %1760 = vmatprep.subr.mxu0 0.0
  %1761 = vmatpush1.msra.mxu0 0.0
  %1762 = vmatprep.subr.mxu0 0.0
  %1763 = vmatpush1.msra.mxu0 0.0
  %1764 = vmatprep.subr.mxu0 0.0
  %1765 = vmatpush1.msra.mxu0 0.0
  %1766 = vmatprep.subr.mxu0 0.0
  %1767 = vmatpush1.msra.mxu0 0.0
  %1768 = vmatprep.subr.mxu0 0.0
  %1769 = vmatpush1.msra.mxu0 0.0
  %1770 = vmatprep.subr.mxu0 0.0
  %1771 = vmatpush1.msra.mxu0 0.0
  %1772 = vmatprep.subr.mxu0 0.0
  %1773 = vmatpush1.msra.mxu0 0.0
  %1774 = vmatprep.subr.mxu0 0.0
  %1775 = vmatpush1.msra.mxu0 0.0
  %1776 = vmatprep.subr.mxu0 0.0
  %1777 = vmatpush1.msra.mxu0 0.0
  %1778 = vmatprep.subr.mxu0 0.0
  %1779 = vmatpush1.msra.mxu0 0.0
  %1780 = vmatprep.subr.mxu0 0.0
  %1781 = vmatpush1.msra.mxu0 0.0
  %1782 = vmatprep.subr.mxu0 0.0
  %1783 = vmatpush1.msra.mxu0 0.0
  %1784 = vmatprep.subr.mxu0 0.0
  %1785 = vmatpush1.msra.mxu0 0.0
  %1786 = vmatprep.subr.mxu0 0.0
  %1787 = vmatpush1.msra.mxu0 0.0
  %1788 = vmatprep.subr.mxu0 0.0
  %1789 = vmatpush1.msra.mxu0 0.0
  %1790 = vmatprep.subr.mxu0 0.0
  %1791 = vmatpush1.msra.mxu0 0.0
  %1792 = vmatprep.subr.mxu0 0.0
  %1793 = vmatpush1.msra.mxu0 0.0
  %1794 = vmatprep.mubr.f32.mxu0 0.0
  %1795 = vmatmul.mubr.f32.gmra.mrb[0].mxu0 %v1728
  %v1796 = vpop.f32.mrb[0].mxu0
  %v1797 = vadd.f32 %v110, %v1796
  %v1798 = vpop.f32.mrb[0].mxu0
  %1799 = vdwg.mxu0
  %v1800 = vxor.u32 %v1797, 2147483648
  %v1801 = vmul.f32 %v1800, 1.442695
  %v1802 = vpow.pop %v1801
  %v1803 = vadd.f32 %v1802, 1.0
  %v1804 = vrcp.pop %v1803
  %v1805 = vmul.f32 1.0, %v1804
  %v1806 = vtanh.pop %v1797
  %v1807 = vmul.f32 %v1805, %v1417
  %1809 = vrot.lane.b32.xlu0 %v1806, 32
  %v1810 = vpop.permute.xlu0 %1809
  %v1812 = vmul.f32 %v1805, %v1810
  %1814 = vrot.lane.b32.xlu0 %v1812, 32
  %v1815 = vpop.permute.xlu0 %1814
  %v1817 = vadd.f32 %v1807, %v1815
  %v1818 = vtanh.pop %v1817
  %1820 = vrot.lane.b32.xlu0 %v1818, 32
  %v1821 = vpop.permute.xlu0 %1820
  %v1823 = vmul.f32 %v1805, %v1821
  %v1824 = vld [vmem:[%s0 + $0x60] sm:$0xff]
  %v1825 = vld [vmem:[%s0 + $0x68] sm:$0xff]
  %v1826 = vld [vmem:[%s0 + $0x70] sm:$0xff]
  %1828 = vrot.lane.b32.xlu0 %v1823, 64
  %v1829 = vpop.permute.xlu0 %1828
  %v1830 = vsel %vm229, %v1829, 0
  %1832 = vmatprep.subr.mxu0 %v46
  %1833 = vmatpush1.msra.mxu0 %v45
  %1834 = vmatprep.subr.mxu0 %v49
  %1835 = vmatpush1.msra.mxu0 %v48
  %1836 = vmatprep.subr.mxu0 %v52
  %1837 = vmatpush1.msra.mxu0 %v51
  %1838 = vmatprep.subr.mxu0 %v55
  %1839 = vmatpush1.msra.mxu0 %v54
  %1840 = vmatprep.subr.mxu0 0.0
  %1841 = vmatpush1.msra.mxu0 0.0
  %1842 = vmatprep.subr.mxu0 0.0
  %1843 = vmatpush1.msra.mxu0 0.0
  %1844 = vmatprep.subr.mxu0 0.0
  %1845 = vmatpush1.msra.mxu0 0.0
  %1846 = vmatprep.subr.mxu0 0.0
  %1847 = vmatpush1.msra.mxu0 0.0
  %1848 = vmatprep.subr.mxu0 0.0
  %1849 = vmatpush1.msra.mxu0 0.0
  %1850 = vmatprep.subr.mxu0 0.0
  %1851 = vmatpush1.msra.mxu0 0.0
  %1852 = vmatprep.subr.mxu0 0.0
  %1853 = vmatpush1.msra.mxu0 0.0
  %1854 = vmatprep.subr.mxu0 0.0
  %1855 = vmatpush1.msra.mxu0 0.0
  %1856 = vmatprep.subr.mxu0 0.0
  %1857 = vmatpush1.msra.mxu0 0.0
  %1858 = vmatprep.subr.mxu0 0.0
  %1859 = vmatpush1.msra.mxu0 0.0
  %1860 = vmatprep.subr.mxu0 0.0
  %1861 = vmatpush1.msra.mxu0 0.0
  %1862 = vmatprep.subr.mxu0 0.0
  %1863 = vmatpush1.msra.mxu0 0.0
  %1864 = vmatprep.subr.mxu0 0.0
  %1865 = vmatpush1.msra.mxu0 0.0
  %1866 = vmatprep.subr.mxu0 0.0
  %1867 = vmatpush1.msra.mxu0 0.0
  %1868 = vmatprep.subr.mxu0 0.0
  %1869 = vmatpush1.msra.mxu0 0.0
  %1870 = vmatprep.subr.mxu0 0.0
  %1871 = vmatpush1.msra.mxu0 0.0
  %1872 = vmatprep.subr.mxu0 0.0
  %1873 = vmatpush1.msra.mxu0 0.0
  %1874 = vmatprep.subr.mxu0 0.0
  %1875 = vmatpush1.msra.mxu0 0.0
  %1876 = vmatprep.subr.mxu0 0.0
  %1877 = vmatpush1.msra.mxu0 0.0
  %1878 = vmatprep.subr.mxu0 0.0
  %1879 = vmatpush1.msra.mxu0 0.0
  %1880 = vmatprep.subr.mxu0 0.0
  %1881 = vmatpush1.msra.mxu0 0.0
  %1882 = vmatprep.subr.mxu0 0.0
  %1883 = vmatpush1.msra.mxu0 0.0
  %1884 = vmatprep.subr.mxu0 0.0
  %1885 = vmatpush1.msra.mxu0 0.0
  %1886 = vmatprep.subr.mxu0 0.0
  %1887 = vmatpush1.msra.mxu0 0.0
  %1888 = vmatprep.subr.mxu0 0.0
  %1889 = vmatpush1.msra.mxu0 0.0
  %1890 = vmatprep.subr.mxu0 0.0
  %1891 = vmatpush1.msra.mxu0 0.0
  %1892 = vmatprep.subr.mxu0 0.0
  %1893 = vmatpush1.msra.mxu0 0.0
  %1894 = vmatprep.subr.mxu0 0.0
  %1895 = vmatpush1.msra.mxu0 0.0
  %1896 = vmatprep.mubr.f32.mxu0 0.0
  %1897 = vmatmul.mubr.f32.gmra.mrb[0].mxu0 %v1830
  %v1898 = vpop.f32.mrb[0].mxu0
  %v1899 = vadd.f32 0.0, %v1898
  %v1900 = vpop.f32.mrb[0].mxu0
  %v1901 = vadd.f32 0.0, %v1900
  %1902 = vdwg.mxu0
  %1903 = vmatprep.subr.mxu0 0.0
  %1904 = vmatpush1.msra.mxu0 %v47
  %1905 = vmatprep.subr.mxu0 0.0
  %1906 = vmatpush1.msra.mxu0 %v50
  %1907 = vmatprep.subr.mxu0 0.0
  %1908 = vmatpush1.msra.mxu0 %v53
  %1909 = vmatprep.subr.mxu0 0.0
  %1910 = vmatpush1.msra.mxu0 %v56
  %1911 = vmatprep.subr.mxu0 0.0
  %1912 = vmatpush1.msra.mxu0 0.0
  %1913 = vmatprep.subr.mxu0 0.0
  %1914 = vmatpush1.msra.mxu0 0.0
  %1915 = vmatprep.subr.mxu0 0.0
  %1916 = vmatpush1.msra.mxu0 0.0
  %1917 = vmatprep.subr.mxu0 0.0
  %1918 = vmatpush1.msra.mxu0 0.0
  %1919 = vmatprep.subr.mxu0 0.0
  %1920 = vmatpush1.msra.mxu0 0.0
  %1921 = vmatprep.subr.mxu0 0.0
  %1922 = vmatpush1.msra.mxu0 0.0
  %1923 = vmatprep.subr.mxu0 0.0
  %1924 = vmatpush1.msra.mxu0 0.0
  %1925 = vmatprep.subr.mxu0 0.0
  %1926 = vmatpush1.msra.mxu0 0.0
  %1927 = vmatprep.subr.mxu0 0.0
  %1928 = vmatpush1.msra.mxu0 0.0
  %1929 = vmatprep.subr.mxu0 0.0
  %1930 = vmatpush1.msra.mxu0 0.0
  %1931 = vmatprep.subr.mxu0 0.0
  %1932 = vmatpush1.msra.mxu0 0.0
  %1933 = vmatprep.subr.mxu0 0.0
  %1934 = vmatpush1.msra.mxu0 0.0
  %1935 = vmatprep.subr.mxu0 0.0
  %1936 = vmatpush1.msra.mxu0 0.0
  %1937 = vmatprep.subr.mxu0 0.0
  %1938 = vmatpush1.msra.mxu0 0.0
  %1939 = vmatprep.subr.mxu0 0.0
  %1940 = vmatpush1.msra.mxu0 0.0
  %1941 = vmatprep.subr.mxu0 0.0
  %1942 = vmatpush1.msra.mxu0 0.0
  %1943 = vmatprep.subr.mxu0 0.0
  %1944 = vmatpush1.msra.mxu0 0.0
  %1945 = vmatprep.subr.mxu0 0.0
  %1946 = vmatpush1.msra.mxu0 0.0
  %1947 = vmatprep.subr.mxu0 0.0
  %1948 = vmatpush1.msra.mxu0 0.0
  %1949 = vmatprep.subr.mxu0 0.0
  %1950 = vmatpush1.msra.mxu0 0.0
  %1951 = vmatprep.subr.mxu0 0.0
  %1952 = vmatpush1.msra.mxu0 0.0
  %1953 = vmatprep.subr.mxu0 0.0
  %1954 = vmatpush1.msra.mxu0 0.0
  %1955 = vmatprep.subr.mxu0 0.0
  %1956 = vmatpush1.msra.mxu0 0.0
  %1957 = vmatprep.subr.mxu0 0.0
  %1958 = vmatpush1.msra.mxu0 0.0
  %1959 = vmatprep.subr.mxu0 0.0
  %1960 = vmatpush1.msra.mxu0 0.0
  %1961 = vmatprep.subr.mxu0 0.0
  %1962 = vmatpush1.msra.mxu0 0.0
  %1963 = vmatprep.subr.mxu0 0.0
  %1964 = vmatpush1.msra.mxu0 0.0
  %1965 = vmatprep.subr.mxu0 0.0
  %1966 = vmatpush1.msra.mxu0 0.0
  %1967 = vmatprep.mubr.f32.mxu0 0.0
  %1968 = vmatmul.mubr.f32.gmra.mrb[0].mxu0 %v1830
  %v1969 = vpop.f32.mrb[0].mxu0
  %v1970 = vadd.f32 0.0, %v1969
  %v1971 = vpop.f32.mrb[0].mxu0
  %1972 = vdwg.mxu0
  %v1973 = vadd.f32 %v1824, %v1899
  %v1974 = vadd.f32 %v1825, %v1901
  %v1975 = vadd.f32 %v1826, %v1970
  %v1976 = vmax.f32 %v1973, 0.0
  %v1977 = vmax.f32 %v1974, 0.0
  %v1978 = vmax.f32 %v1975, 0.0
  %1979 = vst [vmem:[#allocation4 + $0x60] sm:$0xff] %v1976
  %1980 = vst [vmem:[#allocation4 + $0x68] sm:$0xff] %v1977
  %1981 = vst [vmem:[#allocation4 + $0x70] sm:$0xff] %v1978
  %1982 = vmatprep.subr.mxu0 0.0
  %1983 = vmatpush1.msra.mxu0 %v57
  %1984 = vmatprep.subr.mxu0 0.0
  %1985 = vmatpush1.msra.mxu0 %v58
  %1986 = vmatprep.subr.mxu0 0.0
  %1987 = vmatpush1.msra.mxu0 %v59
  %1988 = vmatprep.subr.mxu0 0.0
  %1989 = vmatpush1.msra.mxu0 %v60
  %1990 = vmatprep.subr.mxu0 0.0
  %1991 = vmatpush1.msra.mxu0 %v61
  %1992 = vmatprep.subr.mxu0 0.0
  %1993 = vmatpush1.msra.mxu0 %v62
  %1994 = vmatprep.subr.mxu0 0.0
  %1995 = vmatpush1.msra.mxu0 %v63
  %1996 = vmatprep.subr.mxu0 0.0
  %1997 = vmatpush1.msra.mxu0 %v64
  %1998 = vmatprep.subr.mxu0 0.0
  %1999 = vmatpush1.msra.mxu0 %v65
  %2000 = vmatprep.subr.mxu0 0.0
  %2001 = vmatpush1.msra.mxu0 %v66
  %2002 = vmatprep.subr.mxu0 0.0
  %2003 = vmatpush1.msra.mxu0 %v67
  %2004 = vmatprep.subr.mxu0 0.0
  %2005 = vmatpush1.msra.mxu0 %v68
  %2006 = vmatprep.subr.mxu0 0.0
  %2007 = vmatpush1.msra.mxu0 %v69
  %2008 = vmatprep.subr.mxu0 0.0
  %2009 = vmatpush1.msra.mxu0 %v70
  %2010 = vmatprep.subr.mxu0 0.0
  %2011 = vmatpush1.msra.mxu0 %v71
  %2012 = vmatprep.subr.mxu0 0.0
  %2013 = vmatpush1.msra.mxu0 %v72
  %2014 = vmatprep.subr.mxu0 0.0
  %2015 = vmatpush1.msra.mxu0 %v73
  %2016 = vmatprep.subr.mxu0 0.0
  %2017 = vmatpush1.msra.mxu0 %v74
  %2018 = vmatprep.subr.mxu0 0.0
  %2019 = vmatpush1.msra.mxu0 %v75
  %2020 = vmatprep.subr.mxu0 0.0
  %2021 = vmatpush1.msra.mxu0 %v76
  %2022 = vmatprep.subr.mxu0 0.0
  %2023 = vmatpush1.msra.mxu0 %v77
  %2024 = vmatprep.subr.mxu0 0.0
  %2025 = vmatpush1.msra.mxu0 %v78
  %2026 = vmatprep.subr.mxu0 0.0
  %2027 = vmatpush1.msra.mxu0 %v79
  %2028 = vmatprep.subr.mxu0 0.0
  %2029 = vmatpush1.msra.mxu0 %v80
  %2030 = vmatprep.subr.mxu0 0.0
  %2031 = vmatpush1.msra.mxu0 %v81
  %2032 = vmatprep.subr.mxu0 0.0
  %2033 = vmatpush1.msra.mxu0 %v82
  %2034 = vmatprep.subr.mxu0 0.0
  %2035 = vmatpush1.msra.mxu0 %v83
  %2036 = vmatprep.subr.mxu0 0.0
  %2037 = vmatpush1.msra.mxu0 %v84
  %2038 = vmatprep.subr.mxu0 0.0
  %2039 = vmatpush1.msra.mxu0 %v85
  %2040 = vmatprep.subr.mxu0 0.0
  %2041 = vmatpush1.msra.mxu0 %v86
  %2042 = vmatprep.subr.mxu0 0.0
  %2043 = vmatpush1.msra.mxu0 %v87
  %2044 = vmatprep.subr.mxu0 0.0
  %2045 = vmatpush1.msra.mxu0 %v88
  %2046 = vmatprep.mubr.f32.mxu0 %v1977
  %2047 = vmatmul.mubr.f32.gmra.mrb[0].mxu0 %v1976
  %v2048 = vpop.f32.mrb[0].mxu0
  %v2049 = vadd.f32 %v117, %v2048
  %v2050 = vpop.f32.mrb[0].mxu0
  %2051 = vdwg.mxu0
  %2052 = vmatprep.subr.mxu0 0.0
  %2053 = vmatpush1.msra.mxu0 %v89
  %2054 = vmatprep.subr.mxu0 0.0
  %2055 = vmatpush1.msra.mxu0 %v90
  %2056 = vmatprep.subr.mxu0 0.0
  %2057 = vmatpush1.msra.mxu0 %v91
  %2058 = vmatprep.subr.mxu0 0.0
  %2059 = vmatpush1.msra.mxu0 %v92
  %2060 = vmatprep.subr.mxu0 0.0
  %2061 = vmatpush1.msra.mxu0 %v93
  %2062 = vmatprep.subr.mxu0 0.0
  %2063 = vmatpush1.msra.mxu0 %v94
  %2064 = vmatprep.subr.mxu0 0.0
  %2065 = vmatpush1.msra.mxu0 %v95
  %2066 = vmatprep.subr.mxu0 0.0
  %2067 = vmatpush1.msra.mxu0 %v96
  %2068 = vmatprep.subr.mxu0 0.0
  %2069 = vmatpush1.msra.mxu0 %v97
  %2070 = vmatprep.subr.mxu0 0.0
  %2071 = vmatpush1.msra.mxu0 %v98
  %2072 = vmatprep.subr.mxu0 0.0
  %2073 = vmatpush1.msra.mxu0 %v99
  %2074 = vmatprep.subr.mxu0 0.0
  %2075 = vmatpush1.msra.mxu0 %v100
  %2076 = vmatprep.subr.mxu0 0.0
  %2077 = vmatpush1.msra.mxu0 %v101
  %2078 = vmatprep.subr.mxu0 0.0
  %2079 = vmatpush1.msra.mxu0 %v102
  %2080 = vmatprep.subr.mxu0 0.0
  %2081 = vmatpush1.msra.mxu0 %v103
  %2082 = vmatprep.subr.mxu0 0.0
  %2083 = vmatpush1.msra.mxu0 %v104
  %2084 = vmatprep.subr.mxu0 0.0
  %2085 = vmatpush1.msra.mxu0 0.0
  %2086 = vmatprep.subr.mxu0 0.0
  %2087 = vmatpush1.msra.mxu0 0.0
  %2088 = vmatprep.subr.mxu0 0.0
  %2089 = vmatpush1.msra.mxu0 0.0
  %2090 = vmatprep.subr.mxu0 0.0
  %2091 = vmatpush1.msra.mxu0 0.0
  %2092 = vmatprep.subr.mxu0 0.0
  %2093 = vmatpush1.msra.mxu0 0.0
  %2094 = vmatprep.subr.mxu0 0.0
  %2095 = vmatpush1.msra.mxu0 0.0
  %2096 = vmatprep.subr.mxu0 0.0
  %2097 = vmatpush1.msra.mxu0 0.0
  %2098 = vmatprep.subr.mxu0 0.0
  %2099 = vmatpush1.msra.mxu0 0.0
  %2100 = vmatprep.subr.mxu0 0.0
  %2101 = vmatpush1.msra.mxu0 0.0
  %2102 = vmatprep.subr.mxu0 0.0
  %2103 = vmatpush1.msra.mxu0 0.0
  %2104 = vmatprep.subr.mxu0 0.0
  %2105 = vmatpush1.msra.mxu0 0.0
  %2106 = vmatprep.subr.mxu0 0.0
  %2107 = vmatpush1.msra.mxu0 0.0
  %2108 = vmatprep.subr.mxu0 0.0
  %2109 = vmatpush1.msra.mxu0 0.0
  %2110 = vmatprep.subr.mxu0 0.0
  %2111 = vmatpush1.msra.mxu0 0.0
  %2112 = vmatprep.subr.mxu0 0.0
  %2113 = vmatpush1.msra.mxu0 0.0
  %2114 = vmatprep.subr.mxu0 0.0
  %2115 = vmatpush1.msra.mxu0 0.0
  %2116 = vmatprep.mubr.f32.mxu0 0.0
  %2117 = vmatmul.mubr.f32.gmra.mrb[0].mxu0 %v1978
  %v2118 = vpop.f32.mrb[0].mxu0
  %v2119 = vadd.f32 %v2049, %v2118
  %v2120 = vpop.f32.mrb[0].mxu0
  %2121 = vdwg.mxu0
  %v2122 = vmax.f32 %v2119, 0.0
  %2123 = vrot.lane.b32.xlu0 %v1823, 96
  %v2124 = vpop.permute.xlu0 %2123
  %v2126 = vsel %vm229, %v2122, %v2124
  %v2128 = vsel %vm121, %v2126, 0
  %2130 = vmatprep.subr.mxu0 0.0
  %2131 = vmatpush1.msra.mxu0 %v37
  %2132 = vmatprep.subr.mxu0 0.0
  %2133 = vmatpush1.msra.mxu0 %v38
  %2134 = vmatprep.subr.mxu0 0.0
  %2135 = vmatpush1.msra.mxu0 %v39
  %2136 = vmatprep.subr.mxu0 0.0
  %2137 = vmatpush1.msra.mxu0 %v40
  %2138 = vmatprep.subr.mxu0 0.0
  %2139 = vmatpush1.msra.mxu0 %v41
  %2140 = vmatprep.subr.mxu0 0.0
  %2141 = vmatpush1.msra.mxu0 %v42
  %2142 = vmatprep.subr.mxu0 0.0
  %2143 = vmatpush1.msra.mxu0 %v43
  %2144 = vmatprep.subr.mxu0 0.0
  %2145 = vmatpush1.msra.mxu0 %v44
  %2146 = vmatprep.subr.mxu0 0.0
  %2147 = vmatpush1.msra.mxu0 0.0
  %2148 = vmatprep.subr.mxu0 0.0
  %2149 = vmatpush1.msra.mxu0 0.0
  %2150 = vmatprep.subr.mxu0 0.0
  %2151 = vmatpush1.msra.mxu0 0.0
  %2152 = vmatprep.subr.mxu0 0.0
  %2153 = vmatpush1.msra.mxu0 0.0
  %2154 = vmatprep.subr.mxu0 0.0
  %2155 = vmatpush1.msra.mxu0 0.0
  %2156 = vmatprep.subr.mxu0 0.0
  %2157 = vmatpush1.msra.mxu0 0.0
  %2158 = vmatprep.subr.mxu0 0.0
  %2159 = vmatpush1.msra.mxu0 0.0
  %2160 = vmatprep.subr.mxu0 0.0
  %2161 = vmatpush1.msra.mxu0 0.0
  %2162 = vmatprep.subr.mxu0 0.0
  %2163 = vmatpush1.msra.mxu0 0.0
  %2164 = vmatprep.subr.mxu0 0.0
  %2165 = vmatpush1.msra.mxu0 0.0
  %2166 = vmatprep.subr.mxu0 0.0
  %2167 = vmatpush1.msra.mxu0 0.0
  %2168 = vmatprep.subr.mxu0 0.0
  %2169 = vmatpush1.msra.mxu0 0.0
  %2170 = vmatprep.subr.mxu0 0.0
  %2171 = vmatpush1.msra.mxu0 0.0
  %2172 = vmatprep.subr.mxu0 0.0
  %2173 = vmatpush1.msra.mxu0 0.0
  %2174 = vmatprep.subr.mxu0 0.0
  %2175 = vmatpush1.msra.mxu0 0.0
  %2176 = vmatprep.subr.mxu0 0.0
  %2177 = vmatpush1.msra.mxu0 0.0
  %2178 = vmatprep.subr.mxu0 0.0
  %2179 = vmatpush1.msra.mxu0 0.0
  %2180 = vmatprep.subr.mxu0 0.0
  %2181 = vmatpush1.msra.mxu0 0.0
  %2182 = vmatprep.subr.mxu0 0.0
  %2183 = vmatpush1.msra.mxu0 0.0
  %2184 = vmatprep.subr.mxu0 0.0
  %2185 = vmatpush1.msra.mxu0 0.0
  %2186 = vmatprep.subr.mxu0 0.0
  %2187 = vmatpush1.msra.mxu0 0.0
  %2188 = vmatprep.subr.mxu0 0.0
  %2189 = vmatpush1.msra.mxu0 0.0
  %2190 = vmatprep.subr.mxu0 0.0
  %2191 = vmatpush1.msra.mxu0 0.0
  %2192 = vmatprep.subr.mxu0 0.0
  %2193 = vmatpush1.msra.mxu0 0.0
  %2194 = vmatprep.mubr.f32.mxu0 0.0
  %2195 = vmatmul.mubr.f32.gmra.mrb[0].mxu0 %v2128
  %v2196 = vpop.f32.mrb[0].mxu0
  %v2197 = vadd.f32 %v110, %v2196
  %v2198 = vpop.f32.mrb[0].mxu0
  %2199 = vdwg.mxu0
  %v2200 = vxor.u32 %v2197, 2147483648
  %v2201 = vmul.f32 %v2200, 1.442695
  %v2202 = vpow.pop %v2201
  %v2203 = vadd.f32 %v2202, 1.0
  %v2204 = vrcp.pop %v2203
  %v2205 = vmul.f32 1.0, %v2204
  %v2206 = vtanh.pop %v2197
  %v2207 = vmul.f32 %v2205, %v1817
  %2209 = vrot.lane.b32.xlu0 %v2206, 32
  %v2210 = vpop.permute.xlu0 %2209
  %v2212 = vmul.f32 %v2205, %v2210
  %2214 = vrot.lane.b32.xlu0 %v2212, 32
  %v2215 = vpop.permute.xlu0 %2214
  %v2217 = vadd.f32 %v2207, %v2215
  %v2218 = vtanh.pop %v2217
  %2220 = vrot.lane.b32.xlu0 %v2218, 32
  %v2221 = vpop.permute.xlu0 %2220
  %v2223 = vmul.f32 %v2205, %v2221
  %v2224 = vld [vmem:[%s0 + $0x78] sm:$0xff]
  %v2225 = vld [vmem:[%s0 + $0x80] sm:$0xff]
  %v2226 = vld [vmem:[%s0 + $0x88] sm:$0xff]
  %2228 = vrot.lane.b32.xlu0 %v2223, 64
  %v2229 = vpop.permute.xlu0 %2228
  %v2230 = vsel %vm229, %v2229, 0
  %2232 = vmatprep.subr.mxu0 %v46
  %2233 = vmatpush1.msra.mxu0 %v45
  %2234 = vmatprep.subr.mxu0 %v49
  %2235 = vmatpush1.msra.mxu0 %v48
  %2236 = vmatprep.subr.mxu0 %v52
  %2237 = vmatpush1.msra.mxu0 %v51
  %2238 = vmatprep.subr.mxu0 %v55
  %2239 = vmatpush1.msra.mxu0 %v54
  %2240 = vmatprep.subr.mxu0 0.0
  %2241 = vmatpush1.msra.mxu0 0.0
  %2242 = vmatprep.subr.mxu0 0.0
  %2243 = vmatpush1.msra.mxu0 0.0
  %2244 = vmatprep.subr.mxu0 0.0
  %2245 = vmatpush1.msra.mxu0 0.0
  %2246 = vmatprep.subr.mxu0 0.0
  %2247 = vmatpush1.msra.mxu0 0.0
  %2248 = vmatprep.subr.mxu0 0.0
  %2249 = vmatpush1.msra.mxu0 0.0
  %2250 = vmatprep.subr.mxu0 0.0
  %2251 = vmatpush1.msra.mxu0 0.0
  %2252 = vmatprep.subr.mxu0 0.0
  %2253 = vmatpush1.msra.mxu0 0.0
  %2254 = vmatprep.subr.mxu0 0.0
  %2255 = vmatpush1.msra.mxu0 0.0
  %2256 = vmatprep.subr.mxu0 0.0
  %2257 = vmatpush1.msra.mxu0 0.0
  %2258 = vmatprep.subr.mxu0 0.0
  %2259 = vmatpush1.msra.mxu0 0.0
  %2260 = vmatprep.subr.mxu0 0.0
  %2261 = vmatpush1.msra.mxu0 0.0
  %2262 = vmatprep.subr.mxu0 0.0
  %2263 = vmatpush1.msra.mxu0 0.0
  %2264 = vmatprep.subr.mxu0 0.0
  %2265 = vmatpush1.msra.mxu0 0.0
  %2266 = vmatprep.subr.mxu0 0.0
  %2267 = vmatpush1.msra.mxu0 0.0
  %2268 = vmatprep.subr.mxu0 0.0
  %2269 = vmatpush1.msra.mxu0 0.0
  %2270 = vmatprep.subr.mxu0 0.0
  %2271 = vmatpush1.msra.mxu0 0.0
  %2272 = vmatprep.subr.mxu0 0.0
  %2273 = vmatpush1.msra.mxu0 0.0
  %2274 = vmatprep.subr.mxu0 0.0
  %2275 = vmatpush1.msra.mxu0 0.0
  %2276 = vmatprep.subr.mxu0 0.0
  %2277 = vmatpush1.msra.mxu0 0.0
  %2278 = vmatprep.subr.mxu0 0.0
  %2279 = vmatpush1.msra.mxu0 0.0
  %2280 = vmatprep.subr.mxu0 0.0
  %2281 = vmatpush1.msra.mxu0 0.0
  %2282 = vmatprep.subr.mxu0 0.0
  %2283 = vmatpush1.msra.mxu0 0.0
  %2284 = vmatprep.subr.mxu0 0.0
  %2285 = vmatpush1.msra.mxu0 0.0
  %2286 = vmatprep.subr.mxu0 0.0
  %2287 = vmatpush1.msra.mxu0 0.0
  %2288 = vmatprep.subr.mxu0 0.0
  %2289 = vmatpush1.msra.mxu0 0.0
  %2290 = vmatprep.subr.mxu0 0.0
  %2291 = vmatpush1.msra.mxu0 0.0
  %2292 = vmatprep.subr.mxu0 0.0
  %2293 = vmatpush1.msra.mxu0 0.0
  %2294 = vmatprep.subr.mxu0 0.0
  %2295 = vmatpush1.msra.mxu0 0.0
  %2296 = vmatprep.mubr.f32.mxu0 0.0
  %2297 = vmatmul.mubr.f32.gmra.mrb[0].mxu0 %v2230
  %v2298 = vpop.f32.mrb[0].mxu0
  %v2299 = vadd.f32 0.0, %v2298
  %v2300 = vpop.f32.mrb[0].mxu0
  %v2301 = vadd.f32 0.0, %v2300
  %2302 = vdwg.mxu0
  %2303 = vmatprep.subr.mxu0 0.0
  %2304 = vmatpush1.msra.mxu0 %v47
  %2305 = vmatprep.subr.mxu0 0.0
  %2306 = vmatpush1.msra.mxu0 %v50
  %2307 = vmatprep.subr.mxu0 0.0
  %2308 = vmatpush1.msra.mxu0 %v53
  %2309 = vmatprep.subr.mxu0 0.0
  %2310 = vmatpush1.msra.mxu0 %v56
  %2311 = vmatprep.subr.mxu0 0.0
  %2312 = vmatpush1.msra.mxu0 0.0
  %2313 = vmatprep.subr.mxu0 0.0
  %2314 = vmatpush1.msra.mxu0 0.0
  %2315 = vmatprep.subr.mxu0 0.0
  %2316 = vmatpush1.msra.mxu0 0.0
  %2317 = vmatprep.subr.mxu0 0.0
  %2318 = vmatpush1.msra.mxu0 0.0
  %2319 = vmatprep.subr.mxu0 0.0
  %2320 = vmatpush1.msra.mxu0 0.0
  %2321 = vmatprep.subr.mxu0 0.0
  %2322 = vmatpush1.msra.mxu0 0.0
  %2323 = vmatprep.subr.mxu0 0.0
  %2324 = vmatpush1.msra.mxu0 0.0
  %2325 = vmatprep.subr.mxu0 0.0
  %2326 = vmatpush1.msra.mxu0 0.0
  %2327 = vmatprep.subr.mxu0 0.0
  %2328 = vmatpush1.msra.mxu0 0.0
  %2329 = vmatprep.subr.mxu0 0.0
  %2330 = vmatpush1.msra.mxu0 0.0
  %2331 = vmatprep.subr.mxu0 0.0
  %2332 = vmatpush1.msra.mxu0 0.0
  %2333 = vmatprep.subr.mxu0 0.0
  %2334 = vmatpush1.msra.mxu0 0.0
  %2335 = vmatprep.subr.mxu0 0.0
  %2336 = vmatpush1.msra.mxu0 0.0
  %2337 = vmatprep.subr.mxu0 0.0
  %2338 = vmatpush1.msra.mxu0 0.0
  %2339 = vmatprep.subr.mxu0 0.0
  %2340 = vmatpush1.msra.mxu0 0.0
  %2341 = vmatprep.subr.mxu0 0.0
  %2342 = vmatpush1.msra.mxu0 0.0
  %2343 = vmatprep.subr.mxu0 0.0
  %2344 = vmatpush1.msra.mxu0 0.0
  %2345 = vmatprep.subr.mxu0 0.0
  %2346 = vmatpush1.msra.mxu0 0.0
  %2347 = vmatprep.subr.mxu0 0.0
  %2348 = vmatpush1.msra.mxu0 0.0
  %2349 = vmatprep.subr.mxu0 0.0
  %2350 = vmatpush1.msra.mxu0 0.0
  %2351 = vmatprep.subr.mxu0 0.0
  %2352 = vmatpush1.msra.mxu0 0.0
  %2353 = vmatprep.subr.mxu0 0.0
  %2354 = vmatpush1.msra.mxu0 0.0
  %2355 = vmatprep.subr.mxu0 0.0
  %2356 = vmatpush1.msra.mxu0 0.0
  %2357 = vmatprep.subr.mxu0 0.0
  %2358 = vmatpush1.msra.mxu0 0.0
  %2359 = vmatprep.subr.mxu0 0.0
  %2360 = vmatpush1.msra.mxu0 0.0
  %2361 = vmatprep.subr.mxu0 0.0
  %2362 = vmatpush1.msra.mxu0 0.0
  %2363 = vmatprep.subr.mxu0 0.0
  %2364 = vmatpush1.msra.mxu0 0.0
  %2365 = vmatprep.subr.mxu0 0.0
  %2366 = vmatpush1.msra.mxu0 0.0
  %2367 = vmatprep.mubr.f32.mxu0 0.0
  %2368 = vmatmul.mubr.f32.gmra.mrb[0].mxu0 %v2230
  %v2369 = vpop.f32.mrb[0].mxu0
  %v2370 = vadd.f32 0.0, %v2369
  %v2371 = vpop.f32.mrb[0].mxu0
  %2372 = vdwg.mxu0
  %v2373 = vadd.f32 %v2224, %v2299
  %v2374 = vadd.f32 %v2225, %v2301
  %v2375 = vadd.f32 %v2226, %v2370
  %v2376 = vmax.f32 %v2373, 0.0
  %v2377 = vmax.f32 %v2374, 0.0
  %v2378 = vmax.f32 %v2375, 0.0
  %2379 = vst [vmem:[#allocation4 + $0x78] sm:$0xff] %v2376
  %2380 = vst [vmem:[#allocation4 + $0x80] sm:$0xff] %v2377
  %2381 = vst [vmem:[#allocation4 + $0x88] sm:$0xff] %v2378
  %2382 = vmatprep.subr.mxu0 0.0
  %2383 = vmatpush1.msra.mxu0 %v57
  %2384 = vmatprep.subr.mxu0 0.0
  %2385 = vmatpush1.msra.mxu0 %v58
  %2386 = vmatprep.subr.mxu0 0.0
  %2387 = vmatpush1.msra.mxu0 %v59
  %2388 = vmatprep.subr.mxu0 0.0
  %2389 = vmatpush1.msra.mxu0 %v60
  %2390 = vmatprep.subr.mxu0 0.0
  %2391 = vmatpush1.msra.mxu0 %v61
  %2392 = vmatprep.subr.mxu0 0.0
  %2393 = vmatpush1.msra.mxu0 %v62
  %2394 = vmatprep.subr.mxu0 0.0
  %2395 = vmatpush1.msra.mxu0 %v63
  %2396 = vmatprep.subr.mxu0 0.0
  %2397 = vmatpush1.msra.mxu0 %v64
  %2398 = vmatprep.subr.mxu0 0.0
  %2399 = vmatpush1.msra.mxu0 %v65
  %2400 = vmatprep.subr.mxu0 0.0
  %2401 = vmatpush1.msra.mxu0 %v66
  %2402 = vmatprep.subr.mxu0 0.0
  %2403 = vmatpush1.msra.mxu0 %v67
  %2404 = vmatprep.subr.mxu0 0.0
  %2405 = vmatpush1.msra.mxu0 %v68
  %2406 = vmatprep.subr.mxu0 0.0
  %2407 = vmatpush1.msra.mxu0 %v69
  %2408 = vmatprep.subr.mxu0 0.0
  %2409 = vmatpush1.msra.mxu0 %v70
  %2410 = vmatprep.subr.mxu0 0.0
  %2411 = vmatpush1.msra.mxu0 %v71
  %2412 = vmatprep.subr.mxu0 0.0
  %2413 = vmatpush1.msra.mxu0 %v72
  %2414 = vmatprep.subr.mxu0 0.0
  %2415 = vmatpush1.msra.mxu0 %v73
  %2416 = vmatprep.subr.mxu0 0.0
  %2417 = vmatpush1.msra.mxu0 %v74
  %2418 = vmatprep.subr.mxu0 0.0
  %2419 = vmatpush1.msra.mxu0 %v75
  %2420 = vmatprep.subr.mxu0 0.0
  %2421 = vmatpush1.msra.mxu0 %v76
  %2422 = vmatprep.subr.mxu0 0.0
  %2423 = vmatpush1.msra.mxu0 %v77
  %2424 = vmatprep.subr.mxu0 0.0
  %2425 = vmatpush1.msra.mxu0 %v78
  %2426 = vmatprep.subr.mxu0 0.0
  %2427 = vmatpush1.msra.mxu0 %v79
  %2428 = vmatprep.subr.mxu0 0.0
  %2429 = vmatpush1.msra.mxu0 %v80
  %2430 = vmatprep.subr.mxu0 0.0
  %2431 = vmatpush1.msra.mxu0 %v81
  %2432 = vmatprep.subr.mxu0 0.0
  %2433 = vmatpush1.msra.mxu0 %v82
  %2434 = vmatprep.subr.mxu0 0.0
  %2435 = vmatpush1.msra.mxu0 %v83
  %2436 = vmatprep.subr.mxu0 0.0
  %2437 = vmatpush1.msra.mxu0 %v84
  %2438 = vmatprep.subr.mxu0 0.0
  %2439 = vmatpush1.msra.mxu0 %v85
  %2440 = vmatprep.subr.mxu0 0.0
  %2441 = vmatpush1.msra.mxu0 %v86
  %2442 = vmatprep.subr.mxu0 0.0
  %2443 = vmatpush1.msra.mxu0 %v87
  %2444 = vmatprep.subr.mxu0 0.0
  %2445 = vmatpush1.msra.mxu0 %v88
  %2446 = vmatprep.mubr.f32.mxu0 %v2377
  %2447 = vmatmul.mubr.f32.gmra.mrb[0].mxu0 %v2376
  %v2448 = vpop.f32.mrb[0].mxu0
  %v2449 = vadd.f32 %v117, %v2448
  %v2450 = vpop.f32.mrb[0].mxu0
  %2451 = vdwg.mxu0
  %2452 = vmatprep.subr.mxu0 0.0
  %2453 = vmatpush1.msra.mxu0 %v89
  %2454 = vmatprep.subr.mxu0 0.0
  %2455 = vmatpush1.msra.mxu0 %v90
  %2456 = vmatprep.subr.mxu0 0.0
  %2457 = vmatpush1.msra.mxu0 %v91
  %2458 = vmatprep.subr.mxu0 0.0
  %2459 = vmatpush1.msra.mxu0 %v92
  %2460 = vmatprep.subr.mxu0 0.0
  %2461 = vmatpush1.msra.mxu0 %v93
  %2462 = vmatprep.subr.mxu0 0.0
  %2463 = vmatpush1.msra.mxu0 %v94
  %2464 = vmatprep.subr.mxu0 0.0
  %2465 = vmatpush1.msra.mxu0 %v95
  %2466 = vmatprep.subr.mxu0 0.0
  %2467 = vmatpush1.msra.mxu0 %v96
  %2468 = vmatprep.subr.mxu0 0.0
  %2469 = vmatpush1.msra.mxu0 %v97
  %2470 = vmatprep.subr.mxu0 0.0
  %2471 = vmatpush1.msra.mxu0 %v98
  %2472 = vmatprep.subr.mxu0 0.0
  %2473 = vmatpush1.msra.mxu0 %v99
  %2474 = vmatprep.subr.mxu0 0.0
  %2475 = vmatpush1.msra.mxu0 %v100
  %2476 = vmatprep.subr.mxu0 0.0
  %2477 = vmatpush1.msra.mxu0 %v101
  %2478 = vmatprep.subr.mxu0 0.0
  %2479 = vmatpush1.msra.mxu0 %v102
  %2480 = vmatprep.subr.mxu0 0.0
  %2481 = vmatpush1.msra.mxu0 %v103
  %2482 = vmatprep.subr.mxu0 0.0
  %2483 = vmatpush1.msra.mxu0 %v104
  %2484 = vmatprep.subr.mxu0 0.0
  %2485 = vmatpush1.msra.mxu0 0.0
  %2486 = vmatprep.subr.mxu0 0.0
  %2487 = vmatpush1.msra.mxu0 0.0
  %2488 = vmatprep.subr.mxu0 0.0
  %2489 = vmatpush1.msra.mxu0 0.0
  %2490 = vmatprep.subr.mxu0 0.0
  %2491 = vmatpush1.msra.mxu0 0.0
  %2492 = vmatprep.subr.mxu0 0.0
  %2493 = vmatpush1.msra.mxu0 0.0
  %2494 = vmatprep.subr.mxu0 0.0
  %2495 = vmatpush1.msra.mxu0 0.0
  %2496 = vmatprep.subr.mxu0 0.0
  %2497 = vmatpush1.msra.mxu0 0.0
  %2498 = vmatprep.subr.mxu0 0.0
  %2499 = vmatpush1.msra.mxu0 0.0
  %2500 = vmatprep.subr.mxu0 0.0
  %2501 = vmatpush1.msra.mxu0 0.0
  %2502 = vmatprep.subr.mxu0 0.0
  %2503 = vmatpush1.msra.mxu0 0.0
  %2504 = vmatprep.subr.mxu0 0.0
  %2505 = vmatpush1.msra.mxu0 0.0
  %2506 = vmatprep.subr.mxu0 0.0
  %2507 = vmatpush1.msra.mxu0 0.0
  %2508 = vmatprep.subr.mxu0 0.0
  %2509 = vmatpush1.msra.mxu0 0.0
  %2510 = vmatprep.subr.mxu0 0.0
  %2511 = vmatpush1.msra.mxu0 0.0
  %2512 = vmatprep.subr.mxu0 0.0
  %2513 = vmatpush1.msra.mxu0 0.0
  %2514 = vmatprep.subr.mxu0 0.0
  %2515 = vmatpush1.msra.mxu0 0.0
  %2516 = vmatprep.mubr.f32.mxu0 0.0
  %2517 = vmatmul.mubr.f32.gmra.mrb[0].mxu0 %v2378
  %v2518 = vpop.f32.mrb[0].mxu0
  %v2519 = vadd.f32 %v2449, %v2518
  %v2520 = vpop.f32.mrb[0].mxu0
  %2521 = vdwg.mxu0
  %v2522 = vmax.f32 %v2519, 0.0
  %2523 = vrot.lane.b32.xlu0 %v2223, 96
  %v2524 = vpop.permute.xlu0 %2523
  %v2526 = vsel %vm229, %v2522, %v2524
  %v2528 = vsel %vm121, %v2526, 0
  %2530 = vmatprep.subr.mxu0 0.0
  %2531 = vmatpush1.msra.mxu0 %v37
  %2532 = vmatprep.subr.mxu0 0.0
  %2533 = vmatpush1.msra.mxu0 %v38
  %2534 = vmatprep.subr.mxu0 0.0
  %2535 = vmatpush1.msra.mxu0 %v39
  %2536 = vmatprep.subr.mxu0 0.0
  %2537 = vmatpush1.msra.mxu0 %v40
  %2538 = vmatprep.subr.mxu0 0.0
  %2539 = vmatpush1.msra.mxu0 %v41
  %2540 = vmatprep.subr.mxu0 0.0
  %2541 = vmatpush1.msra.mxu0 %v42
  %2542 = vmatprep.subr.mxu0 0.0
  %2543 = vmatpush1.msra.mxu0 %v43
  %2544 = vmatprep.subr.mxu0 0.0
  %2545 = vmatpush1.msra.mxu0 %v44
  %2546 = vmatprep.subr.mxu0 0.0
  %2547 = vmatpush1.msra.mxu0 0.0
  %2548 = vmatprep.subr.mxu0 0.0
  %2549 = vmatpush1.msra.mxu0 0.0
  %2550 = vmatprep.subr.mxu0 0.0
  %2551 = vmatpush1.msra.mxu0 0.0
  %2552 = vmatprep.subr.mxu0 0.0
  %2553 = vmatpush1.msra.mxu0 0.0
  %2554 = vmatprep.subr.mxu0 0.0
  %2555 = vmatpush1.msra.mxu0 0.0
  %2556 = vmatprep.subr.mxu0 0.0
  %2557 = vmatpush1.msra.mxu0 0.0
  %2558 = vmatprep.subr.mxu0 0.0
  %2559 = vmatpush1.msra.mxu0 0.0
  %2560 = vmatprep.subr.mxu0 0.0
  %2561 = vmatpush1.msra.mxu0 0.0
  %2562 = vmatprep.subr.mxu0 0.0
  %2563 = vmatpush1.msra.mxu0 0.0
  %2564 = vmatprep.subr.mxu0 0.0
  %2565 = vmatpush1.msra.mxu0 0.0
  %2566 = vmatprep.subr.mxu0 0.0
  %2567 = vmatpush1.msra.mxu0 0.0
  %2568 = vmatprep.subr.mxu0 0.0
  %2569 = vmatpush1.msra.mxu0 0.0
  %2570 = vmatprep.subr.mxu0 0.0
  %2571 = vmatpush1.msra.mxu0 0.0
  %2572 = vmatprep.subr.mxu0 0.0
  %2573 = vmatpush1.msra.mxu0 0.0
  %2574 = vmatprep.subr.mxu0 0.0
  %2575 = vmatpush1.msra.mxu0 0.0
  %2576 = vmatprep.subr.mxu0 0.0
  %2577 = vmatpush1.msra.mxu0 0.0
  %2578 = vmatprep.subr.mxu0 0.0
  %2579 = vmatpush1.msra.mxu0 0.0
  %2580 = vmatprep.subr.mxu0 0.0
  %2581 = vmatpush1.msra.mxu0 0.0
  %2582 = vmatprep.subr.mxu0 0.0
  %2583 = vmatpush1.msra.mxu0 0.0
  %2584 = vmatprep.subr.mxu0 0.0
  %2585 = vmatpush1.msra.mxu0 0.0
  %2586 = vmatprep.subr.mxu0 0.0
  %2587 = vmatpush1.msra.mxu0 0.0
  %2588 = vmatprep.subr.mxu0 0.0
  %2589 = vmatpush1.msra.mxu0 0.0
  %2590 = vmatprep.subr.mxu0 0.0
  %2591 = vmatpush1.msra.mxu0 0.0
  %2592 = vmatprep.subr.mxu0 0.0
  %2593 = vmatpush1.msra.mxu0 0.0
  %2594 = vmatprep.mubr.f32.mxu0 0.0
  %2595 = vmatmul.mubr.f32.gmra.mrb[0].mxu0 %v2528
  %v2596 = vpop.f32.mrb[0].mxu0
  %v2597 = vadd.f32 %v110, %v2596
  %v2598 = vpop.f32.mrb[0].mxu0
  %2599 = vdwg.mxu0
  %v2600 = vxor.u32 %v2597, 2147483648
  %v2601 = vmul.f32 %v2600, 1.442695
  %v2602 = vpow.pop %v2601
  %v2603 = vadd.f32 %v2602, 1.0
  %v2604 = vrcp.pop %v2603
  %v2605 = vmul.f32 1.0, %v2604
  %v2606 = vtanh.pop %v2597
  %v2607 = vmul.f32 %v2605, %v2217
  %2609 = vrot.lane.b32.xlu0 %v2606, 32
  %v2610 = vpop.permute.xlu0 %2609
  %v2612 = vmul.f32 %v2605, %v2610
  %2614 = vrot.lane.b32.xlu0 %v2612, 32
  %v2615 = vpop.permute.xlu0 %2614
  %v2617 = vadd.f32 %v2607, %v2615
  %v2618 = vtanh.pop %v2617
  %2620 = vrot.lane.b32.xlu0 %v2618, 32
  %v2621 = vpop.permute.xlu0 %2620
  %v2623 = vmul.f32 %v2605, %v2621
  %v2624 = vld [vmem:[%s0 + $0x90] sm:$0xff]
  %v2625 = vld [vmem:[%s0 + $0x98] sm:$0xff]
  %v2626 = vld [vmem:[%s0 + $0xa0] sm:$0xff]
  %2628 = vrot.lane.b32.xlu0 %v2623, 64
  %v2629 = vpop.permute.xlu0 %2628
  %v2630 = vsel %vm229, %v2629, 0
  %2632 = vmatprep.subr.mxu0 %v46
  %2633 = vmatpush1.msra.mxu0 %v45
  %2634 = vmatprep.subr.mxu0 %v49
  %2635 = vmatpush1.msra.mxu0 %v48
  %2636 = vmatprep.subr.mxu0 %v52
  %2637 = vmatpush1.msra.mxu0 %v51
  %2638 = vmatprep.subr.mxu0 %v55
  %2639 = vmatpush1.msra.mxu0 %v54
  %2640 = vmatprep.subr.mxu0 0.0
  %2641 = vmatpush1.msra.mxu0 0.0
  %2642 = vmatprep.subr.mxu0 0.0
  %2643 = vmatpush1.msra.mxu0 0.0
  %2644 = vmatprep.subr.mxu0 0.0
  %2645 = vmatpush1.msra.mxu0 0.0
  %2646 = vmatprep.subr.mxu0 0.0
  %2647 = vmatpush1.msra.mxu0 0.0
  %2648 = vmatprep.subr.mxu0 0.0
  %2649 = vmatpush1.msra.mxu0 0.0
  %2650 = vmatprep.subr.mxu0 0.0
  %2651 = vmatpush1.msra.mxu0 0.0
  %2652 = vmatprep.subr.mxu0 0.0
  %2653 = vmatpush1.msra.mxu0 0.0
  %2654 = vmatprep.subr.mxu0 0.0
  %2655 = vmatpush1.msra.mxu0 0.0
  %2656 = vmatprep.subr.mxu0 0.0
  %2657 = vmatpush1.msra.mxu0 0.0
  %2658 = vmatprep.subr.mxu0 0.0
  %2659 = vmatpush1.msra.mxu0 0.0
  %2660 = vmatprep.subr.mxu0 0.0
  %2661 = vmatpush1.msra.mxu0 0.0
  %2662 = vmatprep.subr.mxu0 0.0
  %2663 = vmatpush1.msra.mxu0 0.0
  %2664 = vmatprep.subr.mxu0 0.0
  %2665 = vmatpush1.msra.mxu0 0.0
  %2666 = vmatprep.subr.mxu0 0.0
  %2667 = vmatpush1.msra.mxu0 0.0
  %2668 = vmatprep.subr.mxu0 0.0
  %2669 = vmatpush1.msra.mxu0 0.0
  %2670 = vmatprep.subr.mxu0 0.0
  %2671 = vmatpush1.msra.mxu0 0.0
  %2672 = vmatprep.subr.mxu0 0.0
  %2673 = vmatpush1.msra.mxu0 0.0
  %2674 = vmatprep.subr.mxu0 0.0
  %2675 = vmatpush1.msra.mxu0 0.0
  %2676 = vmatprep.subr.mxu0 0.0
  %2677 = vmatpush1.msra.mxu0 0.0
  %2678 = vmatprep.subr.mxu0 0.0
  %2679 = vmatpush1.msra.mxu0 0.0
  %2680 = vmatprep.subr.mxu0 0.0
  %2681 = vmatpush1.msra.mxu0 0.0
  %2682 = vmatprep.subr.mxu0 0.0
  %2683 = vmatpush1.msra.mxu0 0.0
  %2684 = vmatprep.subr.mxu0 0.0
  %2685 = vmatpush1.msra.mxu0 0.0
  %2686 = vmatprep.subr.mxu0 0.0
  %2687 = vmatpush1.msra.mxu0 0.0
  %2688 = vmatprep.subr.mxu0 0.0
  %2689 = vmatpush1.msra.mxu0 0.0
  %2690 = vmatprep.subr.mxu0 0.0
  %2691 = vmatpush1.msra.mxu0 0.0
  %2692 = vmatprep.subr.mxu0 0.0
  %2693 = vmatpush1.msra.mxu0 0.0
  %2694 = vmatprep.subr.mxu0 0.0
  %2695 = vmatpush1.msra.mxu0 0.0
  %2696 = vmatprep.mubr.f32.mxu0 0.0
  %2697 = vmatmul.mubr.f32.gmra.mrb[0].mxu0 %v2630
  %v2698 = vpop.f32.mrb[0].mxu0
  %v2699 = vadd.f32 0.0, %v2698
  %v2700 = vpop.f32.mrb[0].mxu0
  %v2701 = vadd.f32 0.0, %v2700
  %2702 = vdwg.mxu0
  %2703 = vmatprep.subr.mxu0 0.0
  %2704 = vmatpush1.msra.mxu0 %v47
  %2705 = vmatprep.subr.mxu0 0.0
  %2706 = vmatpush1.msra.mxu0 %v50
  %2707 = vmatprep.subr.mxu0 0.0
  %2708 = vmatpush1.msra.mxu0 %v53
  %2709 = vmatprep.subr.mxu0 0.0
  %2710 = vmatpush1.msra.mxu0 %v56
  %2711 = vmatprep.subr.mxu0 0.0
  %2712 = vmatpush1.msra.mxu0 0.0
  %2713 = vmatprep.subr.mxu0 0.0
  %2714 = vmatpush1.msra.mxu0 0.0
  %2715 = vmatprep.subr.mxu0 0.0
  %2716 = vmatpush1.msra.mxu0 0.0
  %2717 = vmatprep.subr.mxu0 0.0
  %2718 = vmatpush1.msra.mxu0 0.0
  %2719 = vmatprep.subr.mxu0 0.0
  %2720 = vmatpush1.msra.mxu0 0.0
  %2721 = vmatprep.subr.mxu0 0.0
  %2722 = vmatpush1.msra.mxu0 0.0
  %2723 = vmatprep.subr.mxu0 0.0
  %2724 = vmatpush1.msra.mxu0 0.0
  %2725 = vmatprep.subr.mxu0 0.0
  %2726 = vmatpush1.msra.mxu0 0.0
  %2727 = vmatprep.subr.mxu0 0.0
  %2728 = vmatpush1.msra.mxu0 0.0
  %2729 = vmatprep.subr.mxu0 0.0
  %2730 = vmatpush1.msra.mxu0 0.0
  %2731 = vmatprep.subr.mxu0 0.0
  %2732 = vmatpush1.msra.mxu0 0.0
  %2733 = vmatprep.subr.mxu0 0.0
  %2734 = vmatpush1.msra.mxu0 0.0
  %2735 = vmatprep.subr.mxu0 0.0
  %2736 = vmatpush1.msra.mxu0 0.0
  %2737 = vmatprep.subr.mxu0 0.0
  %2738 = vmatpush1.msra.mxu0 0.0
  %2739 = vmatprep.subr.mxu0 0.0
  %2740 = vmatpush1.msra.mxu0 0.0
  %2741 = vmatprep.subr.mxu0 0.0
  %2742 = vmatpush1.msra.mxu0 0.0
  %2743 = vmatprep.subr.mxu0 0.0
  %2744 = vmatpush1.msra.mxu0 0.0
  %2745 = vmatprep.subr.mxu0 0.0
  %2746 = vmatpush1.msra.mxu0 0.0
  %2747 = vmatprep.subr.mxu0 0.0
  %2748 = vmatpush1.msra.mxu0 0.0
  %2749 = vmatprep.subr.mxu0 0.0
  %2750 = vmatpush1.msra.mxu0 0.0
  %2751 = vmatprep.subr.mxu0 0.0
  %2752 = vmatpush1.msra.mxu0 0.0
  %2753 = vmatprep.subr.mxu0 0.0
  %2754 = vmatpush1.msra.mxu0 0.0
  %2755 = vmatprep.subr.mxu0 0.0
  %2756 = vmatpush1.msra.mxu0 0.0
  %2757 = vmatprep.subr.mxu0 0.0
  %2758 = vmatpush1.msra.mxu0 0.0
  %2759 = vmatprep.subr.mxu0 0.0
  %2760 = vmatpush1.msra.mxu0 0.0
  %2761 = vmatprep.subr.mxu0 0.0
  %2762 = vmatpush1.msra.mxu0 0.0
  %2763 = vmatprep.subr.mxu0 0.0
  %2764 = vmatpush1.msra.mxu0 0.0
  %2765 = vmatprep.subr.mxu0 0.0
  %2766 = vmatpush1.msra.mxu0 0.0
  %2767 = vmatprep.mubr.f32.mxu0 0.0
  %2768 = vmatmul.mubr.f32.gmra.mrb[0].mxu0 %v2630
  %v2769 = vpop.f32.mrb[0].mxu0
  %v2770 = vadd.f32 0.0, %v2769
  %v2771 = vpop.f32.mrb[0].mxu0
  %2772 = vdwg.mxu0
  %v2773 = vadd.f32 %v2624, %v2699
  %v2774 = vadd.f32 %v2625, %v2701
  %v2775 = vadd.f32 %v2626, %v2770
  %v2776 = vmax.f32 %v2773, 0.0
  %v2777 = vmax.f32 %v2774, 0.0
  %v2778 = vmax.f32 %v2775, 0.0
  %2779 = vst [vmem:[#allocation4 + $0x90] sm:$0xff] %v2776
  %2780 = vst [vmem:[#allocation4 + $0x98] sm:$0xff] %v2777
  %2781 = vst [vmem:[#allocation4 + $0xa0] sm:$0xff] %v2778
  %2782 = vmatprep.subr.mxu0 0.0
  %2783 = vmatpush1.msra.mxu0 %v57
  %2784 = vmatprep.subr.mxu0 0.0
  %2785 = vmatpush1.msra.mxu0 %v58
  %2786 = vmatprep.subr.mxu0 0.0
  %2787 = vmatpush1.msra.mxu0 %v59
  %2788 = vmatprep.subr.mxu0 0.0
  %2789 = vmatpush1.msra.mxu0 %v60
  %2790 = vmatprep.subr.mxu0 0.0
  %2791 = vmatpush1.msra.mxu0 %v61
  %2792 = vmatprep.subr.mxu0 0.0
  %2793 = vmatpush1.msra.mxu0 %v62
  %2794 = vmatprep.subr.mxu0 0.0
  %2795 = vmatpush1.msra.mxu0 %v63
  %2796 = vmatprep.subr.mxu0 0.0
  %2797 = vmatpush1.msra.mxu0 %v64
  %2798 = vmatprep.subr.mxu0 0.0
  %2799 = vmatpush1.msra.mxu0 %v65
  %2800 = vmatprep.subr.mxu0 0.0
  %2801 = vmatpush1.msra.mxu0 %v66
  %2802 = vmatprep.subr.mxu0 0.0
  %2803 = vmatpush1.msra.mxu0 %v67
  %2804 = vmatprep.subr.mxu0 0.0
  %2805 = vmatpush1.msra.mxu0 %v68
  %2806 = vmatprep.subr.mxu0 0.0
  %2807 = vmatpush1.msra.mxu0 %v69
  %2808 = vmatprep.subr.mxu0 0.0
  %2809 = vmatpush1.msra.mxu0 %v70
  %2810 = vmatprep.subr.mxu0 0.0
  %2811 = vmatpush1.msra.mxu0 %v71
  %2812 = vmatprep.subr.mxu0 0.0
  %2813 = vmatpush1.msra.mxu0 %v72
  %2814 = vmatprep.subr.mxu0 0.0
  %2815 = vmatpush1.msra.mxu0 %v73
  %2816 = vmatprep.subr.mxu0 0.0
  %2817 = vmatpush1.msra.mxu0 %v74
  %2818 = vmatprep.subr.mxu0 0.0
  %2819 = vmatpush1.msra.mxu0 %v75
  %2820 = vmatprep.subr.mxu0 0.0
  %2821 = vmatpush1.msra.mxu0 %v76
  %2822 = vmatprep.subr.mxu0 0.0
  %2823 = vmatpush1.msra.mxu0 %v77
  %2824 = vmatprep.subr.mxu0 0.0
  %2825 = vmatpush1.msra.mxu0 %v78
  %2826 = vmatprep.subr.mxu0 0.0
  %2827 = vmatpush1.msra.mxu0 %v79
  %2828 = vmatprep.subr.mxu0 0.0
  %2829 = vmatpush1.msra.mxu0 %v80
  %2830 = vmatprep.subr.mxu0 0.0
  %2831 = vmatpush1.msra.mxu0 %v81
  %2832 = vmatprep.subr.mxu0 0.0
  %2833 = vmatpush1.msra.mxu0 %v82
  %2834 = vmatprep.subr.mxu0 0.0
  %2835 = vmatpush1.msra.mxu0 %v83
  %2836 = vmatprep.subr.mxu0 0.0
  %2837 = vmatpush1.msra.mxu0 %v84
  %2838 = vmatprep.subr.mxu0 0.0
  %2839 = vmatpush1.msra.mxu0 %v85
  %2840 = vmatprep.subr.mxu0 0.0
  %2841 = vmatpush1.msra.mxu0 %v86
  %2842 = vmatprep.subr.mxu0 0.0
  %2843 = vmatpush1.msra.mxu0 %v87
  %2844 = vmatprep.subr.mxu0 0.0
  %2845 = vmatpush1.msra.mxu0 %v88
  %2846 = vmatprep.mubr.f32.mxu0 %v2777
  %2847 = vmatmul.mubr.f32.gmra.mrb[0].mxu0 %v2776
  %v2848 = vpop.f32.mrb[0].mxu0
  %v2849 = vadd.f32 %v117, %v2848
  %v2850 = vpop.f32.mrb[0].mxu0
  %2851 = vdwg.mxu0
  %2852 = vmatprep.subr.mxu0 0.0
  %2853 = vmatpush1.msra.mxu0 %v89
  %2854 = vmatprep.subr.mxu0 0.0
  %2855 = vmatpush1.msra.mxu0 %v90
  %2856 = vmatprep.subr.mxu0 0.0
  %2857 = vmatpush1.msra.mxu0 %v91
  %2858 = vmatprep.subr.mxu0 0.0
  %2859 = vmatpush1.msra.mxu0 %v92
  %2860 = vmatprep.subr.mxu0 0.0
  %2861 = vmatpush1.msra.mxu0 %v93
  %2862 = vmatprep.subr.mxu0 0.0
  %2863 = vmatpush1.msra.mxu0 %v94
  %2864 = vmatprep.subr.mxu0 0.0
  %2865 = vmatpush1.msra.mxu0 %v95
  %2866 = vmatprep.subr.mxu0 0.0
  %2867 = vmatpush1.msra.mxu0 %v96
  %2868 = vmatprep.subr.mxu0 0.0
  %2869 = vmatpush1.msra.mxu0 %v97
  %2870 = vmatprep.subr.mxu0 0.0
  %2871 = vmatpush1.msra.mxu0 %v98
  %2872 = vmatprep.subr.mxu0 0.0
  %2873 = vmatpush1.msra.mxu0 %v99
  %2874 = vmatprep.subr.mxu0 0.0
  %2875 = vmatpush1.msra.mxu0 %v100
  %2876 = vmatprep.subr.mxu0 0.0
  %2877 = vmatpush1.msra.mxu0 %v101
  %2878 = vmatprep.subr.mxu0 0.0
  %2879 = vmatpush1.msra.mxu0 %v102
  %2880 = vmatprep.subr.mxu0 0.0
  %2881 = vmatpush1.msra.mxu0 %v103
  %2882 = vmatprep.subr.mxu0 0.0
  %2883 = vmatpush1.msra.mxu0 %v104
  %2884 = vmatprep.subr.mxu0 0.0
  %2885 = vmatpush1.msra.mxu0 0.0
  %2886 = vmatprep.subr.mxu0 0.0
  %2887 = vmatpush1.msra.mxu0 0.0
  %2888 = vmatprep.subr.mxu0 0.0
  %2889 = vmatpush1.msra.mxu0 0.0
  %2890 = vmatprep.subr.mxu0 0.0
  %2891 = vmatpush1.msra.mxu0 0.0
  %2892 = vmatprep.subr.mxu0 0.0
  %2893 = vmatpush1.msra.mxu0 0.0
  %2894 = vmatprep.subr.mxu0 0.0
  %2895 = vmatpush1.msra.mxu0 0.0
  %2896 = vmatprep.subr.mxu0 0.0
  %2897 = vmatpush1.msra.mxu0 0.0
  %2898 = vmatprep.subr.mxu0 0.0
  %2899 = vmatpush1.msra.mxu0 0.0
  %2900 = vmatprep.subr.mxu0 0.0
  %2901 = vmatpush1.msra.mxu0 0.0
  %2902 = vmatprep.subr.mxu0 0.0
  %2903 = vmatpush1.msra.mxu0 0.0
  %2904 = vmatprep.subr.mxu0 0.0
  %2905 = vmatpush1.msra.mxu0 0.0
  %2906 = vmatprep.subr.mxu0 0.0
  %2907 = vmatpush1.msra.mxu0 0.0
  %2908 = vmatprep.subr.mxu0 0.0
  %2909 = vmatpush1.msra.mxu0 0.0
  %2910 = vmatprep.subr.mxu0 0.0
  %2911 = vmatpush1.msra.mxu0 0.0
  %2912 = vmatprep.subr.mxu0 0.0
  %2913 = vmatpush1.msra.mxu0 0.0
  %2914 = vmatprep.subr.mxu0 0.0
  %2915 = vmatpush1.msra.mxu0 0.0
  %2916 = vmatprep.mubr.f32.mxu0 0.0
  %2917 = vmatmul.mubr.f32.gmra.mrb[0].mxu0 %v2778
  %v2918 = vpop.f32.mrb[0].mxu0
  %v2919 = vadd.f32 %v2849, %v2918
  %v2920 = vpop.f32.mrb[0].mxu0
  %2921 = vdwg.mxu0
  %v2922 = vmax.f32 %v2919, 0.0
  %2923 = vrot.lane.b32.xlu0 %v2623, 96
  %v2924 = vpop.permute.xlu0 %2923
  %v2926 = vsel %vm229, %v2922, %v2924
  %v2928 = vsel %vm121, %v2926, 0
  %2930 = vmatprep.subr.mxu0 0.0
  %2931 = vmatpush1.msra.mxu0 %v37
  %2932 = vmatprep.subr.mxu0 0.0
  %2933 = vmatpush1.msra.mxu0 %v38
  %2934 = vmatprep.subr.mxu0 0.0
  %2935 = vmatpush1.msra.mxu0 %v39
  %2936 = vmatprep.subr.mxu0 0.0
  %2937 = vmatpush1.msra.mxu0 %v40
  %2938 = vmatprep.subr.mxu0 0.0
  %2939 = vmatpush1.msra.mxu0 %v41
  %2940 = vmatprep.subr.mxu0 0.0
  %2941 = vmatpush1.msra.mxu0 %v42
  %2942 = vmatprep.subr.mxu0 0.0
  %2943 = vmatpush1.msra.mxu0 %v43
  %2944 = vmatprep.subr.mxu0 0.0
  %2945 = vmatpush1.msra.mxu0 %v44
  %2946 = vmatprep.subr.mxu0 0.0
  %2947 = vmatpush1.msra.mxu0 0.0
  %2948 = vmatprep.subr.mxu0 0.0
  %2949 = vmatpush1.msra.mxu0 0.0
  %2950 = vmatprep.subr.mxu0 0.0
  %2951 = vmatpush1.msra.mxu0 0.0
  %2952 = vmatprep.subr.mxu0 0.0
  %2953 = vmatpush1.msra.mxu0 0.0
  %2954 = vmatprep.subr.mxu0 0.0
  %2955 = vmatpush1.msra.mxu0 0.0
  %2956 = vmatprep.subr.mxu0 0.0
  %2957 = vmatpush1.msra.mxu0 0.0
  %2958 = vmatprep.subr.mxu0 0.0
  %2959 = vmatpush1.msra.mxu0 0.0
  %2960 = vmatprep.subr.mxu0 0.0
  %2961 = vmatpush1.msra.mxu0 0.0
  %2962 = vmatprep.subr.mxu0 0.0
  %2963 = vmatpush1.msra.mxu0 0.0
  %2964 = vmatprep.subr.mxu0 0.0
  %2965 = vmatpush1.msra.mxu0 0.0
  %2966 = vmatprep.subr.mxu0 0.0
  %2967 = vmatpush1.msra.mxu0 0.0
  %2968 = vmatprep.subr.mxu0 0.0
  %2969 = vmatpush1.msra.mxu0 0.0
  %2970 = vmatprep.subr.mxu0 0.0
  %2971 = vmatpush1.msra.mxu0 0.0
  %2972 = vmatprep.subr.mxu0 0.0
  %2973 = vmatpush1.msra.mxu0 0.0
  %2974 = vmatprep.subr.mxu0 0.0
  %2975 = vmatpush1.msra.mxu0 0.0
  %2976 = vmatprep.subr.mxu0 0.0
  %2977 = vmatpush1.msra.mxu0 0.0
  %2978 = vmatprep.subr.mxu0 0.0
  %2979 = vmatpush1.msra.mxu0 0.0
  %2980 = vmatprep.subr.mxu0 0.0
  %2981 = vmatpush1.msra.mxu0 0.0
  %2982 = vmatprep.subr.mxu0 0.0
  %2983 = vmatpush1.msra.mxu0 0.0
  %2984 = vmatprep.subr.mxu0 0.0
  %2985 = vmatpush1.msra.mxu0 0.0
  %2986 = vmatprep.subr.mxu0 0.0
  %2987 = vmatpush1.msra.mxu0 0.0
  %2988 = vmatprep.subr.mxu0 0.0
  %2989 = vmatpush1.msra.mxu0 0.0
  %2990 = vmatprep.subr.mxu0 0.0
  %2991 = vmatpush1.msra.mxu0 0.0
  %2992 = vmatprep.subr.mxu0 0.0
  %2993 = vmatpush1.msra.mxu0 0.0
  %2994 = vmatprep.mubr.f32.mxu0 0.0
  %2995 = vmatmul.mubr.f32.gmra.mrb[0].mxu0 %v2928
  %v2996 = vpop.f32.mrb[0].mxu0
  %v2997 = vadd.f32 %v110, %v2996
  %v2998 = vpop.f32.mrb[0].mxu0
  %2999 = vdwg.mxu0
  %v3000 = vxor.u32 %v2997, 2147483648
  %v3001 = vmul.f32 %v3000, 1.442695
  %v3002 = vpow.pop %v3001
  %v3003 = vadd.f32 %v3002, 1.0
  %v3004 = vrcp.pop %v3003
  %v3005 = vmul.f32 1.0, %v3004
  %v3006 = vtanh.pop %v2997
  %v3007 = vmul.f32 %v3005, %v2617
  %3009 = vrot.lane.b32.xlu0 %v3006, 32
  %v3010 = vpop.permute.xlu0 %3009
  %v3012 = vmul.f32 %v3005, %v3010
  %3014 = vrot.lane.b32.xlu0 %v3012, 32
  %v3015 = vpop.permute.xlu0 %3014
  %v3017 = vadd.f32 %v3007, %v3015
  %v3018 = vtanh.pop %v3017
  %3020 = vrot.lane.b32.xlu0 %v3018, 32
  %v3021 = vpop.permute.xlu0 %3020
  %v3023 = vmul.f32 %v3005, %v3021
  %v3024 = vld [vmem:[%s0 + $0xa8] sm:$0xff]
  %v3025 = vld [vmem:[%s0 + $0xb0] sm:$0xff]
  %v3026 = vld [vmem:[%s0 + $0xb8] sm:$0xff]
  %3028 = vrot.lane.b32.xlu0 %v3023, 64
  %v3029 = vpop.permute.xlu0 %3028
  %v3030 = vsel %vm229, %v3029, 0
  %3032 = vmatprep.subr.mxu0 %v46
  %3033 = vmatpush1.msra.mxu0 %v45
  %3034 = vmatprep.subr.mxu0 %v49
  %3035 = vmatpush1.msra.mxu0 %v48
  %3036 = vmatprep.subr.mxu0 %v52
  %3037 = vmatpush1.msra.mxu0 %v51
  %3038 = vmatprep.subr.mxu0 %v55
  %3039 = vmatpush1.msra.mxu0 %v54
  %3040 = vmatprep.subr.mxu0 0.0
  %3041 = vmatpush1.msra.mxu0 0.0
  %3042 = vmatprep.subr.mxu0 0.0
  %3043 = vmatpush1.msra.mxu0 0.0
  %3044 = vmatprep.subr.mxu0 0.0
  %3045 = vmatpush1.msra.mxu0 0.0
  %3046 = vmatprep.subr.mxu0 0.0
  %3047 = vmatpush1.msra.mxu0 0.0
  %3048 = vmatprep.subr.mxu0 0.0
  %3049 = vmatpush1.msra.mxu0 0.0
  %3050 = vmatprep.subr.mxu0 0.0
  %3051 = vmatpush1.msra.mxu0 0.0
  %3052 = vmatprep.subr.mxu0 0.0
  %3053 = vmatpush1.msra.mxu0 0.0
  %3054 = vmatprep.subr.mxu0 0.0
  %3055 = vmatpush1.msra.mxu0 0.0
  %3056 = vmatprep.subr.mxu0 0.0
  %3057 = vmatpush1.msra.mxu0 0.0
  %3058 = vmatprep.subr.mxu0 0.0
  %3059 = vmatpush1.msra.mxu0 0.0
  %3060 = vmatprep.subr.mxu0 0.0
  %3061 = vmatpush1.msra.mxu0 0.0
  %3062 = vmatprep.subr.mxu0 0.0
  %3063 = vmatpush1.msra.mxu0 0.0
  %3064 = vmatprep.subr.mxu0 0.0
  %3065 = vmatpush1.msra.mxu0 0.0
  %3066 = vmatprep.subr.mxu0 0.0
  %3067 = vmatpush1.msra.mxu0 0.0
  %3068 = vmatprep.subr.mxu0 0.0
  %3069 = vmatpush1.msra.mxu0 0.0
  %3070 = vmatprep.subr.mxu0 0.0
  %3071 = vmatpush1.msra.mxu0 0.0
  %3072 = vmatprep.subr.mxu0 0.0
  %3073 = vmatpush1.msra.mxu0 0.0
  %3074 = vmatprep.subr.mxu0 0.0
  %3075 = vmatpush1.msra.mxu0 0.0
  %3076 = vmatprep.subr.mxu0 0.0
  %3077 = vmatpush1.msra.mxu0 0.0
  %3078 = vmatprep.subr.mxu0 0.0
  %3079 = vmatpush1.msra.mxu0 0.0
  %3080 = vmatprep.subr.mxu0 0.0
  %3081 = vmatpush1.msra.mxu0 0.0
  %3082 = vmatprep.subr.mxu0 0.0
  %3083 = vmatpush1.msra.mxu0 0.0
  %3084 = vmatprep.subr.mxu0 0.0
  %3085 = vmatpush1.msra.mxu0 0.0
  %3086 = vmatprep.subr.mxu0 0.0
  %3087 = vmatpush1.msra.mxu0 0.0
  %3088 = vmatprep.subr.mxu0 0.0
  %3089 = vmatpush1.msra.mxu0 0.0
  %3090 = vmatprep.subr.mxu0 0.0
  %3091 = vmatpush1.msra.mxu0 0.0
  %3092 = vmatprep.subr.mxu0 0.0
  %3093 = vmatpush1.msra.mxu0 0.0
  %3094 = vmatprep.subr.mxu0 0.0
  %3095 = vmatpush1.msra.mxu0 0.0
  %3096 = vmatprep.mubr.f32.mxu0 0.0
  %3097 = vmatmul.mubr.f32.gmra.mrb[0].mxu0 %v3030
  %v3098 = vpop.f32.mrb[0].mxu0
  %v3099 = vadd.f32 0.0, %v3098
  %v3100 = vpop.f32.mrb[0].mxu0
  %v3101 = vadd.f32 0.0, %v3100
  %3102 = vdwg.mxu0
  %3103 = vmatprep.subr.mxu0 0.0
  %3104 = vmatpush1.msra.mxu0 %v47
  %3105 = vmatprep.subr.mxu0 0.0
  %3106 = vmatpush1.msra.mxu0 %v50
  %3107 = vmatprep.subr.mxu0 0.0
  %3108 = vmatpush1.msra.mxu0 %v53
  %3109 = vmatprep.subr.mxu0 0.0
  %3110 = vmatpush1.msra.mxu0 %v56
  %3111 = vmatprep.subr.mxu0 0.0
  %3112 = vmatpush1.msra.mxu0 0.0
  %3113 = vmatprep.subr.mxu0 0.0
  %3114 = vmatpush1.msra.mxu0 0.0
  %3115 = vmatprep.subr.mxu0 0.0
  %3116 = vmatpush1.msra.mxu0 0.0
  %3117 = vmatprep.subr.mxu0 0.0
  %3118 = vmatpush1.msra.mxu0 0.0
  %3119 = vmatprep.subr.mxu0 0.0
  %3120 = vmatpush1.msra.mxu0 0.0
  %3121 = vmatprep.subr.mxu0 0.0
  %3122 = vmatpush1.msra.mxu0 0.0
  %3123 = vmatprep.subr.mxu0 0.0
  %3124 = vmatpush1.msra.mxu0 0.0
  %3125 = vmatprep.subr.mxu0 0.0
  %3126 = vmatpush1.msra.mxu0 0.0
  %3127 = vmatprep.subr.mxu0 0.0
  %3128 = vmatpush1.msra.mxu0 0.0
  %3129 = vmatprep.subr.mxu0 0.0
  %3130 = vmatpush1.msra.mxu0 0.0
  %3131 = vmatprep.subr.mxu0 0.0
  %3132 = vmatpush1.msra.mxu0 0.0
  %3133 = vmatprep.subr.mxu0 0.0
  %3134 = vmatpush1.msra.mxu0 0.0
  %3135 = vmatprep.subr.mxu0 0.0
  %3136 = vmatpush1.msra.mxu0 0.0
  %3137 = vmatprep.subr.mxu0 0.0
  %3138 = vmatpush1.msra.mxu0 0.0
  %3139 = vmatprep.subr.mxu0 0.0
  %3140 = vmatpush1.msra.mxu0 0.0
  %3141 = vmatprep.subr.mxu0 0.0
  %3142 = vmatpush1.msra.mxu0 0.0
  %3143 = vmatprep.subr.mxu0 0.0
  %3144 = vmatpush1.msra.mxu0 0.0
  %3145 = vmatprep.subr.mxu0 0.0
  %3146 = vmatpush1.msra.mxu0 0.0
  %3147 = vmatprep.subr.mxu0 0.0
  %3148 = vmatpush1.msra.mxu0 0.0
  %3149 = vmatprep.subr.mxu0 0.0
  %3150 = vmatpush1.msra.mxu0 0.0
  %3151 = vmatprep.subr.mxu0 0.0
  %3152 = vmatpush1.msra.mxu0 0.0
  %3153 = vmatprep.subr.mxu0 0.0
  %3154 = vmatpush1.msra.mxu0 0.0
  %3155 = vmatprep.subr.mxu0 0.0
  %3156 = vmatpush1.msra.mxu0 0.0
  %3157 = vmatprep.subr.mxu0 0.0
  %3158 = vmatpush1.msra.mxu0 0.0
  %3159 = vmatprep.subr.mxu0 0.0
  %3160 = vmatpush1.msra.mxu0 0.0
  %3161 = vmatprep.subr.mxu0 0.0
  %3162 = vmatpush1.msra.mxu0 0.0
  %3163 = vmatprep.subr.mxu0 0.0
  %3164 = vmatpush1.msra.mxu0 0.0
  %3165 = vmatprep.subr.mxu0 0.0
  %3166 = vmatpush1.msra.mxu0 0.0
  %3167 = vmatprep.mubr.f32.mxu0 0.0
  %3168 = vmatmul.mubr.f32.gmra.mrb[0].mxu0 %v3030
  %v3169 = vpop.f32.mrb[0].mxu0
  %v3170 = vadd.f32 0.0, %v3169
  %v3171 = vpop.f32.mrb[0].mxu0
  %3172 = vdwg.mxu0
  %v3173 = vadd.f32 %v3024, %v3099
  %v3174 = vadd.f32 %v3025, %v3101
  %v3175 = vadd.f32 %v3026, %v3170
  %v3176 = vmax.f32 %v3173, 0.0
  %v3177 = vmax.f32 %v3174, 0.0
  %v3178 = vmax.f32 %v3175, 0.0
  %3179 = vst [vmem:[#allocation4 + $0xa8] sm:$0xff] %v3176
  %3180 = vst [vmem:[#allocation4 + $0xb0] sm:$0xff] %v3177
  %3181 = vst [vmem:[#allocation4 + $0xb8] sm:$0xff] %v3178
  %3182 = vst.msk [vmem:[#allocation2] sm:$0xff] %vm121, %v2926
  %3184 = vrot.lane.b32.xlu0 %v3017, 96
  %v3185 = vpop.permute.xlu0 %3184
  %3187 = vst.msk [vmem:[#allocation3] sm:$0xff] %vm229, %v3185
  %v3188 = vld [vmem:[#allocation4] sm:$0xff]
  %v3189 = vld [vmem:[#allocation4 + $0x8] sm:$0xff]
  %v3190 = vld [vmem:[#allocation4 + $0x10] sm:$0xff]
  %v3191 = vld [vmem:[#allocation4 + $0x18] sm:$0xff]
  %v3192 = vld [vmem:[#allocation4 + $0x20] sm:$0xff]
  %v3193 = vld [vmem:[#allocation4 + $0x28] sm:$0xff]
  %v3194 = vld [vmem:[#allocation4 + $0x30] sm:$0xff]
  %v3195 = vld [vmem:[#allocation4 + $0x38] sm:$0xff]
  %v3196 = vld [vmem:[#allocation4 + $0x40] sm:$0xff]
  %v3197 = vld [vmem:[#allocation4 + $0x48] sm:$0xff]
  %v3198 = vld [vmem:[#allocation4 + $0x50] sm:$0xff]
  %v3199 = vld [vmem:[#allocation4 + $0x58] sm:$0xff]
  %v3200 = vld [vmem:[#allocation4 + $0x60] sm:$0xff]
  %v3201 = vld [vmem:[#allocation4 + $0x68] sm:$0xff]
  %v3202 = vld [vmem:[#allocation4 + $0x70] sm:$0xff]
  %v3203 = vld [vmem:[#allocation4 + $0x78] sm:$0xff]
  %v3204 = vld [vmem:[#allocation4 + $0x80] sm:$0xff]
  %v3205 = vld [vmem:[#allocation4 + $0x88] sm:$0xff]
  %v3206 = vld [vmem:[#allocation4 + $0x90] sm:$0xff]
  %v3207 = vld [vmem:[#allocation4 + $0x98] sm:$0xff]
  %v3208 = vld [vmem:[#allocation4 + $0xa0] sm:$0xff]
  %v3209 = vld [vmem:[#allocation4 + $0xa8] sm:$0xff]
  %v3210 = vld [vmem:[#allocation4 + $0xb0] sm:$0xff]
  %v3211 = vld [vmem:[#allocation4 + $0xb8] sm:$0xff]
  %v3212 = vld [vmem:[%s6] sm:$0xff]
  %v3213 = vld [vmem:[%s6 + $0x8] sm:$0xff]
  %v3214 = vld [vmem:[%s6 + $0x10] sm:$0xff]
  %v3215 = vld [vmem:[%s6 + $0x18] sm:$0xff]
  %v3216 = vld [vmem:[%s6 + $0x20] sm:$0xff]
  %v3217 = vld [vmem:[%s6 + $0x28] sm:$0xff]
  %v3218 = vld [vmem:[%s6 + $0x30] sm:$0xff]
  %v3219 = vld [vmem:[%s6 + $0x38] sm:$0xff]
  %v3220 = vld [vmem:[%s6 + $0x40] sm:$0xff]
  %v3221 = vld [vmem:[%s6 + $0x48] sm:$0xff]
  %v3222 = vld [vmem:[%s6 + $0x50] sm:$0xff]
  %v3223 = vld [vmem:[%s6 + $0x58] sm:$0xff]
  %v3224 = vld [vmem:[%s6 + $0x60] sm:$0xff]
  %v3225 = vld [vmem:[%s6 + $0x68] sm:$0xff]
  %v3226 = vld [vmem:[%s6 + $0x70] sm:$0xff]
  %v3227 = vld [vmem:[%s6 + $0x78] sm:$0xff]
  %v3228 = vld [vmem:[%s6 + $0x80] sm:$0xff]
  %v3229 = vld [vmem:[%s6 + $0x88] sm:$0xff]
  %v3230 = vld [vmem:[%s6 + $0x90] sm:$0xff]
  %v3231 = vld [vmem:[%s6 + $0x98] sm:$0xff]
  %v3232 = vld [vmem:[%s6 + $0xa0] sm:$0xff]
  %v3233 = vld [vmem:[%s6 + $0xa8] sm:$0xff]
  %v3234 = vld [vmem:[%s6 + $0xb0] sm:$0xff]
  %v3235 = vld [vmem:[%s6 + $0xb8] sm:$0xff]
  %v3236 = vld [vmem:[%s6 + $0xc0] sm:$0xff]
  %v3237 = vld [vmem:[%s6 + $0xc8] sm:$0xff]
  %v3238 = vld [vmem:[%s6 + $0xd0] sm:$0xff]
  %v3239 = vld [vmem:[%s6 + $0xd8] sm:$0xff]
  %v3240 = vld [vmem:[%s6 + $0xe0] sm:$0xff]
  %v3241 = vld [vmem:[%s6 + $0xe8] sm:$0xff]
  %v3242 = vld [vmem:[%s6 + $0xf0] sm:$0xff]
  %v3243 = vld [vmem:[%s6 + $0xf8] sm:$0xff]
  %v3244 = vld [vmem:[%s6 + $0x100] sm:$0xff]
  %v3245 = vld [vmem:[%s6 + $0x108] sm:$0xff]
  %v3246 = vld [vmem:[%s6 + $0x110] sm:$0xff]
  %v3247 = vld [vmem:[%s6 + $0x118] sm:$0xff]
  %v3248 = vld [vmem:[%s6 + $0x120] sm:$0xff]
  %v3249 = vld [vmem:[%s6 + $0x128] sm:$0xff]
  %v3250 = vld [vmem:[%s6 + $0x130] sm:$0xff]
  %v3251 = vld [vmem:[%s6 + $0x138] sm:$0xff]
  %v3252 = vld [vmem:[%s6 + $0x140] sm:$0xff]
  %v3253 = vld [vmem:[%s6 + $0x148] sm:$0xff]
  %v3254 = vld [vmem:[%s6 + $0x150] sm:$0xff]
  %v3255 = vld [vmem:[%s6 + $0x158] sm:$0xff]
  %v3256 = vld [vmem:[%s6 + $0x160] sm:$0xff]
  %v3257 = vld [vmem:[%s6 + $0x168] sm:$0xff]
  %v3258 = vld [vmem:[%s6 + $0x170] sm:$0xff]
  %v3259 = vld [vmem:[%s6 + $0x178] sm:$0xff]
  %v3260 = vld [vmem:[%s7] sm:$0x1]
  %v3262 = vlaneseq
  %v3263 = vshrl.u32 %v3262, 7
  %v3264 = vsub.s32 0, %v3263
  %v3265 = vrot.slane %v3260, %v3264
  %3267 = vmatprep.subr.mxu0 0.0
  %3268 = vmatpush1.msra.mxu0 %v3212
  %3269 = vmatprep.subr.mxu0 0.0
  %3270 = vmatpush1.msra.mxu0 %v3213
  %3271 = vmatprep.subr.mxu0 0.0
  %3272 = vmatpush1.msra.mxu0 %v3214
  %3273 = vmatprep.subr.mxu0 0.0
  %3274 = vmatpush1.msra.mxu0 %v3215
  %3275 = vmatprep.subr.mxu0 0.0
  %3276 = vmatpush1.msra.mxu0 %v3216
  %3277 = vmatprep.subr.mxu0 0.0
  %3278 = vmatpush1.msra.mxu0 %v3217
  %3279 = vmatprep.subr.mxu0 0.0
  %3280 = vmatpush1.msra.mxu0 %v3218
  %3281 = vmatprep.subr.mxu0 0.0
  %3282 = vmatpush1.msra.mxu0 %v3219
  %3283 = vmatprep.subr.mxu0 0.0
  %3284 = vmatpush1.msra.mxu0 %v3220
  %3285 = vmatprep.subr.mxu0 0.0
  %3286 = vmatpush1.msra.mxu0 %v3221
  %3287 = vmatprep.subr.mxu0 0.0
  %3288 = vmatpush1.msra.mxu0 %v3222
  %3289 = vmatprep.subr.mxu0 0.0
  %3290 = vmatpush1.msra.mxu0 %v3223
  %3291 = vmatprep.subr.mxu0 0.0
  %3292 = vmatpush1.msra.mxu0 %v3224
  %3293 = vmatprep.subr.mxu0 0.0
  %3294 = vmatpush1.msra.mxu0 %v3225
  %3295 = vmatprep.subr.mxu0 0.0
  %3296 = vmatpush1.msra.mxu0 %v3226
  %3297 = vmatprep.subr.mxu0 0.0
  %3298 = vmatpush1.msra.mxu0 %v3227
  %3299 = vmatprep.subr.mxu0 0.0
  %3300 = vmatpush1.msra.mxu0 %v3228
  %3301 = vmatprep.subr.mxu0 0.0
  %3302 = vmatpush1.msra.mxu0 %v3229
  %3303 = vmatprep.subr.mxu0 0.0
  %3304 = vmatpush1.msra.mxu0 %v3230
  %3305 = vmatprep.subr.mxu0 0.0
  %3306 = vmatpush1.msra.mxu0 %v3231
  %3307 = vmatprep.subr.mxu0 0.0
  %3308 = vmatpush1.msra.mxu0 %v3232
  %3309 = vmatprep.subr.mxu0 0.0
  %3310 = vmatpush1.msra.mxu0 %v3233
  %3311 = vmatprep.subr.mxu0 0.0
  %3312 = vmatpush1.msra.mxu0 %v3234
  %3313 = vmatprep.subr.mxu0 0.0
  %3314 = vmatpush1.msra.mxu0 %v3235
  %3315 = vmatprep.subr.mxu0 0.0
  %3316 = vmatpush1.msra.mxu0 %v3236
  %3317 = vmatprep.subr.mxu0 0.0
  %3318 = vmatpush1.msra.mxu0 %v3237
  %3319 = vmatprep.subr.mxu0 0.0
  %3320 = vmatpush1.msra.mxu0 %v3238
  %3321 = vmatprep.subr.mxu0 0.0
  %3322 = vmatpush1.msra.mxu0 %v3239
  %3323 = vmatprep.subr.mxu0 0.0
  %3324 = vmatpush1.msra.mxu0 %v3240
  %3325 = vmatprep.subr.mxu0 0.0
  %3326 = vmatpush1.msra.mxu0 %v3241
  %3327 = vmatprep.subr.mxu0 0.0
  %3328 = vmatpush1.msra.mxu0 %v3242
  %3329 = vmatprep.subr.mxu0 0.0
  %3330 = vmatpush1.msra.mxu0 %v3243
  %3331 = vmatprep.mubr.f32.mxu0 %v3189
  %3332 = vmatmul.mubr.f32.gmra.mrb[0].mxu0 %v3188
  %v3333 = vpop.f32.mrb[0].mxu0
  %v3334 = vadd.f32 %v3265, %v3333
  %v3335 = vpop.f32.mrb[0].mxu0
  %3336 = vmatprep.mubr.f32.mxu0 %v3192
  %3337 = vmatmul.mubr.f32.gmra.mrb[0].mxu0 %v3191
  %v3338 = vpop.f32.mrb[0].mxu0
  %v3339 = vadd.f32 %v3265, %v3338
  %v3340 = vpop.f32.mrb[0].mxu0
  %3341 = vmatprep.mubr.f32.mxu0 %v3195
  %3342 = vmatmul.mubr.f32.gmra.mrb[0].mxu0 %v3194
  %v3343 = vpop.f32.mrb[0].mxu0
  %v3344 = vadd.f32 %v3265, %v3343
  %v3345 = vpop.f32.mrb[0].mxu0
  %3346 = vmatprep.mubr.f32.mxu0 %v3198
  %3347 = vmatmul.mubr.f32.gmra.mrb[0].mxu0 %v3197
  %v3348 = vpop.f32.mrb[0].mxu0
  %v3349 = vadd.f32 %v3265, %v3348
  %v3350 = vpop.f32.mrb[0].mxu0
  %3351 = vmatprep.mubr.f32.mxu0 %v3201
  %3352 = vmatmul.mubr.f32.gmra.mrb[0].mxu0 %v3200
  %v3353 = vpop.f32.mrb[0].mxu0
  %v3354 = vadd.f32 %v3265, %v3353
  %v3355 = vpop.f32.mrb[0].mxu0
  %3356 = vmatprep.mubr.f32.mxu0 %v3204
  %3357 = vmatmul.mubr.f32.gmra.mrb[0].mxu0 %v3203
  %v3358 = vpop.f32.mrb[0].mxu0
  %v3359 = vadd.f32 %v3265, %v3358
  %v3360 = vpop.f32.mrb[0].mxu0
  %3361 = vmatprep.mubr.f32.mxu0 %v3207
  %3362 = vmatmul.mubr.f32.gmra.mrb[0].mxu0 %v3206
  %v3363 = vpop.f32.mrb[0].mxu0
  %v3364 = vadd.f32 %v3265, %v3363
  %v3365 = vpop.f32.mrb[0].mxu0
  %3366 = vmatprep.mubr.f32.mxu0 %v3210
  %3367 = vmatmul.mubr.f32.gmra.mrb[0].mxu0 %v3209
  %v3368 = vpop.f32.mrb[0].mxu0
  %v3369 = vadd.f32 %v3265, %v3368
  %v3370 = vpop.f32.mrb[0].mxu0
  %3371 = vdwg.mxu0
  %3372 = vmatprep.subr.mxu0 0.0
  %3373 = vmatpush1.msra.mxu0 %v3244
  %3374 = vmatprep.subr.mxu0 0.0
  %3375 = vmatpush1.msra.mxu0 %v3245
  %3376 = vmatprep.subr.mxu0 0.0
  %3377 = vmatpush1.msra.mxu0 %v3246
  %3378 = vmatprep.subr.mxu0 0.0
  %3379 = vmatpush1.msra.mxu0 %v3247
  %3380 = vmatprep.subr.mxu0 0.0
  %3381 = vmatpush1.msra.mxu0 %v3248
  %3382 = vmatprep.subr.mxu0 0.0
  %3383 = vmatpush1.msra.mxu0 %v3249
  %3384 = vmatprep.subr.mxu0 0.0
  %3385 = vmatpush1.msra.mxu0 %v3250
  %3386 = vmatprep.subr.mxu0 0.0
  %3387 = vmatpush1.msra.mxu0 %v3251
  %3388 = vmatprep.subr.mxu0 0.0
  %3389 = vmatpush1.msra.mxu0 %v3252
  %3390 = vmatprep.subr.mxu0 0.0
  %3391 = vmatpush1.msra.mxu0 %v3253
  %3392 = vmatprep.subr.mxu0 0.0
  %3393 = vmatpush1.msra.mxu0 %v3254
  %3394 = vmatprep.subr.mxu0 0.0
  %3395 = vmatpush1.msra.mxu0 %v3255
  %3396 = vmatprep.subr.mxu0 0.0
  %3397 = vmatpush1.msra.mxu0 %v3256
  %3398 = vmatprep.subr.mxu0 0.0
  %3399 = vmatpush1.msra.mxu0 %v3257
  %3400 = vmatprep.subr.mxu0 0.0
  %3401 = vmatpush1.msra.mxu0 %v3258
  %3402 = vmatprep.subr.mxu0 0.0
  %3403 = vmatpush1.msra.mxu0 %v3259
  %3404 = vmatprep.subr.mxu0 0.0
  %3405 = vmatpush1.msra.mxu0 0.0
  %3406 = vmatprep.subr.mxu0 0.0
  %3407 = vmatpush1.msra.mxu0 0.0
  %3408 = vmatprep.subr.mxu0 0.0
  %3409 = vmatpush1.msra.mxu0 0.0
  %3410 = vmatprep.subr.mxu0 0.0
  %3411 = vmatpush1.msra.mxu0 0.0
  %3412 = vmatprep.subr.mxu0 0.0
  %3413 = vmatpush1.msra.mxu0 0.0
  %3414 = vmatprep.subr.mxu0 0.0
  %3415 = vmatpush1.msra.mxu0 0.0
  %3416 = vmatprep.subr.mxu0 0.0
  %3417 = vmatpush1.msra.mxu0 0.0
  %3418 = vmatprep.subr.mxu0 0.0
  %3419 = vmatpush1.msra.mxu0 0.0
  %3420 = vmatprep.subr.mxu0 0.0
  %3421 = vmatpush1.msra.mxu0 0.0
  %3422 = vmatprep.subr.mxu0 0.0
  %3423 = vmatpush1.msra.mxu0 0.0
  %3424 = vmatprep.subr.mxu0 0.0
  %3425 = vmatpush1.msra.mxu0 0.0
  %3426 = vmatprep.subr.mxu0 0.0
  %3427 = vmatpush1.msra.mxu0 0.0
  %3428 = vmatprep.subr.mxu0 0.0
  %3429 = vmatpush1.msra.mxu0 0.0
  %3430 = vmatprep.subr.mxu0 0.0
  %3431 = vmatpush1.msra.mxu0 0.0
  %3432 = vmatprep.subr.mxu0 0.0
  %3433 = vmatpush1.msra.mxu0 0.0
  %3434 = vmatprep.subr.mxu0 0.0
  %3435 = vmatpush1.msra.mxu0 0.0
  %3436 = vmatprep.mubr.f32.mxu0 0.0
  %3437 = vmatmul.mubr.f32.gmra.mrb[0].mxu0 %v3190
  %v3438 = vpop.f32.mrb[0].mxu0
  %v3439 = vadd.f32 %v3334, %v3438
  %v3440 = vpop.f32.mrb[0].mxu0
  %3441 = vmatprep.mubr.f32.mxu0 0.0
  %3442 = vmatmul.mubr.f32.gmra.mrb[0].mxu0 %v3193
  %v3443 = vpop.f32.mrb[0].mxu0
  %v3444 = vadd.f32 %v3339, %v3443
  %v3445 = vpop.f32.mrb[0].mxu0
  %3446 = vmatprep.mubr.f32.mxu0 0.0
  %3447 = vmatmul.mubr.f32.gmra.mrb[0].mxu0 %v3196
  %v3448 = vpop.f32.mrb[0].mxu0
  %v3449 = vadd.f32 %v3344, %v3448
  %v3450 = vpop.f32.mrb[0].mxu0
  %3451 = vmatprep.mubr.f32.mxu0 0.0
  %3452 = vmatmul.mubr.f32.gmra.mrb[0].mxu0 %v3199
  %v3453 = vpop.f32.mrb[0].mxu0
  %v3454 = vadd.f32 %v3349, %v3453
  %v3455 = vpop.f32.mrb[0].mxu0
  %3456 = vmatprep.mubr.f32.mxu0 0.0
  %3457 = vmatmul.mubr.f32.gmra.mrb[0].mxu0 %v3202
  %v3458 = vpop.f32.mrb[0].mxu0
  %v3459 = vadd.f32 %v3354, %v3458
  %v3460 = vpop.f32.mrb[0].mxu0
  %3461 = vmatprep.mubr.f32.mxu0 0.0
  %3462 = vmatmul.mubr.f32.gmra.mrb[0].mxu0 %v3205
  %v3463 = vpop.f32.mrb[0].mxu0
  %v3464 = vadd.f32 %v3359, %v3463
  %v3465 = vpop.f32.mrb[0].mxu0
  %3466 = vmatprep.mubr.f32.mxu0 0.0
  %3467 = vmatmul.mubr.f32.gmra.mrb[0].mxu0 %v3208
  %v3468 = vpop.f32.mrb[0].mxu0
  %v3469 = vadd.f32 %v3364, %v3468
  %v3470 = vpop.f32.mrb[0].mxu0
  %3471 = vmatprep.mubr.f32.mxu0 0.0
  %3472 = vmatmul.mubr.f32.gmra.mrb[0].mxu0 %v3211
  %v3473 = vpop.f32.mrb[0].mxu0
  %v3474 = vadd.f32 %v3369, %v3473
  %v3475 = vpop.f32.mrb[0].mxu0
  %3476 = vdwg.mxu0
  %3477 = vst [vmem:[%s8] sm:$0xff] %v3439
  %3478 = vst [vmem:[%s8 + $0x8] sm:$0xff] %v3444
  %3479 = vst [vmem:[%s8 + $0x10] sm:$0xff] %v3449
  %3480 = vst [vmem:[%s8 + $0x18] sm:$0xff] %v3454
  %3481 = vst [vmem:[%s8 + $0x20] sm:$0xff] %v3459
  %3482 = vst [vmem:[%s8 + $0x28] sm:$0xff] %v3464
  %3483 = vst [vmem:[%s8 + $0x30] sm:$0xff] %v3469
  %3484 = vst [vmem:[%s8 + $0x38] sm:$0xff] %v3474
  // Predicated region
  $region38: #{rnn_forward.1} parent=0 // pred_check
    _
  $region39: #{rnn_forward.1} parent=0 // pred_check_branch
    %3486 = sbr.rel (0) target = $region41
  $region40: #{rnn_forward.1} parent=0 // pred_region
    _
  $region41: #{rnn_forward.1} parent=0 // pred_fallthru
    _
  // Predicated region
  $region42: #{rnn_forward.1} parent=0 // pred_check
    _
  $region43: #{rnn_forward.1} parent=0 // pred_check_branch
    %3488 = sbr.rel (0) target = $region45
  $region44: #{rnn_forward.1} parent=0 // pred_region
    _
  $region45: #{rnn_forward.1} parent=0 // pred_fallthru
    _

</llo_original>
